<compile_context>
chip_gen: v7x
topology: tpu7x:2x2x1
jax: 0.10.0
libtpu: 0.0.40
codegen_flags: <defaults>
</compile_context>

<pallas_src>
import functools
import math

import jax
import jax.numpy as jnp
from jax.experimental import pallas as pl
from jax.experimental.pallas import tpu as pltpu


def to_3tuple(x):
    if isinstance(x, (tuple, list)):
        assert len(x) == 3
        return tuple(x)
    return (x, x, x)


def get_pad_shape(input_shape, kernel_size, stride, dilation):
    """Exact transcription of AdaptivePadding3D.get_pad_shape."""
    input_h, input_w, input_d = input_shape
    kernel_h, kernel_w, kernel_d = kernel_size
    stride_h, stride_w, stride_d = stride
    output_h = math.ceil(input_h / stride_h)
    output_w = math.ceil(input_w / stride_w)
    output_d = math.ceil(input_d / stride_d)
    pad_h = max((output_h - 1) * stride_h + (kernel_h - 1) * dilation[0] + 1 - input_h, 0)
    pad_w = max((output_w - 1) * stride_w + (kernel_w - 1) * dilation[1] + 1 - input_w, 0)
    pad_d = max((output_d - 1) * stride_d + (kernel_d - 1) * dilation[2] + 1 - input_d, 0)
    return pad_h, pad_w, pad_d


_MiB = 1024 * 1024
# Below this many total bytes (in + out) the pallas_call launch / per-step
# overhead dominates: just let XLA pad.
_SMALL_FALLBACK_BYTES = 1 * _MiB


def _vmem_capacity_bytes():
    try:
        info = pltpu.get_tpu_info()
        cap = getattr(info, "vmem_capacity_bytes", None)
        if cap:
            return int(cap)
    except Exception:
        pass
    return 64 * _MiB  # conservative default (v7x-sized VMEM)


@functools.lru_cache(maxsize=None)
def _vmem_budgets():
    """(double-buffered block budget, vmem_limit cap) per TPU generation."""
    cap = _vmem_capacity_bytes()
    if cap <= 80 * _MiB:          # v7x-class: 64 MiB physical VMEM per TC
        return 20 * _MiB, 40 * _MiB
    return 48 * _MiB, 64 * _MiB   # v5e / v6e: 128 MiB physical VMEM


def _sublane_multiple(dtype):
    itemsize = jnp.dtype(dtype).itemsize
    return 8 * max(1, 4 // itemsize)     # 8 for f32, 16 for bf16, 32 for int8


def _tiled_plane_bytes(shape, dtype):
    """Real VMEM bytes of one block plane after (sublane, 128) tiling."""
    dims = list(shape)
    sub = _sublane_multiple(dtype)
    if len(dims) >= 2:
        dims[-2] = -(-dims[-2] // sub) * sub
    dims[-1] = -(-dims[-1] // 128) * 128
    return math.prod(dims) * jnp.dtype(dtype).itemsize


def _choose_tc(N, C, per_chan_tiled_bytes):
    """Pick the channel-fold factor from the tiled VMEM footprint."""
    block_budget, vmem_cap = _vmem_budgets()
    # Input + output blocks are each double-buffered by the pipeline.
    tc = max(1, block_budget // (2 * per_chan_tiled_bytes))
    tc = min(tc, C)
    # v7x shards "parallel" grid axes across its 2 TensorCores: make sure there
    # are >= 2 grid iterations even when N == 1.
    if N == 1 and C >= 2:
        tc = min(tc, (C + 1) // 2)
    # TODO(synk): for video-scale volumes where even tc == 1 exceeds the
    # budget, additionally tile along S2 with a masked tail block.
    vmem_limit = min(vmem_cap, max(32 * _MiB, 2 * tc * per_chan_tiled_bytes + 4 * _MiB))
    return tc, vmem_limit


def _pallas_pad_spatial(x, lo, hi):
    """Zero-pad the trailing len(lo) axes of x (layout (N, C, *spatial)).

    Used with the last axis already lane-dense (folded s3*s4).  Every output
    element is written exactly once (disjoint zero slabs + one interior store).
    """
    N, C = x.shape[:2]
    spatial = tuple(x.shape[2:])
    nd = len(spatial)
    assert nd == len(lo) == len(hi)
    pspatial = tuple(s + l + h for s, l, h in zip(spatial, lo, hi))
    out_shape = (N, C) + pspatial
    blk_dtype = x.dtype
    itemsize = jnp.dtype(x.dtype).itemsize

    per_chan = (_tiled_plane_bytes(spatial, x.dtype)
                + _tiled_plane_bytes(pspatial, x.dtype))
    tc, vmem_limit = _choose_tc(N, C, per_chan)

    def pad_kernel(x_ref, o_ref):
        inner = tuple(slice(l, l + s) for l, s in zip(lo, spatial))
        # 1) zero only the padding slabs (disjoint decomposition, static ints).
        for d in range(nd):
            pre_idx = inner[:d]
            pre_shape = spatial[:d]
            post_idx = (slice(None),) * (nd - 1 - d)
            post_shape = pspatial[d + 1:]
            for start, size in ((0, lo[d]), (lo[d] + spatial[d], hi[d])):
                if size > 0:
                    idx = (slice(None),) + pre_idx + (slice(start, start + size),) + post_idx
                    shape = (tc,) + pre_shape + (size,) + post_shape
                    o_ref[idx] = jnp.zeros(shape, blk_dtype)
        # 2) one full store of the input block into the interior window.
        o_ref[(slice(None),) + inner] = x_ref[...]

    zeros_idx = (0,) * nd
    index_map = lambda n, c: (n, c) + zeros_idx

    return pl.pallas_call(
        pad_kernel,
        out_shape=jax.ShapeDtypeStruct(out_shape, x.dtype),
        grid=(N, pl.cdiv(C, tc)),
        # Last two block dims equal the full array extents -> (8,128) rule ok;
        # a ragged last channel block is masked by Pallas on writeback.
        in_specs=[pl.BlockSpec((None, tc) + spatial, index_map)],
        out_specs=pl.BlockSpec((None, tc) + pspatial, index_map),
        compiler_params=pltpu.CompilerParams(
            dimension_semantics=("parallel", "parallel"),
            vmem_limit_bytes=vmem_limit),
        cost_estimate=pl.CostEstimate(
            flops=0, transcendentals=0,
            bytes_accessed=(x.size + math.prod(out_shape)) * itemsize),
    )(x)


def _pallas_pad_fold_rows(x, lo, hi):
    """General case: the last spatial axis (S4) itself is padded.

    Both the input and the output are presented to the kernel with the two
    trailing dims folded -- (s2, s3*s4) and (s2p, s3p*s4p) -- so every HBM DMA
    moves lane-dense rows.  Inside the kernel the output block is zero-filled
    with one dense store and each input s3-row is copied to its statically
    known offset in the folded, padded lane axis.
    """
    N, C, s2, s3, s4 = x.shape
    lo0, lo1, lo2 = lo
    hi0, hi1, hi2 = hi
    s2p, s3p, s4p = s2 + lo0 + hi0, s3 + lo1 + hi1, s4 + lo2 + hi2
    L, Lp = s3 * s4, s3p * s4p
    blk_dtype = x.dtype
    itemsize = jnp.dtype(x.dtype).itemsize

    xf = x.reshape(N, C, s2, L)  # metadata-only fold (trailing dims contiguous)

    per_chan = (_tiled_plane_bytes((s2, L), x.dtype)
                + _tiled_plane_bytes((s2p, Lp), x.dtype))
    tc, vmem_limit = _choose_tc(N, C, per_chan)

    def pad_kernel(x_ref, o_ref):
        # Dense, unmasked zero fill of the whole output block (cheap in VMEM;
        # HBM traffic is identical and this kernel is DMA-bound).
        o_ref[...] = jnp.zeros((tc, s2p, Lp), blk_dtype)
        # Place each input s3-row at its padded offset in the folded lane axis.
        # TODO(synk): for very large s3 switch this unrolled static loop to a
        # lax.fori_loop with pl.ds offsets to bound code size.
        for j in range(s3):
            src = j * s4
            dst = (lo1 + j) * s4p + lo2
            o_ref[:, lo0:lo0 + s2, dst:dst + s4] = x_ref[:, :, src:src + s4]

    index_map = lambda n, c: (n, c, 0, 0)

    out = pl.pallas_call(
        pad_kernel,
        out_shape=jax.ShapeDtypeStruct((N, C, s2p, Lp), x.dtype),
        grid=(N, pl.cdiv(C, tc)),
        in_specs=[pl.BlockSpec((None, tc, s2, L), index_map)],
        out_specs=pl.BlockSpec((None, tc, s2p, Lp), index_map),
        compiler_params=pltpu.CompilerParams(
            dimension_semantics=("parallel", "parallel"),
            vmem_limit_bytes=vmem_limit),
        cost_estimate=pl.CostEstimate(
            flops=0, transcendentals=0,
            bytes_accessed=(x.size + N * C * s2p * Lp) * itemsize),
    )(xf)
    return out.reshape(N, C, s2p, s3p, s4p)


def adaptive_padding_3d(x, kernel_size=1, stride=1, dilation=1, padding='corner'):
    """Pallas implementation of AdaptivePadding3D.forward."""
    assert padding in ('same', 'corner')
    kernel_size = to_3tuple(kernel_size)
    stride = to_3tuple(stride)
    dilation = to_3tuple(dilation)

    N, C, s2, s3, s4 = x.shape
    pad_h, pad_w, pad_d = get_pad_shape((s2, s3, s4), kernel_size, stride, dilation)

    # Fast path: nothing to pad -> return the input untouched.
    if pad_h == 0 and pad_w == 0 and pad_d == 0:
        return x

    # Mirror F.pad(x, [0, pad_w, 0, pad_h, 0, pad_d]) axis ordering exactly:
    #   axis -1 (S4) <- pad_w, axis -2 (S3) <- pad_h, axis -3 (S2) <- pad_d.
    if padding == 'corner':
        lo = (0, 0, 0)
        hi = (pad_d, pad_h, pad_w)
    else:  # 'same'
        lo = (pad_d // 2, pad_h // 2, pad_w // 2)
        hi = (pad_d - pad_d // 2, pad_h - pad_h // 2, pad_w - pad_w // 2)

    itemsize = jnp.dtype(x.dtype).itemsize
    out_elems = (N * C * (s2 + lo[0] + hi[0]) * (s3 + lo[1] + hi[1])
                 * (s4 + lo[2] + hi[2]))
    # Tiny problems: kernel launch + per-step overhead dominates; use XLA pad.
    if (x.size + out_elems) * itemsize < _SMALL_FALLBACK_BYTES:
        return jnp.pad(x, ((0, 0), (0, 0),
                           (lo[0], hi[0]), (lo[1], hi[1]), (lo[2], hi[2])))

    if lo[2] == 0 and hi[2] == 0:
        # S4 untouched: fold (s3, s4) so the lane axis is s3*s4; any S3 padding
        # becomes a contiguous pad of the folded axis (holds for corner & same).
        xf = x.reshape(N, C, s2, s3 * s4)
        out = _pallas_pad_spatial(xf, (lo[0], lo[1] * s4), (hi[0], hi[1] * s4))
        return out.reshape(N, C, s2 + lo[0] + hi[0], s3 + lo[1] + hi[1], s4)

    # General case: S4 itself is padded -> lane-dense folded in/out views.
    return _pallas_pad_fold_rows(x, lo, hi)


if __name__ == "__main__":
    key0, key1, key2, key3 = jax.random.split(jax.random.PRNGKey(0), 4)
    ks, st, dil = 8, 8, 1
    k3, st3, d3 = to_3tuple(ks), to_3tuple(st), to_3tuple(dil)

    def ref_pad(x, padding):
        # Same F.pad ordering quirk as the module / kernel wrapper.
        pad_h, pad_w, pad_d = get_pad_shape(x.shape[2:], k3, st3, d3)
        if padding == 'corner':
            cfg = ((0, pad_d), (0, pad_h), (0, pad_w))
        else:
            cfg = ((pad_d // 2, pad_d - pad_d // 2),
                   (pad_h // 2, pad_h - pad_h // 2),
                   (pad_w // 2, pad_w - pad_w // 2))
        return jnp.pad(x, ((0, 0), (0, 0)) + cfg)

    def check(x, padding):
        out = adaptive_padding_3d(x, kernel_size=ks, stride=st,
                                  dilation=dil, padding=padding)
        out = jax.block_until_ready(out)
        ref = ref_pad(x, padding)
        assert out.shape == ref.shape, (out.shape, ref.shape)
        assert bool(jnp.array_equal(out, ref)), f"mismatch {x.shape} {padding}"

    # General path (S4 gets padded), corner & same (same exercises lo offsets).
    xa = jax.random.normal(key0, (2, 4, 23, 29, 33), dtype=jnp.float32)
    check(xa, 'corner')
    check(xa, 'same')

    # Lane-dense fold path: S4 untouched, S2 & S3 padded.
    xb = jax.random.normal(key1, (2, 4, 23, 32, 31), dtype=jnp.float32)
    check(xb, 'corner')
    check(xb, 'same')

    # Fold path with only S2 padded.
    xc = jax.random.normal(key2, (2, 4, 24, 32, 31), dtype=jnp.float32)
    check(xc, 'corner')

    # Small-problem jnp.pad fallback.
    xd = jax.random.normal(key3, (2, 3, 7, 15, 17), dtype=jnp.float32)
    check(xd, 'corner')

    # Zero-pad fast path: input already divisible.
    xe = jax.random.normal(key3, (2, 3, 8, 16, 16), dtype=jnp.float32)
    oe = jax.block_until_ready(
        adaptive_padding_3d(xe, kernel_size=ks, stride=st, dilation=dil))
    assert oe.shape == xe.shape and bool(jnp.array_equal(oe, xe))

    print("KERNEL_OK")
</pallas_src>

<mosaic_0001>
module attributes {stable_mosaic.version = 11 : i64} {
  func.func @pad_kernel(%arg0: i32, %arg1: i32, %arg2: memref<1x4x23x957xf32, #tpu.memory_space<vmem>>, %arg3: memref<1x4x30x1080xf32, #tpu.memory_space<vmem>>) attributes {dimension_semantics = [#tpu.dimension_semantics<parallel>, #tpu.dimension_semantics<parallel>], iteration_bounds = array<i64: 2, 1>, scalar_prefetch = 0 : i64, scratch_operands = 0 : i64, tpu.core_type = #tpu.core_type<tc>, window_params = [{transform_indices = @transform_0, window_bounds = array<i64: 1, 4, 23, 957>}, {transform_indices = @transform_1, window_bounds = array<i64: 1, 4, 30, 1080>}]} {
    %cst = arith.constant 0.000000e+00 : f32
    %0 = vector.broadcast %cst : f32 to vector<4x30x1080xf32>
    %c0 = arith.constant 0 : index
    %c0_0 = arith.constant 0 : index
    %c0_1 = arith.constant 0 : index
    %c0_2 = arith.constant 0 : index
    %1 = vector.load %arg3[%c0, %c0_0, %c0_1, %c0_2] : memref<1x4x30x1080xf32, #tpu.memory_space<vmem>>, vector<1x4x30x1080xf32>
    %2 = vector.shape_cast %1 : vector<1x4x30x1080xf32> to vector<4x30x1080xf32>
    %3 = vector.shape_cast %0 : vector<4x30x1080xf32> to vector<1x4x30x1080xf32>
    tpu.vector_store %arg3[%c0, %c0_0, %c0_1, %c0_2], %3 {strides = array<i32>} : memref<1x4x30x1080xf32, #tpu.memory_space<vmem>>, vector<1x4x30x1080xf32>,
    %c0_3 = arith.constant 0 : index
    %c0_4 = arith.constant 0 : index
    %c0_5 = arith.constant 0 : index
    %c0_6 = arith.constant 0 : index
    %4 = vector.load %arg2[%c0_3, %c0_4, %c0_5, %c0_6] : memref<1x4x23x957xf32, #tpu.memory_space<vmem>>, vector<1x4x23x33xf32>
    %5 = vector.shape_cast %4 : vector<1x4x23x33xf32> to vector<4x23x33xf32>
    %c0_7 = arith.constant 0 : index
    %c0_8 = arith.constant 0 : index
    %c0_9 = arith.constant 0 : index
    %c0_10 = arith.constant 0 : index
    %6 = vector.load %arg3[%c0_7, %c0_8, %c0_9, %c0_10] : memref<1x4x30x1080xf32, #tpu.memory_space<vmem>>, vector<1x4x23x33xf32>
    %7 = vector.shape_cast %6 : vector<1x4x23x33xf32> to vector<4x23x33xf32>
    %8 = vector.shape_cast %5 : vector<4x23x33xf32> to vector<1x4x23x33xf32>
    tpu.vector_store %arg3[%c0_7, %c0_8, %c0_9, %c0_10], %8 {strides = array<i32>} : memref<1x4x30x1080xf32, #tpu.memory_space<vmem>>, vector<1x4x23x33xf32>,
    %c0_11 = arith.constant 0 : index
    %c0_12 = arith.constant 0 : index
    %c0_13 = arith.constant 0 : index
    %c33 = arith.constant 33 : index
    %9 = vector.load %arg2[%c0_11, %c0_12, %c0_13, %c33] : memref<1x4x23x957xf32, #tpu.memory_space<vmem>>, vector<1x4x23x33xf32>
    %10 = vector.shape_cast %9 : vector<1x4x23x33xf32> to vector<4x23x33xf32>
    %c0_14 = arith.constant 0 : index
    %c0_15 = arith.constant 0 : index
    %c0_16 = arith.constant 0 : index
    %c36 = arith.constant 36 : index
    %11 = vector.load %arg3[%c0_14, %c0_15, %c0_16, %c36] : memref<1x4x30x1080xf32, #tpu.memory_space<vmem>>, vector<1x4x23x33xf32>
    %12 = vector.shape_cast %11 : vector<1x4x23x33xf32> to vector<4x23x33xf32>
    %13 = vector.shape_cast %10 : vector<4x23x33xf32> to vector<1x4x23x33xf32>
    tpu.vector_store %arg3[%c0_14, %c0_15, %c0_16, %c36], %13 {strides = array<i32>} : memref<1x4x30x1080xf32, #tpu.memory_space<vmem>>, vector<1x4x23x33xf32>,
    %c0_17 = arith.constant 0 : index
    %c0_18 = arith.constant 0 : index
    %c0_19 = arith.constant 0 : index
    %c66 = arith.constant 66 : index
    %14 = vector.load %arg2[%c0_17, %c0_18, %c0_19, %c66] : memref<1x4x23x957xf32, #tpu.memory_space<vmem>>, vector<1x4x23x33xf32>
    %15 = vector.shape_cast %14 : vector<1x4x23x33xf32> to vector<4x23x33xf32>
    %c0_20 = arith.constant 0 : index
    %c0_21 = arith.constant 0 : index
    %c0_22 = arith.constant 0 : index
    %c72 = arith.constant 72 : index
    %16 = vector.load %arg3[%c0_20, %c0_21, %c0_22, %c72] : memref<1x4x30x1080xf32, #tpu.memory_space<vmem>>, vector<1x4x23x33xf32>
    %17 = vector.shape_cast %16 : vector<1x4x23x33xf32> to vector<4x23x33xf32>
    %18 = vector.shape_cast %15 : vector<4x23x33xf32> to vector<1x4x23x33xf32>
    tpu.vector_store %arg3[%c0_20, %c0_21, %c0_22, %c72], %18 {strides = array<i32>} : memref<1x4x30x1080xf32, #tpu.memory_space<vmem>>, vector<1x4x23x33xf32>,
    %c0_23 = arith.constant 0 : index
    %c0_24 = arith.constant 0 : index
    %c0_25 = arith.constant 0 : index
    %c99 = arith.constant 99 : index
    %19 = vector.load %arg2[%c0_23, %c0_24, %c0_25, %c99] : memref<1x4x23x957xf32, #tpu.memory_space<vmem>>, vector<1x4x23x33xf32>
    %20 = vector.shape_cast %19 : vector<1x4x23x33xf32> to vector<4x23x33xf32>
    %c0_26 = arith.constant 0 : index
    %c0_27 = arith.constant 0 : index
    %c0_28 = arith.constant 0 : index
    %c108 = arith.constant 108 : index
    %21 = vector.load %arg3[%c0_26, %c0_27, %c0_28, %c108] : memref<1x4x30x1080xf32, #tpu.memory_space<vmem>>, vector<1x4x23x33xf32>
    %22 = vector.shape_cast %21 : vector<1x4x23x33xf32> to vector<4x23x33xf32>
    %23 = vector.shape_cast %20 : vector<4x23x33xf32> to vector<1x4x23x33xf32>
    tpu.vector_store %arg3[%c0_26, %c0_27, %c0_28, %c108], %23 {strides = array<i32>} : memref<1x4x30x1080xf32, #tpu.memory_space<vmem>>, vector<1x4x23x33xf32>,
    %c0_29 = arith.constant 0 : index
    %c0_30 = arith.constant 0 : index
    %c0_31 = arith.constant 0 : index
    %c132 = arith.constant 132 : index
    %24 = vector.load %arg2[%c0_29, %c0_30, %c0_31, %c132] : memref<1x4x23x957xf32, #tpu.memory_space<vmem>>, vector<1x4x23x33xf32>
    %25 = vector.shape_cast %24 : vector<1x4x23x33xf32> to vector<4x23x33xf32>
    %c0_32 = arith.constant 0 : index
    %c0_33 = arith.constant 0 : index
    %c0_34 = arith.constant 0 : index
    %c144 = arith.constant 144 : index
    %26 = vector.load %arg3[%c0_32, %c0_33, %c0_34, %c144] : memref<1x4x30x1080xf32, #tpu.memory_space<vmem>>, vector<1x4x23x33xf32>
    %27 = vector.shape_cast %26 : vector<1x4x23x33xf32> to vector<4x23x33xf32>
    %28 = vector.shape_cast %25 : vector<4x23x33xf32> to vector<1x4x23x33xf32>
    tpu.vector_store %arg3[%c0_32, %c0_33, %c0_34, %c144], %28 {strides = array<i32>} : memref<1x4x30x1080xf32, #tpu.memory_space<vmem>>, vector<1x4x23x33xf32>,
    %c0_35 = arith.constant 0 : index
    %c0_36 = arith.constant 0 : index
    %c0_37 = arith.constant 0 : index
    %c165 = arith.constant 165 : index
    %29 = vector.load %arg2[%c0_35, %c0_36, %c0_37, %c165] : memref<1x4x23x957xf32, #tpu.memory_space<vmem>>, vector<1x4x23x33xf32>
    %30 = vector.shape_cast %29 : vector<1x4x23x33xf32> to vector<4x23x33xf32>
    %c0_38 = arith.constant 0 : index
    %c0_39 = arith.constant 0 : index
    %c0_40 = arith.constant 0 : index
    %c180 = arith.constant 180 : index
    %31 = vector.load %arg3[%c0_38, %c0_39, %c0_40, %c180] : memref<1x4x30x1080xf32, #tpu.memory_space<vmem>>, vector<1x4x23x33xf32>
    %32 = vector.shape_cast %31 : vector<1x4x23x33xf32> to vector<4x23x33xf32>
    %33 = vector.shape_cast %30 : vector<4x23x33xf32> to vector<1x4x23x33xf32>
    tpu.vector_store %arg3[%c0_38, %c0_39, %c0_40, %c180], %33 {strides = array<i32>} : memref<1x4x30x1080xf32, #tpu.memory_space<vmem>>, vector<1x4x23x33xf32>,
    %c0_41 = arith.constant 0 : index
    %c0_42 = arith.constant 0 : index
    %c0_43 = arith.constant 0 : index
    %c198 = arith.constant 198 : index
    %34 = vector.load %arg2[%c0_41, %c0_42, %c0_43, %c198] : memref<1x4x23x957xf32, #tpu.memory_space<vmem>>, vector<1x4x23x33xf32>
    %35 = vector.shape_cast %34 : vector<1x4x23x33xf32> to vector<4x23x33xf32>
    %c0_44 = arith.constant 0 : index
    %c0_45 = arith.constant 0 : index
    %c0_46 = arith.constant 0 : index
    %c216 = arith.constant 216 : index
    %36 = vector.load %arg3[%c0_44, %c0_45, %c0_46, %c216] : memref<1x4x30x1080xf32, #tpu.memory_space<vmem>>, vector<1x4x23x33xf32>
    %37 = vector.shape_cast %36 : vector<1x4x23x33xf32> to vector<4x23x33xf32>
    %38 = vector.shape_cast %35 : vector<4x23x33xf32> to vector<1x4x23x33xf32>
    tpu.vector_store %arg3[%c0_44, %c0_45, %c0_46, %c216], %38 {strides = array<i32>} : memref<1x4x30x1080xf32, #tpu.memory_space<vmem>>, vector<1x4x23x33xf32>,
    %c0_47 = arith.constant 0 : index
    %c0_48 = arith.constant 0 : index
    %c0_49 = arith.constant 0 : index
    %c231 = arith.constant 231 : index
    %39 = vector.load %arg2[%c0_47, %c0_48, %c0_49, %c231] : memref<1x4x23x957xf32, #tpu.memory_space<vmem>>, vector<1x4x23x33xf32>
    %40 = vector.shape_cast %39 : vector<1x4x23x33xf32> to vector<4x23x33xf32>
    %c0_50 = arith.constant 0 : index
    %c0_51 = arith.constant 0 : index
    %c0_52 = arith.constant 0 : index
    %c252 = arith.constant 252 : index
    %41 = vector.load %arg3[%c0_50, %c0_51, %c0_52, %c252] : memref<1x4x30x1080xf32, #tpu.memory_space<vmem>>, vector<1x4x23x33xf32>
    %42 = vector.shape_cast %41 : vector<1x4x23x33xf32> to vector<4x23x33xf32>
    %43 = vector.shape_cast %40 : vector<4x23x33xf32> to vector<1x4x23x33xf32>
    tpu.vector_store %arg3[%c0_50, %c0_51, %c0_52, %c252], %43 {strides = array<i32>} : memref<1x4x30x1080xf32, #tpu.memory_space<vmem>>, vector<1x4x23x33xf32>,
    %c0_53 = arith.constant 0 : index
    %c0_54 = arith.constant 0 : index
    %c0_55 = arith.constant 0 : index
    %c264 = arith.constant 264 : index
    %44 = vector.load %arg2[%c0_53, %c0_54, %c0_55, %c264] : memref<1x4x23x957xf32, #tpu.memory_space<vmem>>, vector<1x4x23x33xf32>
    %45 = vector.shape_cast %44 : vector<1x4x23x33xf32> to vector<4x23x33xf32>
    %c0_56 = arith.constant 0 : index
    %c0_57 = arith.constant 0 : index
    %c0_58 = arith.constant 0 : index
    %c288 = arith.constant 288 : index
    %46 = vector.load %arg3[%c0_56, %c0_57, %c0_58, %c288] : memref<1x4x30x1080xf32, #tpu.memory_space<vmem>>, vector<1x4x23x33xf32>
    %47 = vector.shape_cast %46 : vector<1x4x23x33xf32> to vector<4x23x33xf32>
    %48 = vector.shape_cast %45 : vector<4x23x33xf32> to vector<1x4x23x33xf32>
    tpu.vector_store %arg3[%c0_56, %c0_57, %c0_58, %c288], %48 {strides = array<i32>} : memref<1x4x30x1080xf32, #tpu.memory_space<vmem>>, vector<1x4x23x33xf32>,
    %c0_59 = arith.constant 0 : index
    %c0_60 = arith.constant 0 : index
    %c0_61 = arith.constant 0 : index
    %c297 = arith.constant 297 : index
    %49 = vector.load %arg2[%c0_59, %c0_60, %c0_61, %c297] : memref<1x4x23x957xf32, #tpu.memory_space<vmem>>, vector<1x4x23x33xf32>
    %50 = vector.shape_cast %49 : vector<1x4x23x33xf32> to vector<4x23x33xf32>
    %c0_62 = arith.constant 0 : index
    %c0_63 = arith.constant 0 : index
    %c0_64 = arith.constant 0 : index
    %c324 = arith.constant 324 : index
    %51 = vector.load %arg3[%c0_62, %c0_63, %c0_64, %c324] : memref<1x4x30x1080xf32, #tpu.memory_space<vmem>>, vector<1x4x23x33xf32>
    %52 = vector.shape_cast %51 : vector<1x4x23x33xf32> to vector<4x23x33xf32>
    %53 = vector.shape_cast %50 : vector<4x23x33xf32> to vector<1x4x23x33xf32>
    tpu.vector_store %arg3[%c0_62, %c0_63, %c0_64, %c324], %53 {strides = array<i32>} : memref<1x4x30x1080xf32, #tpu.memory_space<vmem>>, vector<1x4x23x33xf32>,
    %c0_65 = arith.constant 0 : index
    %c0_66 = arith.constant 0 : index
    %c0_67 = arith.constant 0 : index
    %c330 = arith.constant 330 : index
    %54 = vector.load %arg2[%c0_65, %c0_66, %c0_67, %c330] : memref<1x4x23x957xf32, #tpu.memory_space<vmem>>, vector<1x4x23x33xf32>
    %55 = vector.shape_cast %54 : vector<1x4x23x33xf32> to vector<4x23x33xf32>
    %c0_68 = arith.constant 0 : index
    %c0_69 = arith.constant 0 : index
    %c0_70 = arith.constant 0 : index
    %c360 = arith.constant 360 : index
    %56 = vector.load %arg3[%c0_68, %c0_69, %c0_70, %c360] : memref<1x4x30x1080xf32, #tpu.memory_space<vmem>>, vector<1x4x23x33xf32>
    %57 = vector.shape_cast %56 : vector<1x4x23x33xf32> to vector<4x23x33xf32>
    %58 = vector.shape_cast %55 : vector<4x23x33xf32> to vector<1x4x23x33xf32>
    tpu.vector_store %arg3[%c0_68, %c0_69, %c0_70, %c360], %58 {strides = array<i32>} : memref<1x4x30x1080xf32, #tpu.memory_space<vmem>>, vector<1x4x23x33xf32>,
    %c0_71 = arith.constant 0 : index
    %c0_72 = arith.constant 0 : index
    %c0_73 = arith.constant 0 : index
    %c363 = arith.constant 363 : index
    %59 = vector.load %arg2[%c0_71, %c0_72, %c0_73, %c363] : memref<1x4x23x957xf32, #tpu.memory_space<vmem>>, vector<1x4x23x33xf32>
    %60 = vector.shape_cast %59 : vector<1x4x23x33xf32> to vector<4x23x33xf32>
    %c0_74 = arith.constant 0 : index
    %c0_75 = arith.constant 0 : index
    %c0_76 = arith.constant 0 : index
    %c396 = arith.constant 396 : index
    %61 = vector.load %arg3[%c0_74, %c0_75, %c0_76, %c396] : memref<1x4x30x1080xf32, #tpu.memory_space<vmem>>, vector<1x4x23x33xf32>
    %62 = vector.shape_cast %61 : vector<1x4x23x33xf32> to vector<4x23x33xf32>
    %63 = vector.shape_cast %60 : vector<4x23x33xf32> to vector<1x4x23x33xf32>
    tpu.vector_store %arg3[%c0_74, %c0_75, %c0_76, %c396], %63 {strides = array<i32>} : memref<1x4x30x1080xf32, #tpu.memory_space<vmem>>, vector<1x4x23x33xf32>,
    %c0_77 = arith.constant 0 : index
    %c0_78 = arith.constant 0 : index
    %c0_79 = arith.constant 0 : index
    %c396_80 = arith.constant 396 : index
    %64 = vector.load %arg2[%c0_77, %c0_78, %c0_79, %c396_80] : memref<1x4x23x957xf32, #tpu.memory_space<vmem>>, vector<1x4x23x33xf32>
    %65 = vector.shape_cast %64 : vector<1x4x23x33xf32> to vector<4x23x33xf32>
    %c0_81 = arith.constant 0 : index
    %c0_82 = arith.constant 0 : index
    %c0_83 = arith.constant 0 : index
    %c432 = arith.constant 432 : index
    %66 = vector.load %arg3[%c0_81, %c0_82, %c0_83, %c432] : memref<1x4x30x1080xf32, #tpu.memory_space<vmem>>, vector<1x4x23x33xf32>
    %67 = vector.shape_cast %66 : vector<1x4x23x33xf32> to vector<4x23x33xf32>
    %68 = vector.shape_cast %65 : vector<4x23x33xf32> to vector<1x4x23x33xf32>
    tpu.vector_store %arg3[%c0_81, %c0_82, %c0_83, %c432], %68 {strides = array<i32>} : memref<1x4x30x1080xf32, #tpu.memory_space<vmem>>, vector<1x4x23x33xf32>,
    %c0_84 = arith.constant 0 : index
    %c0_85 = arith.constant 0 : index
    %c0_86 = arith.constant 0 : index
    %c429 = arith.constant 429 : index
    %69 = vector.load %arg2[%c0_84, %c0_85, %c0_86, %c429] : memref<1x4x23x957xf32, #tpu.memory_space<vmem>>, vector<1x4x23x33xf32>
    %70 = vector.shape_cast %69 : vector<1x4x23x33xf32> to vector<4x23x33xf32>
    %c0_87 = arith.constant 0 : index
    %c0_88 = arith.constant 0 : index
    %c0_89 = arith.constant 0 : index
    %c468 = arith.constant 468 : index
    %71 = vector.load %arg3[%c0_87, %c0_88, %c0_89, %c468] : memref<1x4x30x1080xf32, #tpu.memory_space<vmem>>, vector<1x4x23x33xf32>
    %72 = vector.shape_cast %71 : vector<1x4x23x33xf32> to vector<4x23x33xf32>
    %73 = vector.shape_cast %70 : vector<4x23x33xf32> to vector<1x4x23x33xf32>
    tpu.vector_store %arg3[%c0_87, %c0_88, %c0_89, %c468], %73 {strides = array<i32>} : memref<1x4x30x1080xf32, #tpu.memory_space<vmem>>, vector<1x4x23x33xf32>,
    %c0_90 = arith.constant 0 : index
    %c0_91 = arith.constant 0 : index
    %c0_92 = arith.constant 0 : index
    %c462 = arith.constant 462 : index
    %74 = vector.load %arg2[%c0_90, %c0_91, %c0_92, %c462] : memref<1x4x23x957xf32, #tpu.memory_space<vmem>>, vector<1x4x23x33xf32>
    %75 = vector.shape_cast %74 : vector<1x4x23x33xf32> to vector<4x23x33xf32>
    %c0_93 = arith.constant 0 : index
    %c0_94 = arith.constant 0 : index
    %c0_95 = arith.constant 0 : index
    %c504 = arith.constant 504 : index
    %76 = vector.load %arg3[%c0_93, %c0_94, %c0_95, %c504] : memref<1x4x30x1080xf32, #tpu.memory_space<vmem>>, vector<1x4x23x33xf32>
    %77 = vector.shape_cast %76 : vector<1x4x23x33xf32> to vector<4x23x33xf32>
    %78 = vector.shape_cast %75 : vector<4x23x33xf32> to vector<1x4x23x33xf32>
    tpu.vector_store %arg3[%c0_93, %c0_94, %c0_95, %c504], %78 {strides = array<i32>} : memref<1x4x30x1080xf32, #tpu.memory_space<vmem>>, vector<1x4x23x33xf32>,
    %c0_96 = arith.constant 0 : index
    %c0_97 = arith.constant 0 : index
    %c0_98 = arith.constant 0 : index
    %c495 = arith.constant 495 : index
    %79 = vector.load %arg2[%c0_96, %c0_97, %c0_98, %c495] : memref<1x4x23x957xf32, #tpu.memory_space<vmem>>, vector<1x4x23x33xf32>
    %80 = vector.shape_cast %79 : vector<1x4x23x33xf32> to vector<4x23x33xf32>
    %c0_99 = arith.constant 0 : index
    %c0_100 = arith.constant 0 : index
    %c0_101 = arith.constant 0 : index
    %c540 = arith.constant 540 : index
    %81 = vector.load %arg3[%c0_99, %c0_100, %c0_101, %c540] : memref<1x4x30x1080xf32, #tpu.memory_space<vmem>>, vector<1x4x23x33xf32>
    %82 = vector.shape_cast %81 : vector<1x4x23x33xf32> to vector<4x23x33xf32>
    %83 = vector.shape_cast %80 : vector<4x23x33xf32> to vector<1x4x23x33xf32>
    tpu.vector_store %arg3[%c0_99, %c0_100, %c0_101, %c540], %83 {strides = array<i32>} : memref<1x4x30x1080xf32, #tpu.memory_space<vmem>>, vector<1x4x23x33xf32>,
    %c0_102 = arith.constant 0 : index
    %c0_103 = arith.constant 0 : index
    %c0_104 = arith.constant 0 : index
    %c528 = arith.constant 528 : index
    %84 = vector.load %arg2[%c0_102, %c0_103, %c0_104, %c528] : memref<1x4x23x957xf32, #tpu.memory_space<vmem>>, vector<1x4x23x33xf32>
    %85 = vector.shape_cast %84 : vector<1x4x23x33xf32> to vector<4x23x33xf32>
    %c0_105 = arith.constant 0 : index
    %c0_106 = arith.constant 0 : index
    %c0_107 = arith.constant 0 : index
    %c576 = arith.constant 576 : index
    %86 = vector.load %arg3[%c0_105, %c0_106, %c0_107, %c576] : memref<1x4x30x1080xf32, #tpu.memory_space<vmem>>, vector<1x4x23x33xf32>
    %87 = vector.shape_cast %86 : vector<1x4x23x33xf32> to vector<4x23x33xf32>
    %88 = vector.shape_cast %85 : vector<4x23x33xf32> to vector<1x4x23x33xf32>
    tpu.vector_store %arg3[%c0_105, %c0_106, %c0_107, %c576], %88 {strides = array<i32>} : memref<1x4x30x1080xf32, #tpu.memory_space<vmem>>, vector<1x4x23x33xf32>,
    %c0_108 = arith.constant 0 : index
    %c0_109 = arith.constant 0 : index
    %c0_110 = arith.constant 0 : index
    %c561 = arith.constant 561 : index
    %89 = vector.load %arg2[%c0_108, %c0_109, %c0_110, %c561] : memref<1x4x23x957xf32, #tpu.memory_space<vmem>>, vector<1x4x23x33xf32>
    %90 = vector.shape_cast %89 : vector<1x4x23x33xf32> to vector<4x23x33xf32>
    %c0_111 = arith.constant 0 : index
    %c0_112 = arith.constant 0 : index
    %c0_113 = arith.constant 0 : index
    %c612 = arith.constant 612 : index
    %91 = vector.load %arg3[%c0_111, %c0_112, %c0_113, %c612] : memref<1x4x30x1080xf32, #tpu.memory_space<vmem>>, vector<1x4x23x33xf32>
    %92 = vector.shape_cast %91 : vector<1x4x23x33xf32> to vector<4x23x33xf32>
    %93 = vector.shape_cast %90 : vector<4x23x33xf32> to vector<1x4x23x33xf32>
    tpu.vector_store %arg3[%c0_111, %c0_112, %c0_113, %c612], %93 {strides = array<i32>} : memref<1x4x30x1080xf32, #tpu.memory_space<vmem>>, vector<1x4x23x33xf32>,
    %c0_114 = arith.constant 0 : index
    %c0_115 = arith.constant 0 : index
    %c0_116 = arith.constant 0 : index
    %c594 = arith.constant 594 : index
    %94 = vector.load %arg2[%c0_114, %c0_115, %c0_116, %c594] : memref<1x4x23x957xf32, #tpu.memory_space<vmem>>, vector<1x4x23x33xf32>
    %95 = vector.shape_cast %94 : vector<1x4x23x33xf32> to vector<4x23x33xf32>
    %c0_117 = arith.constant 0 : index
    %c0_118 = arith.constant 0 : index
    %c0_119 = arith.constant 0 : index
    %c648 = arith.constant 648 : index
    %96 = vector.load %arg3[%c0_117, %c0_118, %c0_119, %c648] : memref<1x4x30x1080xf32, #tpu.memory_space<vmem>>, vector<1x4x23x33xf32>
    %97 = vector.shape_cast %96 : vector<1x4x23x33xf32> to vector<4x23x33xf32>
    %98 = vector.shape_cast %95 : vector<4x23x33xf32> to vector<1x4x23x33xf32>
    tpu.vector_store %arg3[%c0_117, %c0_118, %c0_119, %c648], %98 {strides = array<i32>} : memref<1x4x30x1080xf32, #tpu.memory_space<vmem>>, vector<1x4x23x33xf32>,
    %c0_120 = arith.constant 0 : index
    %c0_121 = arith.constant 0 : index
    %c0_122 = arith.constant 0 : index
    %c627 = arith.constant 627 : index
    %99 = vector.load %arg2[%c0_120, %c0_121, %c0_122, %c627] : memref<1x4x23x957xf32, #tpu.memory_space<vmem>>, vector<1x4x23x33xf32>
    %100 = vector.shape_cast %99 : vector<1x4x23x33xf32> to vector<4x23x33xf32>
    %c0_123 = arith.constant 0 : index
    %c0_124 = arith.constant 0 : index
    %c0_125 = arith.constant 0 : index
    %c684 = arith.constant 684 : index
    %101 = vector.load %arg3[%c0_123, %c0_124, %c0_125, %c684] : memref<1x4x30x1080xf32, #tpu.memory_space<vmem>>, vector<1x4x23x33xf32>
    %102 = vector.shape_cast %101 : vector<1x4x23x33xf32> to vector<4x23x33xf32>
    %103 = vector.shape_cast %100 : vector<4x23x33xf32> to vector<1x4x23x33xf32>
    tpu.vector_store %arg3[%c0_123, %c0_124, %c0_125, %c684], %103 {strides = array<i32>} : memref<1x4x30x1080xf32, #tpu.memory_space<vmem>>, vector<1x4x23x33xf32>,
    %c0_126 = arith.constant 0 : index
    %c0_127 = arith.constant 0 : index
    %c0_128 = arith.constant 0 : index
    %c660 = arith.constant 660 : index
    %104 = vector.load %arg2[%c0_126, %c0_127, %c0_128, %c660] : memref<1x4x23x957xf32, #tpu.memory_space<vmem>>, vector<1x4x23x33xf32>
    %105 = vector.shape_cast %104 : vector<1x4x23x33xf32> to vector<4x23x33xf32>
    %c0_129 = arith.constant 0 : index
    %c0_130 = arith.constant 0 : index
    %c0_131 = arith.constant 0 : index
    %c720 = arith.constant 720 : index
    %106 = vector.load %arg3[%c0_129, %c0_130, %c0_131, %c720] : memref<1x4x30x1080xf32, #tpu.memory_space<vmem>>, vector<1x4x23x33xf32>
    %107 = vector.shape_cast %106 : vector<1x4x23x33xf32> to vector<4x23x33xf32>
    %108 = vector.shape_cast %105 : vector<4x23x33xf32> to vector<1x4x23x33xf32>
    tpu.vector_store %arg3[%c0_129, %c0_130, %c0_131, %c720], %108 {strides = array<i32>} : memref<1x4x30x1080xf32, #tpu.memory_space<vmem>>, vector<1x4x23x33xf32>,
    %c0_132 = arith.constant 0 : index
    %c0_133 = arith.constant 0 : index
    %c0_134 = arith.constant 0 : index
    %c693 = arith.constant 693 : index
    %109 = vector.load %arg2[%c0_132, %c0_133, %c0_134, %c693] : memref<1x4x23x957xf32, #tpu.memory_space<vmem>>, vector<1x4x23x33xf32>
    %110 = vector.shape_cast %109 : vector<1x4x23x33xf32> to vector<4x23x33xf32>
    %c0_135 = arith.constant 0 : index
    %c0_136 = arith.constant 0 : index
    %c0_137 = arith.constant 0 : index
    %c756 = arith.constant 756 : index
    %111 = vector.load %arg3[%c0_135, %c0_136, %c0_137, %c756] : memref<1x4x30x1080xf32, #tpu.memory_space<vmem>>, vector<1x4x23x33xf32>
    %112 = vector.shape_cast %111 : vector<1x4x23x33xf32> to vector<4x23x33xf32>
    %113 = vector.shape_cast %110 : vector<4x23x33xf32> to vector<1x4x23x33xf32>
    tpu.vector_store %arg3[%c0_135, %c0_136, %c0_137, %c756], %113 {strides = array<i32>} : memref<1x4x30x1080xf32, #tpu.memory_space<vmem>>, vector<1x4x23x33xf32>,
    %c0_138 = arith.constant 0 : index
    %c0_139 = arith.constant 0 : index
    %c0_140 = arith.constant 0 : index
    %c726 = arith.constant 726 : index
    %114 = vector.load %arg2[%c0_138, %c0_139, %c0_140, %c726] : memref<1x4x23x957xf32, #tpu.memory_space<vmem>>, vector<1x4x23x33xf32>
    %115 = vector.shape_cast %114 : vector<1x4x23x33xf32> to vector<4x23x33xf32>
    %c0_141 = arith.constant 0 : index
    %c0_142 = arith.constant 0 : index
    %c0_143 = arith.constant 0 : index
    %c792 = arith.constant 792 : index
    %116 = vector.load %arg3[%c0_141, %c0_142, %c0_143, %c792] : memref<1x4x30x1080xf32, #tpu.memory_space<vmem>>, vector<1x4x23x33xf32>
    %117 = vector.shape_cast %116 : vector<1x4x23x33xf32> to vector<4x23x33xf32>
    %118 = vector.shape_cast %115 : vector<4x23x33xf32> to vector<1x4x23x33xf32>
    tpu.vector_store %arg3[%c0_141, %c0_142, %c0_143, %c792], %118 {strides = array<i32>} : memref<1x4x30x1080xf32, #tpu.memory_space<vmem>>, vector<1x4x23x33xf32>,
    %c0_144 = arith.constant 0 : index
    %c0_145 = arith.constant 0 : index
    %c0_146 = arith.constant 0 : index
    %c759 = arith.constant 759 : index
    %119 = vector.load %arg2[%c0_144, %c0_145, %c0_146, %c759] : memref<1x4x23x957xf32, #tpu.memory_space<vmem>>, vector<1x4x23x33xf32>
    %120 = vector.shape_cast %119 : vector<1x4x23x33xf32> to vector<4x23x33xf32>
    %c0_147 = arith.constant 0 : index
    %c0_148 = arith.constant 0 : index
    %c0_149 = arith.constant 0 : index
    %c828 = arith.constant 828 : index
    %121 = vector.load %arg3[%c0_147, %c0_148, %c0_149, %c828] : memref<1x4x30x1080xf32, #tpu.memory_space<vmem>>, vector<1x4x23x33xf32>
    %122 = vector.shape_cast %121 : vector<1x4x23x33xf32> to vector<4x23x33xf32>
    %123 = vector.shape_cast %120 : vector<4x23x33xf32> to vector<1x4x23x33xf32>
    tpu.vector_store %arg3[%c0_147, %c0_148, %c0_149, %c828], %123 {strides = array<i32>} : memref<1x4x30x1080xf32, #tpu.memory_space<vmem>>, vector<1x4x23x33xf32>,
    %c0_150 = arith.constant 0 : index
    %c0_151 = arith.constant 0 : index
    %c0_152 = arith.constant 0 : index
    %c792_153 = arith.constant 792 : index
    %124 = vector.load %arg2[%c0_150, %c0_151, %c0_152, %c792_153] : memref<1x4x23x957xf32, #tpu.memory_space<vmem>>, vector<1x4x23x33xf32>
    %125 = vector.shape_cast %124 : vector<1x4x23x33xf32> to vector<4x23x33xf32>
    %c0_154 = arith.constant 0 : index
    %c0_155 = arith.constant 0 : index
    %c0_156 = arith.constant 0 : index
    %c864 = arith.constant 864 : index
    %126 = vector.load %arg3[%c0_154, %c0_155, %c0_156, %c864] : memref<1x4x30x1080xf32, #tpu.memory_space<vmem>>, vector<1x4x23x33xf32>
    %127 = vector.shape_cast %126 : vector<1x4x23x33xf32> to vector<4x23x33xf32>
    %128 = vector.shape_cast %125 : vector<4x23x33xf32> to vector<1x4x23x33xf32>
    tpu.vector_store %arg3[%c0_154, %c0_155, %c0_156, %c864], %128 {strides = array<i32>} : memref<1x4x30x1080xf32, #tpu.memory_space<vmem>>, vector<1x4x23x33xf32>,
    %c0_157 = arith.constant 0 : index
    %c0_158 = arith.constant 0 : index
    %c0_159 = arith.constant 0 : index
    %c825 = arith.constant 825 : index
    %129 = vector.load %arg2[%c0_157, %c0_158, %c0_159, %c825] : memref<1x4x23x957xf32, #tpu.memory_space<vmem>>, vector<1x4x23x33xf32>
    %130 = vector.shape_cast %129 : vector<1x4x23x33xf32> to vector<4x23x33xf32>
    %c0_160 = arith.constant 0 : index
    %c0_161 = arith.constant 0 : index
    %c0_162 = arith.constant 0 : index
    %c900 = arith.constant 900 : index
    %131 = vector.load %arg3[%c0_160, %c0_161, %c0_162, %c900] : memref<1x4x30x1080xf32, #tpu.memory_space<vmem>>, vector<1x4x23x33xf32>
    %132 = vector.shape_cast %131 : vector<1x4x23x33xf32> to vector<4x23x33xf32>
    %133 = vector.shape_cast %130 : vector<4x23x33xf32> to vector<1x4x23x33xf32>
    tpu.vector_store %arg3[%c0_160, %c0_161, %c0_162, %c900], %133 {strides = array<i32>} : memref<1x4x30x1080xf32, #tpu.memory_space<vmem>>, vector<1x4x23x33xf32>,
    %c0_163 = arith.constant 0 : index
    %c0_164 = arith.constant 0 : index
    %c0_165 = arith.constant 0 : index
    %c858 = arith.constant 858 : index
    %134 = vector.load %arg2[%c0_163, %c0_164, %c0_165, %c858] : memref<1x4x23x957xf32, #tpu.memory_space<vmem>>, vector<1x4x23x33xf32>
    %135 = vector.shape_cast %134 : vector<1x4x23x33xf32> to vector<4x23x33xf32>
    %c0_166 = arith.constant 0 : index
    %c0_167 = arith.constant 0 : index
    %c0_168 = arith.constant 0 : index
    %c936 = arith.constant 936 : index
    %136 = vector.load %arg3[%c0_166, %c0_167, %c0_168, %c936] : memref<1x4x30x1080xf32, #tpu.memory_space<vmem>>, vector<1x4x23x33xf32>
    %137 = vector.shape_cast %136 : vector<1x4x23x33xf32> to vector<4x23x33xf32>
    %138 = vector.shape_cast %135 : vector<4x23x33xf32> to vector<1x4x23x33xf32>
    tpu.vector_store %arg3[%c0_166, %c0_167, %c0_168, %c936], %138 {strides = array<i32>} : memref<1x4x30x1080xf32, #tpu.memory_space<vmem>>, vector<1x4x23x33xf32>,
    %c0_169 = arith.constant 0 : index
    %c0_170 = arith.constant 0 : index
    %c0_171 = arith.constant 0 : index
    %c891 = arith.constant 891 : index
    %139 = vector.load %arg2[%c0_169, %c0_170, %c0_171, %c891] : memref<1x4x23x957xf32, #tpu.memory_space<vmem>>, vector<1x4x23x33xf32>
    %140 = vector.shape_cast %139 : vector<1x4x23x33xf32> to vector<4x23x33xf32>
    %c0_172 = arith.constant 0 : index
    %c0_173 = arith.constant 0 : index
    %c0_174 = arith.constant 0 : index
    %c972 = arith.constant 972 : index
    %141 = vector.load %arg3[%c0_172, %c0_173, %c0_174, %c972] : memref<1x4x30x1080xf32, #tpu.memory_space<vmem>>, vector<1x4x23x33xf32>
    %142 = vector.shape_cast %141 : vector<1x4x23x33xf32> to vector<4x23x33xf32>
    %143 = vector.shape_cast %140 : vector<4x23x33xf32> to vector<1x4x23x33xf32>
    tpu.vector_store %arg3[%c0_172, %c0_173, %c0_174, %c972], %143 {strides = array<i32>} : memref<1x4x30x1080xf32, #tpu.memory_space<vmem>>, vector<1x4x23x33xf32>,
    %c0_175 = arith.constant 0 : index
    %c0_176 = arith.constant 0 : index
    %c0_177 = arith.constant 0 : index
    %c924 = arith.constant 924 : index
    %144 = vector.load %arg2[%c0_175, %c0_176, %c0_177, %c924] : memref<1x4x23x957xf32, #tpu.memory_space<vmem>>, vector<1x4x23x33xf32>
    %145 = vector.shape_cast %144 : vector<1x4x23x33xf32> to vector<4x23x33xf32>
    %c0_178 = arith.constant 0 : index
    %c0_179 = arith.constant 0 : index
    %c0_180 = arith.constant 0 : index
    %c1008 = arith.constant 1008 : index
    %146 = vector.load %arg3[%c0_178, %c0_179, %c0_180, %c1008] : memref<1x4x30x1080xf32, #tpu.memory_space<vmem>>, vector<1x4x23x33xf32>
    %147 = vector.shape_cast %146 : vector<1x4x23x33xf32> to vector<4x23x33xf32>
    %148 = vector.shape_cast %145 : vector<4x23x33xf32> to vector<1x4x23x33xf32>
    tpu.vector_store %arg3[%c0_178, %c0_179, %c0_180, %c1008], %148 {strides = array<i32>} : memref<1x4x30x1080xf32, #tpu.memory_space<vmem>>, vector<1x4x23x33xf32>,
    return
  }
  func.func @transform_0(%arg0: i32, %arg1: i32) -> (i32, i32, i32, i32) {
    %c0_i32 = arith.constant 0 : i32
    %c0_i32_0 = arith.constant 0 : i32
    %c0_i32_1 = arith.constant 0 : i32
    return %arg0, %arg1, %c0_i32, %c0_i32_0 : i32, i32, i32, i32
  }
  func.func @transform_1(%arg0: i32, %arg1: i32) -> (i32, i32, i32, i32) {
    %c0_i32 = arith.constant 0 : i32
    %c0_i32_0 = arith.constant 0 : i32
    %c0_i32_1 = arith.constant 0 : i32
    return %arg0, %arg1, %c0_i32, %c0_i32_0 : i32, i32, i32, i32
  }
}

</mosaic_0001>

<llo_original>
// kernel: tpu_custom_call.1
$region0: #{tpu_custom_call.1}
  #allocation0 [shape = 'u32[]', space=smem, size = 0x4, offset = 0x4, fixed_abs, tag = 'smem constant byte address 0x4 - core index']
  #allocation1 [shape = 'u32[144,128]{1,0:T(1,128)}', space=vmem, size = 0x12000, scoped, tag = 'internal scratch']
  %s0 = inlined_call_operand.vmem [shape: f32[2,4,23,957], index: 0, kind: input, shape index: {}]
  %s1 = inlined_call_operand.vmem [shape: f32[2,4,30,1080], index: 1, kind: output, shape index: {}]
  %s2 = sld [smem:[#allocation0]]
  $region37: #{tpu_custom_call.1} parent=0
    _
  %s4 = ssub.s32 1, %s2
  %s5 = scalar_select 0, %s4, %s2
  loop: start=0, step=1, limit=4
  $region2: #{tpu_custom_call.1} parent=0 // loop_pre_header
    _
  $region3: #{tpu_custom_call.1} parent=0 // loop_header
    %s7 = sphi 0, %s11
    %p8 = scmp.ge.s32.totalorder %s7, 4
    %s14 = sphi 0, %s26
    %s15 = sphi 0, %s22
    %s16 = sphi 0, %s14
    %s17 = sphi 0, %s15
    %s18 = sphi 0, %s16
    %s19 = sphi 0, %s17
    %s31 = sphi 0, %s33
    %s34 = sphi 0, %s31
    %s35 = sphi 0, %s34
    %s51 = sphi 0, %s35
    %s59 = sphi 0, %s61
    %s62 = sphi 0, %s59
    %s63 = sphi 0, %s62
    %s79 = sphi 0, %s63
  $region4: #{tpu_custom_call.1} parent=0 // loop_header_branch
    %10 = sbr.rel (%p8) target = $region8
  $region5: #{tpu_custom_call.1} parent=0 // loop_body
    %s12 = ssub.s32 %s7, 1
    %s13 = ssub.s32 %s7, 2
    %s20 = sadd.s32 1, %s15
    %p21 = scmp.ge.s32.totalorder %s20, 1
    %s22 = scalar_select %p21, 0, %s20
    %s23 = sadd.s32 1, %s14
    %s24 = scalar_select %p21, %s23, %s14
    %p25 = scmp.ge.s32.totalorder %s24, 2
    %s26 = scalar_select %p25, 0, %s24
    %s27 = ssub.s32 %s14, %s26
    %s28 = ssub.s32 %s15, %s22
    %s29 = sor.u32 %s27, %s28
    %p30 = scmp.eq.s32.totalorder %s29, 0
    %s32 = sadd.s32 %s31, 1
    %s33 = scalar_select %p30, %s31, %s32
    %p36 = pneg %p30
    %p37 = scmp.eq.s32.totalorder %s7, 1
    %p38 = por %p36, %p37
    %p39 = scmp.ne.s32.totalorder %s31, %s34
    %p40 = scmp.eq.s32.totalorder %s7, 0
    %p41 = por %p39, %p40
    %p42 = scmp.ne.s32.totalorder %s31, %s34
    %p43 = scmp.eq.s32.totalorder %s12, 1
    %p44 = por %p42, %p43
    %p45 = scmp.ne.s32.totalorder %s34, %s35
    %p46 = scmp.eq.s32.totalorder %s12, 0
    %p47 = por %p45, %p46
    %p48 = scmp.ne.s32.totalorder %s34, %s35
    %p49 = scmp.eq.s32.totalorder %s13, 1
    %p50 = por %p48, %p49
    %p52 = scmp.ne.s32.totalorder %s35, %s51
    %p53 = scmp.eq.s32.totalorder %s13, 0
    %p54 = por %p52, %p53
    %s55 = ssub.s32 %s14, %s26
    %s56 = ssub.s32 %s15, %s22
    %s57 = sor.u32 %s55, %s56
    %p58 = scmp.eq.s32.totalorder %s57, 0
    %s60 = sadd.s32 %s59, 1
    %s61 = scalar_select %p58, %s59, %s60
    %p64 = pneg %p58
    %p65 = scmp.eq.s32.totalorder %s7, 1
    %p66 = por %p64, %p65
    %p67 = scmp.ne.s32.totalorder %s59, %s62
    %p68 = scmp.eq.s32.totalorder %s7, 0
    %p69 = por %p67, %p68
    %p70 = scmp.ne.s32.totalorder %s59, %s62
    %p71 = scmp.eq.s32.totalorder %s12, 1
    %p72 = por %p70, %p71
    %p73 = scmp.ne.s32.totalorder %s62, %s63
    %p74 = scmp.eq.s32.totalorder %s12, 0
    %p75 = por %p73, %p74
    %p76 = scmp.ne.s32.totalorder %s62, %s63
    %p77 = scmp.eq.s32.totalorder %s13, 1
    %p78 = por %p76, %p77
    %p80 = scmp.ne.s32.totalorder %s63, %s79
    %p81 = scmp.eq.s32.totalorder %s13, 0
    %p82 = por %p80, %p81
    %p83 = scmp.le.s32.totalorder 1, %s7
    %p84 = scmp.lt.s32.totalorder %s7, 3
    %p85 = pnand %p83, %p84
    %p86 = pneg %p85
    // Predicated region
    $region9: #{tpu_custom_call.1} parent=5 // pred_check
      _
    $region10: #{tpu_custom_call.1} parent=5 // pred_check_branch
      %88 = sbr.rel (%p85) target = $region12
    $region11: #{tpu_custom_call.1} parent=5 // pred_region
      %s89 = ssub.s32 %s7, 1
    $region12: #{tpu_custom_call.1} parent=5 // pred_fallthru
      _
    %p90 = scmp.lt.s32.totalorder %s7, 2
    // Predicated region
    $region13: #{tpu_custom_call.1} parent=5 // pred_check
      %p91 = pneg %p90
    $region14: #{tpu_custom_call.1} parent=5 // pred_check_branch
      %93 = sbr.rel (%p91) target = $region16
    $region15: #{tpu_custom_call.1} parent=5 // pred_region
      // Predicated region
      $region17: #{tpu_custom_call.1} parent=15 // pred_check
        %p94 = pneg %p41
      $region18: #{tpu_custom_call.1} parent=15 // pred_check_branch
        %96 = sbr.rel (%p94) target = $region20
      $region19: #{tpu_custom_call.1} parent=15 // pred_region
        %s97 = smul.u32 4, %s15
        %p98 = scmp.lt.s32.totalorder %s14, 1
        %s99 = scalar_select %p98, %s14, 1
        %p100 = scmp.lt.s32.totalorder %s97, 3
        %s101 = scalar_select %p100, %s97, 3
        %s102 = smul.addr %s101, 24
        %s103 = smul.addr %s99, 96
        %s104 = sadd.s32 %s102, %s103
        %s105 = smul.addr %s104, 8
        %s106 = scalar_lea.vmem %s0, %s105
        %s107 = smul.u32 4, %s15
      $region20: #{tpu_custom_call.1} parent=15 // pred_fallthru
        _
    $region16: #{tpu_custom_call.1} parent=5 // pred_fallthru
      _
    %p108 = scmp.le.s32.totalorder 1, %s7
    %p109 = scmp.lt.s32.totalorder %s7, 3
    %p110 = pnand %p108, %p109
    %p111 = pneg %p110
    // Predicated region
    $region21: #{tpu_custom_call.1} parent=5 // pred_check
      _
    $region22: #{tpu_custom_call.1} parent=5 // pred_check_branch
      %113 = sbr.rel (%p110) target = $region24
    $region23: #{tpu_custom_call.1} parent=5 // pred_region
      %s114 = ssub.s32 %s7, 1
      %s115 = smul.u32 4, %s17
      %p116 = scmp.lt.s32.totalorder %s16, 1
      %s117 = scalar_select %p116, %s16, 1
      %p118 = scmp.lt.s32.totalorder %s115, 3
      %s119 = scalar_select %p118, %s115, 3
      %s120 = smul.addr %s119, 24
      %s121 = smul.addr %s117, 96
      %s122 = sadd.s32 %s120, %s121
      %s123 = smul.addr %s122, 8
      %s124 = scalar_lea.vmem %s0, %s123
      %p125 = pneg %p47
      %p126 = pneg %p44
      %p127 = pneg %p75
      %p128 = pneg %p72
      %s129 = smul.u32 4, %s17
      %p130 = scmp.lt.s32.totalorder %s16, 1
      %s131 = scalar_select %p130, %s16, 1
      %p132 = scmp.lt.s32.totalorder %s129, 3
      %s133 = scalar_select %p132, %s129, 3
      %s134 = smul.addr %s133, 36
      %s135 = smul.addr %s131, 144
      %s136 = sadd.s32 %s134, %s135
      %s137 = smul.addr %s136, 8
      %s138 = scalar_lea.vmem %s1, %s137
      %s139 = smul.u32 4, %s17
      %p140 = scmp.lt.s32.totalorder %s16, 1
      %s141 = scalar_select %p140, %s16, 1
      %p142 = scmp.lt.s32.totalorder %s139, 3
      %s143 = scalar_select %p142, %s139, 3
      %s144 = smul.addr %s143, 24
      %s145 = smul.addr %s141, 96
      %s146 = sadd.s32 %s144, %s145
      %s147 = smul.addr %s146, 8
      %s148 = scalar_lea.vmem %s0, %s147
      %s149 = smul.u32 4, %s17
      %s150 = smul.u32 4, %s17
      %p151 = scmp.lt.s32.totalorder %s16, 1
      %s152 = scalar_select %p151, %s16, 1
      %p153 = scmp.lt.s32.totalorder %s150, 3
      %s154 = scalar_select %p153, %s150, 3
      %s155 = smul.addr %s154, 36
      %s156 = smul.addr %s152, 144
      %s157 = sadd.s32 %s155, %s156
      %s158 = smul.addr %s157, 8
      %s159 = scalar_lea.vmem %s1, %s158
      %s160 = smul.u32 4, %s17
      %161 = vst [vmem:[%s159] sm:$0xff] 0.0
      %162 = vst [vmem:[%s159 + $0x8] sm:$0xff] 0.0
      %163 = vst [vmem:[%s159 + $0x10] sm:$0xff] 0.0
      %164 = vst [vmem:[%s159 + $0x18] sm:$0xff] 0.0
      %165 = vst [vmem:[%s159 + $0x20] sm:$0xff] 0.0
      %166 = vst [vmem:[%s159 + $0x28] sm:$0xff] 0.0
      %167 = vst [vmem:[%s159 + $0x30] sm:$0xff] 0.0
      %168 = vst [vmem:[%s159 + $0x38] sm:$0xff] 0.0
      %vm169 = vcmask 457728
      %170 = vst.msk [vmem:[%s159 + $0x40] sm:$0xff] %vm169, 0.0
      %171 = vst [vmem:[%s159 + $0x48] sm:$0xff] 0.0
      %172 = vst [vmem:[%s159 + $0x50] sm:$0xff] 0.0
      %173 = vst [vmem:[%s159 + $0x58] sm:$0xff] 0.0
      %174 = vst [vmem:[%s159 + $0x60] sm:$0xff] 0.0
      %175 = vst [vmem:[%s159 + $0x68] sm:$0xff] 0.0
      %176 = vst [vmem:[%s159 + $0x70] sm:$0xff] 0.0
      %177 = vst [vmem:[%s159 + $0x78] sm:$0xff] 0.0
      %178 = vst [vmem:[%s159 + $0x80] sm:$0xff] 0.0
      %179 = vst.msk [vmem:[%s159 + $0x88] sm:$0xff] %vm169, 0.0
      %180 = vst [vmem:[%s159 + $0x90] sm:$0xff] 0.0
      %181 = vst [vmem:[%s159 + $0x98] sm:$0xff] 0.0
      %182 = vst [vmem:[%s159 + $0xa0] sm:$0xff] 0.0
      %183 = vst [vmem:[%s159 + $0xa8] sm:$0xff] 0.0
      %184 = vst [vmem:[%s159 + $0xb0] sm:$0xff] 0.0
      %185 = vst [vmem:[%s159 + $0xb8] sm:$0xff] 0.0
      %186 = vst [vmem:[%s159 + $0xc0] sm:$0xff] 0.0
      %187 = vst [vmem:[%s159 + $0xc8] sm:$0xff] 0.0
      %188 = vst.msk [vmem:[%s159 + $0xd0] sm:$0xff] %vm169, 0.0
      %189 = vst [vmem:[%s159 + $0xd8] sm:$0x3f] 0.0
      %190 = vst [vmem:[%s159 + $0xe0] sm:$0x3f] 0.0
      %191 = vst [vmem:[%s159 + $0xe8] sm:$0x3f] 0.0
      %192 = vst [vmem:[%s159 + $0xf0] sm:$0x3f] 0.0
      %193 = vst [vmem:[%s159 + $0xf8] sm:$0x3f] 0.0
      %194 = vst [vmem:[%s159 + $0x100] sm:$0x3f] 0.0
      %195 = vst [vmem:[%s159 + $0x108] sm:$0x3f] 0.0
      %196 = vst [vmem:[%s159 + $0x110] sm:$0x3f] 0.0
      %vm197 = vcmask 455680
      %198 = vst.msk [vmem:[%s159 + $0x118] sm:$0x3f] %vm197, 0.0
      %199 = vst [vmem:[%s159 + $0x120] sm:$0xff] 0.0
      %200 = vst [vmem:[%s159 + $0x128] sm:$0xff] 0.0
      %201 = vst [vmem:[%s159 + $0x130] sm:$0xff] 0.0
      %202 = vst [vmem:[%s159 + $0x138] sm:$0xff] 0.0
      %203 = vst [vmem:[%s159 + $0x140] sm:$0xff] 0.0
      %204 = vst [vmem:[%s159 + $0x148] sm:$0xff] 0.0
      %205 = vst [vmem:[%s159 + $0x150] sm:$0xff] 0.0
      %206 = vst [vmem:[%s159 + $0x158] sm:$0xff] 0.0
      %207 = vst.msk [vmem:[%s159 + $0x160] sm:$0xff] %vm169, 0.0
      %208 = vst [vmem:[%s159 + $0x168] sm:$0xff] 0.0
      %209 = vst [vmem:[%s159 + $0x170] sm:$0xff] 0.0
      %210 = vst [vmem:[%s159 + $0x178] sm:$0xff] 0.0
      %211 = vst [vmem:[%s159 + $0x180] sm:$0xff] 0.0
      %212 = vst [vmem:[%s159 + $0x188] sm:$0xff] 0.0
      %213 = vst [vmem:[%s159 + $0x190] sm:$0xff] 0.0
      %214 = vst [vmem:[%s159 + $0x198] sm:$0xff] 0.0
      %215 = vst [vmem:[%s159 + $0x1a0] sm:$0xff] 0.0
      %216 = vst.msk [vmem:[%s159 + $0x1a8] sm:$0xff] %vm169, 0.0
      %217 = vst [vmem:[%s159 + $0x1b0] sm:$0xff] 0.0
      %218 = vst [vmem:[%s159 + $0x1b8] sm:$0xff] 0.0
      %219 = vst [vmem:[%s159 + $0x1c0] sm:$0xff] 0.0
      %220 = vst [vmem:[%s159 + $0x1c8] sm:$0xff] 0.0
      %221 = vst [vmem:[%s159 + $0x1d0] sm:$0xff] 0.0
      %222 = vst [vmem:[%s159 + $0x1d8] sm:$0xff] 0.0
      %223 = vst [vmem:[%s159 + $0x1e0] sm:$0xff] 0.0
      %224 = vst [vmem:[%s159 + $0x1e8] sm:$0xff] 0.0
      %225 = vst.msk [vmem:[%s159 + $0x1f0] sm:$0xff] %vm169, 0.0
      %226 = vst [vmem:[%s159 + $0x1f8] sm:$0x3f] 0.0
      %227 = vst [vmem:[%s159 + $0x200] sm:$0x3f] 0.0
      %228 = vst [vmem:[%s159 + $0x208] sm:$0x3f] 0.0
      %229 = vst [vmem:[%s159 + $0x210] sm:$0x3f] 0.0
      %230 = vst [vmem:[%s159 + $0x218] sm:$0x3f] 0.0
      %231 = vst [vmem:[%s159 + $0x220] sm:$0x3f] 0.0
      %232 = vst [vmem:[%s159 + $0x228] sm:$0x3f] 0.0
      %233 = vst [vmem:[%s159 + $0x230] sm:$0x3f] 0.0
      %234 = vst.msk [vmem:[%s159 + $0x238] sm:$0x3f] %vm197, 0.0
      %235 = vst [vmem:[%s159 + $0x240] sm:$0xff] 0.0
      %236 = vst [vmem:[%s159 + $0x248] sm:$0xff] 0.0
      %237 = vst [vmem:[%s159 + $0x250] sm:$0xff] 0.0
      %238 = vst [vmem:[%s159 + $0x258] sm:$0xff] 0.0
      %239 = vst [vmem:[%s159 + $0x260] sm:$0xff] 0.0
      %240 = vst [vmem:[%s159 + $0x268] sm:$0xff] 0.0
      %241 = vst [vmem:[%s159 + $0x270] sm:$0xff] 0.0
      %242 = vst [vmem:[%s159 + $0x278] sm:$0xff] 0.0
      %243 = vst.msk [vmem:[%s159 + $0x280] sm:$0xff] %vm169, 0.0
      %244 = vst [vmem:[%s159 + $0x288] sm:$0xff] 0.0
      %245 = vst [vmem:[%s159 + $0x290] sm:$0xff] 0.0
      %246 = vst [vmem:[%s159 + $0x298] sm:$0xff] 0.0
      %247 = vst [vmem:[%s159 + $0x2a0] sm:$0xff] 0.0
      %248 = vst [vmem:[%s159 + $0x2a8] sm:$0xff] 0.0
      %249 = vst [vmem:[%s159 + $0x2b0] sm:$0xff] 0.0
      %250 = vst [vmem:[%s159 + $0x2b8] sm:$0xff] 0.0
      %251 = vst [vmem:[%s159 + $0x2c0] sm:$0xff] 0.0
      %252 = vst.msk [vmem:[%s159 + $0x2c8] sm:$0xff] %vm169, 0.0
      %253 = vst [vmem:[%s159 + $0x2d0] sm:$0xff] 0.0
      %254 = vst [vmem:[%s159 + $0x2d8] sm:$0xff] 0.0
      %255 = vst [vmem:[%s159 + $0x2e0] sm:$0xff] 0.0
      %256 = vst [vmem:[%s159 + $0x2e8] sm:$0xff] 0.0
      %257 = vst [vmem:[%s159 + $0x2f0] sm:$0xff] 0.0
      %258 = vst [vmem:[%s159 + $0x2f8] sm:$0xff] 0.0
      %259 = vst [vmem:[%s159 + $0x300] sm:$0xff] 0.0
      %260 = vst [vmem:[%s159 + $0x308] sm:$0xff] 0.0
      %261 = vst.msk [vmem:[%s159 + $0x310] sm:$0xff] %vm169, 0.0
      %262 = vst [vmem:[%s159 + $0x318] sm:$0x3f] 0.0
      %263 = vst [vmem:[%s159 + $0x320] sm:$0x3f] 0.0
      %264 = vst [vmem:[%s159 + $0x328] sm:$0x3f] 0.0
      %265 = vst [vmem:[%s159 + $0x330] sm:$0x3f] 0.0
      %266 = vst [vmem:[%s159 + $0x338] sm:$0x3f] 0.0
      %267 = vst [vmem:[%s159 + $0x340] sm:$0x3f] 0.0
      %268 = vst [vmem:[%s159 + $0x348] sm:$0x3f] 0.0
      %269 = vst [vmem:[%s159 + $0x350] sm:$0x3f] 0.0
      %270 = vst.msk [vmem:[%s159 + $0x358] sm:$0x3f] %vm197, 0.0
      %271 = vst [vmem:[%s159 + $0x360] sm:$0xff] 0.0
      %272 = vst [vmem:[%s159 + $0x368] sm:$0xff] 0.0
      %273 = vst [vmem:[%s159 + $0x370] sm:$0xff] 0.0
      %274 = vst [vmem:[%s159 + $0x378] sm:$0xff] 0.0
      %275 = vst [vmem:[%s159 + $0x380] sm:$0xff] 0.0
      %276 = vst [vmem:[%s159 + $0x388] sm:$0xff] 0.0
      %277 = vst [vmem:[%s159 + $0x390] sm:$0xff] 0.0
      %278 = vst [vmem:[%s159 + $0x398] sm:$0xff] 0.0
      %279 = vst.msk [vmem:[%s159 + $0x3a0] sm:$0xff] %vm169, 0.0
      %280 = vst [vmem:[%s159 + $0x3a8] sm:$0xff] 0.0
      %281 = vst [vmem:[%s159 + $0x3b0] sm:$0xff] 0.0
      %282 = vst [vmem:[%s159 + $0x3b8] sm:$0xff] 0.0
      %283 = vst [vmem:[%s159 + $0x3c0] sm:$0xff] 0.0
      %284 = vst [vmem:[%s159 + $0x3c8] sm:$0xff] 0.0
      %285 = vst [vmem:[%s159 + $0x3d0] sm:$0xff] 0.0
      %286 = vst [vmem:[%s159 + $0x3d8] sm:$0xff] 0.0
      %287 = vst [vmem:[%s159 + $0x3e0] sm:$0xff] 0.0
      %288 = vst.msk [vmem:[%s159 + $0x3e8] sm:$0xff] %vm169, 0.0
      %289 = vst [vmem:[%s159 + $0x3f0] sm:$0xff] 0.0
      %290 = vst [vmem:[%s159 + $0x3f8] sm:$0xff] 0.0
      %291 = vst [vmem:[%s159 + $0x400] sm:$0xff] 0.0
      %292 = vst [vmem:[%s159 + $0x408] sm:$0xff] 0.0
      %293 = vst [vmem:[%s159 + $0x410] sm:$0xff] 0.0
      %294 = vst [vmem:[%s159 + $0x418] sm:$0xff] 0.0
      %295 = vst [vmem:[%s159 + $0x420] sm:$0xff] 0.0
      %296 = vst [vmem:[%s159 + $0x428] sm:$0xff] 0.0
      %297 = vst.msk [vmem:[%s159 + $0x430] sm:$0xff] %vm169, 0.0
      %298 = vst [vmem:[%s159 + $0x438] sm:$0x3f] 0.0
      %299 = vst [vmem:[%s159 + $0x440] sm:$0x3f] 0.0
      %300 = vst [vmem:[%s159 + $0x448] sm:$0x3f] 0.0
      %301 = vst [vmem:[%s159 + $0x450] sm:$0x3f] 0.0
      %302 = vst [vmem:[%s159 + $0x458] sm:$0x3f] 0.0
      %303 = vst [vmem:[%s159 + $0x460] sm:$0x3f] 0.0
      %304 = vst [vmem:[%s159 + $0x468] sm:$0x3f] 0.0
      %305 = vst [vmem:[%s159 + $0x470] sm:$0x3f] 0.0
      %306 = vst.msk [vmem:[%s159 + $0x478] sm:$0x3f] %vm197, 0.0
      %v307 = vld [vmem:[%s148] sm:$0xff]
      %v308 = vld [vmem:[%s148 + $0x40] sm:$0xff]
      %v309 = vld [vmem:[%s148 + $0x80] sm:$0x7f]
      %v310 = vld [vmem:[%s148 + $0xc0] sm:$0xff]
      %v311 = vld [vmem:[%s148 + $0x100] sm:$0xff]
      %v312 = vld [vmem:[%s148 + $0x140] sm:$0x7f]
      %v313 = vld [vmem:[%s148 + $0x180] sm:$0xff]
      %v314 = vld [vmem:[%s148 + $0x1c0] sm:$0xff]
      %v315 = vld [vmem:[%s148 + $0x200] sm:$0x7f]
      %v316 = vld [vmem:[%s148 + $0x240] sm:$0xff]
      %v317 = vld [vmem:[%s148 + $0x280] sm:$0xff]
      %v318 = vld [vmem:[%s148 + $0x2c0] sm:$0x7f]
      %vm319 = vcmask 269312
      %320 = vst.msk [vmem:[%s159] sm:$0xff] %vm319, %v307
      %321 = vst.msk [vmem:[%s159 + $0x48] sm:$0xff] %vm319, %v308
      %vm322 = vcmask 268288
      %323 = vst.msk [vmem:[%s159 + $0x90] sm:$0x7f] %vm322, %v309
      %324 = vst.msk [vmem:[%s159 + $0x120] sm:$0xff] %vm319, %v310
      %325 = vst.msk [vmem:[%s159 + $0x168] sm:$0xff] %vm319, %v311
      %326 = vst.msk [vmem:[%s159 + $0x1b0] sm:$0x7f] %vm322, %v312
      %327 = vst.msk [vmem:[%s159 + $0x240] sm:$0xff] %vm319, %v313
      %328 = vst.msk [vmem:[%s159 + $0x288] sm:$0xff] %vm319, %v314
      %329 = vst.msk [vmem:[%s159 + $0x2d0] sm:$0x7f] %vm322, %v315
      %330 = vst.msk [vmem:[%s159 + $0x360] sm:$0xff] %vm319, %v316
      %331 = vst.msk [vmem:[%s159 + $0x3a8] sm:$0xff] %vm319, %v317
      %332 = vst.msk [vmem:[%s159 + $0x3f0] sm:$0x7f] %vm322, %v318
      %v333 = vld [vmem:[%s148] sm:$0xff]
      %v334 = vld [vmem:[%s148 + $0x40] sm:$0xff]
      %v335 = vld [vmem:[%s148 + $0x80] sm:$0x7f]
      %v336 = vld [vmem:[%s148 + $0xc0] sm:$0xff]
      %v337 = vld [vmem:[%s148 + $0x100] sm:$0xff]
      %v338 = vld [vmem:[%s148 + $0x140] sm:$0x7f]
      %v339 = vld [vmem:[%s148 + $0x180] sm:$0xff]
      %v340 = vld [vmem:[%s148 + $0x1c0] sm:$0xff]
      %v341 = vld [vmem:[%s148 + $0x200] sm:$0x7f]
      %v342 = vld [vmem:[%s148 + $0x240] sm:$0xff]
      %v343 = vld [vmem:[%s148 + $0x280] sm:$0xff]
      %v344 = vld [vmem:[%s148 + $0x2c0] sm:$0x7f]
      %357 = vrot.lane.b32.xlu0 %v333, 3
      %v358 = vpop.permute.xlu0 %357
      %359 = vrot.lane.b32.xlu0 %v334, 3
      %v360 = vpop.permute.xlu0 %359
      %361 = vrot.lane.b32.xlu0 %v335, 3
      %v362 = vpop.permute.xlu0 %361
      %363 = vrot.lane.b32.xlu0 %v336, 3
      %v364 = vpop.permute.xlu0 %363
      %365 = vrot.lane.b32.xlu0 %v337, 3
      %v366 = vpop.permute.xlu0 %365
      %367 = vrot.lane.b32.xlu0 %v338, 3
      %v368 = vpop.permute.xlu0 %367
      %369 = vrot.lane.b32.xlu0 %v339, 3
      %v370 = vpop.permute.xlu0 %369
      %371 = vrot.lane.b32.xlu0 %v340, 3
      %v372 = vpop.permute.xlu0 %371
      %373 = vrot.lane.b32.xlu0 %v341, 3
      %v374 = vpop.permute.xlu0 %373
      %375 = vrot.lane.b32.xlu0 %v342, 3
      %v376 = vpop.permute.xlu0 %375
      %377 = vrot.lane.b32.xlu0 %v343, 3
      %v378 = vpop.permute.xlu0 %377
      %379 = vrot.lane.b32.xlu0 %v344, 3
      %v380 = vpop.permute.xlu0 %379
      %vm393 = vcmask 564512
      %394 = vst.msk [vmem:[%s159] sm:$0xff] %vm393, %v358
      %395 = vst.msk [vmem:[%s159 + $0x48] sm:$0xff] %vm393, %v360
      %vm396 = vcmask 563488
      %397 = vst.msk [vmem:[%s159 + $0x90] sm:$0x7f] %vm396, %v362
      %398 = vst.msk [vmem:[%s159 + $0x120] sm:$0xff] %vm393, %v364
      %399 = vst.msk [vmem:[%s159 + $0x168] sm:$0xff] %vm393, %v366
      %400 = vst.msk [vmem:[%s159 + $0x1b0] sm:$0x7f] %vm396, %v368
      %401 = vst.msk [vmem:[%s159 + $0x240] sm:$0xff] %vm393, %v370
      %402 = vst.msk [vmem:[%s159 + $0x288] sm:$0xff] %vm393, %v372
      %403 = vst.msk [vmem:[%s159 + $0x2d0] sm:$0x7f] %vm396, %v374
      %404 = vst.msk [vmem:[%s159 + $0x360] sm:$0xff] %vm393, %v376
      %405 = vst.msk [vmem:[%s159 + $0x3a8] sm:$0xff] %vm393, %v378
      %406 = vst.msk [vmem:[%s159 + $0x3f0] sm:$0x7f] %vm396, %v380
      %v407 = vld [vmem:[%s148] sm:$0xff]
      %v408 = vld [vmem:[%s148 + $0x40] sm:$0xff]
      %v409 = vld [vmem:[%s148 + $0x80] sm:$0x7f]
      %v410 = vld [vmem:[%s148 + $0xc0] sm:$0xff]
      %v411 = vld [vmem:[%s148 + $0x100] sm:$0xff]
      %v412 = vld [vmem:[%s148 + $0x140] sm:$0x7f]
      %v413 = vld [vmem:[%s148 + $0x180] sm:$0xff]
      %v414 = vld [vmem:[%s148 + $0x1c0] sm:$0xff]
      %v415 = vld [vmem:[%s148 + $0x200] sm:$0x7f]
      %v416 = vld [vmem:[%s148 + $0x240] sm:$0xff]
      %v417 = vld [vmem:[%s148 + $0x280] sm:$0xff]
      %v418 = vld [vmem:[%s148 + $0x2c0] sm:$0x7f]
      %431 = vrot.lane.b32.xlu0 %v407, 6
      %v432 = vpop.permute.xlu0 %431
      %433 = vrot.lane.b32.xlu0 %v408, 6
      %v434 = vpop.permute.xlu0 %433
      %435 = vrot.lane.b32.xlu0 %v409, 6
      %v436 = vpop.permute.xlu0 %435
      %437 = vrot.lane.b32.xlu0 %v410, 6
      %v438 = vpop.permute.xlu0 %437
      %439 = vrot.lane.b32.xlu0 %v411, 6
      %v440 = vpop.permute.xlu0 %439
      %441 = vrot.lane.b32.xlu0 %v412, 6
      %v442 = vpop.permute.xlu0 %441
      %443 = vrot.lane.b32.xlu0 %v413, 6
      %v444 = vpop.permute.xlu0 %443
      %445 = vrot.lane.b32.xlu0 %v414, 6
      %v446 = vpop.permute.xlu0 %445
      %447 = vrot.lane.b32.xlu0 %v415, 6
      %v448 = vpop.permute.xlu0 %447
      %449 = vrot.lane.b32.xlu0 %v416, 6
      %v450 = vpop.permute.xlu0 %449
      %451 = vrot.lane.b32.xlu0 %v417, 6
      %v452 = vpop.permute.xlu0 %451
      %453 = vrot.lane.b32.xlu0 %v418, 6
      %v454 = vpop.permute.xlu0 %453
      %vm467 = vcmask 859712
      %468 = vst.msk [vmem:[%s159] sm:$0xff] %vm467, %v432
      %469 = vst.msk [vmem:[%s159 + $0x48] sm:$0xff] %vm467, %v434
      %vm470 = vcmask 858688
      %471 = vst.msk [vmem:[%s159 + $0x90] sm:$0x7f] %vm470, %v436
      %472 = vst.msk [vmem:[%s159 + $0x120] sm:$0xff] %vm467, %v438
      %473 = vst.msk [vmem:[%s159 + $0x168] sm:$0xff] %vm467, %v440
      %474 = vst.msk [vmem:[%s159 + $0x1b0] sm:$0x7f] %vm470, %v442
      %475 = vst.msk [vmem:[%s159 + $0x240] sm:$0xff] %vm467, %v444
      %476 = vst.msk [vmem:[%s159 + $0x288] sm:$0xff] %vm467, %v446
      %477 = vst.msk [vmem:[%s159 + $0x2d0] sm:$0x7f] %vm470, %v448
      %478 = vst.msk [vmem:[%s159 + $0x360] sm:$0xff] %vm467, %v450
      %479 = vst.msk [vmem:[%s159 + $0x3a8] sm:$0xff] %vm467, %v452
      %480 = vst.msk [vmem:[%s159 + $0x3f0] sm:$0x7f] %vm470, %v454
      %v481 = vld [vmem:[%s148] sm:$0xff]
      %v482 = vld [vmem:[%s148 + $0x8] sm:$0xff]
      %v483 = vld [vmem:[%s148 + $0x40] sm:$0xff]
      %v484 = vld [vmem:[%s148 + $0x48] sm:$0xff]
      %v485 = vld [vmem:[%s148 + $0x80] sm:$0x7f]
      %v486 = vld [vmem:[%s148 + $0x88] sm:$0x7f]
      %v487 = vld [vmem:[%s148 + $0xc0] sm:$0xff]
      %v488 = vld [vmem:[%s148 + $0xc8] sm:$0xff]
      %v489 = vld [vmem:[%s148 + $0x100] sm:$0xff]
      %v490 = vld [vmem:[%s148 + $0x108] sm:$0xff]
      %v491 = vld [vmem:[%s148 + $0x140] sm:$0x7f]
      %v492 = vld [vmem:[%s148 + $0x148] sm:$0x7f]
      %v493 = vld [vmem:[%s148 + $0x180] sm:$0xff]
      %v494 = vld [vmem:[%s148 + $0x188] sm:$0xff]
      %v495 = vld [vmem:[%s148 + $0x1c0] sm:$0xff]
      %v496 = vld [vmem:[%s148 + $0x1c8] sm:$0xff]
      %v497 = vld [vmem:[%s148 + $0x200] sm:$0x7f]
      %v498 = vld [vmem:[%s148 + $0x208] sm:$0x7f]
      %v499 = vld [vmem:[%s148 + $0x240] sm:$0xff]
      %v500 = vld [vmem:[%s148 + $0x248] sm:$0xff]
      %v501 = vld [vmem:[%s148 + $0x280] sm:$0xff]
      %v502 = vld [vmem:[%s148 + $0x288] sm:$0xff]
      %v503 = vld [vmem:[%s148 + $0x2c0] sm:$0x7f]
      %v504 = vld [vmem:[%s148 + $0x2c8] sm:$0x7f]
      %529 = vrot.lane.b32.xlu0 %v481, 9
      %v530 = vpop.permute.xlu0 %529
      %531 = vrot.lane.b32.xlu0 %v482, 9
      %v532 = vpop.permute.xlu0 %531
      %533 = vrot.lane.b32.xlu0 %v483, 9
      %v534 = vpop.permute.xlu0 %533
      %535 = vrot.lane.b32.xlu0 %v484, 9
      %v536 = vpop.permute.xlu0 %535
      %537 = vrot.lane.b32.xlu0 %v485, 9
      %v538 = vpop.permute.xlu0 %537
      %539 = vrot.lane.b32.xlu0 %v486, 9
      %v540 = vpop.permute.xlu0 %539
      %541 = vrot.lane.b32.xlu0 %v487, 9
      %v542 = vpop.permute.xlu0 %541
      %543 = vrot.lane.b32.xlu0 %v488, 9
      %v544 = vpop.permute.xlu0 %543
      %545 = vrot.lane.b32.xlu0 %v489, 9
      %v546 = vpop.permute.xlu0 %545
      %547 = vrot.lane.b32.xlu0 %v490, 9
      %v548 = vpop.permute.xlu0 %547
      %549 = vrot.lane.b32.xlu0 %v491, 9
      %v550 = vpop.permute.xlu0 %549
      %551 = vrot.lane.b32.xlu0 %v492, 9
      %v552 = vpop.permute.xlu0 %551
      %553 = vrot.lane.b32.xlu0 %v493, 9
      %v554 = vpop.permute.xlu0 %553
      %555 = vrot.lane.b32.xlu0 %v494, 9
      %v556 = vpop.permute.xlu0 %555
      %557 = vrot.lane.b32.xlu0 %v495, 9
      %v558 = vpop.permute.xlu0 %557
      %559 = vrot.lane.b32.xlu0 %v496, 9
      %v560 = vpop.permute.xlu0 %559
      %561 = vrot.lane.b32.xlu0 %v497, 9
      %v562 = vpop.permute.xlu0 %561
      %563 = vrot.lane.b32.xlu0 %v498, 9
      %v564 = vpop.permute.xlu0 %563
      %565 = vrot.lane.b32.xlu0 %v499, 9
      %v566 = vpop.permute.xlu0 %565
      %567 = vrot.lane.b32.xlu0 %v500, 9
      %v568 = vpop.permute.xlu0 %567
      %569 = vrot.lane.b32.xlu0 %v501, 9
      %v570 = vpop.permute.xlu0 %569
      %571 = vrot.lane.b32.xlu0 %v502, 9
      %v572 = vpop.permute.xlu0 %571
      %573 = vrot.lane.b32.xlu0 %v503, 9
      %v574 = vpop.permute.xlu0 %573
      %575 = vrot.lane.b32.xlu0 %v504, 9
      %v576 = vpop.permute.xlu0 %575
      %vm577 = vcmask 72704
      %v578 = vsel %vm577, %v530, %v532
      %v579 = vsel %vm577, %v534, %v536
      %v580 = vsel %vm577, %v538, %v540
      %v581 = vsel %vm577, %v542, %v544
      %v582 = vsel %vm577, %v546, %v548
      %v583 = vsel %vm577, %v550, %v552
      %v584 = vsel %vm577, %v554, %v556
      %v585 = vsel %vm577, %v558, %v560
      %v586 = vsel %vm577, %v562, %v564
      %v587 = vsel %vm577, %v566, %v568
      %v588 = vsel %vm577, %v570, %v572
      %v589 = vsel %vm577, %v574, %v576
      %vm614 = vcmask 1048416
      %615 = vst.msk [vmem:[%s159] sm:$0xff] %vm614, %v530
      %vm616 = vcmask 105472
      %617 = vst.msk [vmem:[%s159 + $0x8] sm:$0xff] %vm616, %v578
      %618 = vst.msk [vmem:[%s159 + $0x48] sm:$0xff] %vm614, %v534
      %619 = vst.msk [vmem:[%s159 + $0x50] sm:$0xff] %vm616, %v579
      %vm620 = vcmask 1047392
      %621 = vst.msk [vmem:[%s159 + $0x90] sm:$0x7f] %vm620, %v538
      %vm622 = vcmask 104448
      %623 = vst.msk [vmem:[%s159 + $0x98] sm:$0x7f] %vm622, %v580
      %624 = vst.msk [vmem:[%s159 + $0x120] sm:$0xff] %vm614, %v542
      %625 = vst.msk [vmem:[%s159 + $0x128] sm:$0xff] %vm616, %v581
      %626 = vst.msk [vmem:[%s159 + $0x168] sm:$0xff] %vm614, %v546
      %627 = vst.msk [vmem:[%s159 + $0x170] sm:$0xff] %vm616, %v582
      %628 = vst.msk [vmem:[%s159 + $0x1b0] sm:$0x7f] %vm620, %v550
      %629 = vst.msk [vmem:[%s159 + $0x1b8] sm:$0x7f] %vm622, %v583
      %630 = vst.msk [vmem:[%s159 + $0x240] sm:$0xff] %vm614, %v554
      %631 = vst.msk [vmem:[%s159 + $0x248] sm:$0xff] %vm616, %v584
      %632 = vst.msk [vmem:[%s159 + $0x288] sm:$0xff] %vm614, %v558
      %633 = vst.msk [vmem:[%s159 + $0x290] sm:$0xff] %vm616, %v585
      %634 = vst.msk [vmem:[%s159 + $0x2d0] sm:$0x7f] %vm620, %v562
      %635 = vst.msk [vmem:[%s159 + $0x2d8] sm:$0x7f] %vm622, %v586
      %636 = vst.msk [vmem:[%s159 + $0x360] sm:$0xff] %vm614, %v566
      %637 = vst.msk [vmem:[%s159 + $0x368] sm:$0xff] %vm616, %v587
      %638 = vst.msk [vmem:[%s159 + $0x3a8] sm:$0xff] %vm614, %v570
      %639 = vst.msk [vmem:[%s159 + $0x3b0] sm:$0xff] %vm616, %v588
      %640 = vst.msk [vmem:[%s159 + $0x3f0] sm:$0x7f] %vm620, %v574
      %641 = vst.msk [vmem:[%s159 + $0x3f8] sm:$0x7f] %vm622, %v589
      %v642 = vld [vmem:[%s148 + $0x8] sm:$0xff]
      %v643 = vld [vmem:[%s148 + $0x48] sm:$0xff]
      %v644 = vld [vmem:[%s148 + $0x88] sm:$0x7f]
      %v645 = vld [vmem:[%s148 + $0xc8] sm:$0xff]
      %v646 = vld [vmem:[%s148 + $0x108] sm:$0xff]
      %v647 = vld [vmem:[%s148 + $0x148] sm:$0x7f]
      %v648 = vld [vmem:[%s148 + $0x188] sm:$0xff]
      %v649 = vld [vmem:[%s148 + $0x1c8] sm:$0xff]
      %v650 = vld [vmem:[%s148 + $0x208] sm:$0x7f]
      %v651 = vld [vmem:[%s148 + $0x248] sm:$0xff]
      %v652 = vld [vmem:[%s148 + $0x288] sm:$0xff]
      %v653 = vld [vmem:[%s148 + $0x2c8] sm:$0x7f]
      %666 = vrot.lane.b32.xlu0 %v642, 12
      %v667 = vpop.permute.xlu0 %666
      %668 = vrot.lane.b32.xlu0 %v643, 12
      %v669 = vpop.permute.xlu0 %668
      %670 = vrot.lane.b32.xlu0 %v644, 12
      %v671 = vpop.permute.xlu0 %670
      %672 = vrot.lane.b32.xlu0 %v645, 12
      %v673 = vpop.permute.xlu0 %672
      %674 = vrot.lane.b32.xlu0 %v646, 12
      %v675 = vpop.permute.xlu0 %674
      %676 = vrot.lane.b32.xlu0 %v647, 12
      %v677 = vpop.permute.xlu0 %676
      %678 = vrot.lane.b32.xlu0 %v648, 12
      %v679 = vpop.permute.xlu0 %678
      %680 = vrot.lane.b32.xlu0 %v649, 12
      %v681 = vpop.permute.xlu0 %680
      %682 = vrot.lane.b32.xlu0 %v650, 12
      %v683 = vpop.permute.xlu0 %682
      %684 = vrot.lane.b32.xlu0 %v651, 12
      %v685 = vpop.permute.xlu0 %684
      %686 = vrot.lane.b32.xlu0 %v652, 12
      %v687 = vpop.permute.xlu0 %686
      %688 = vrot.lane.b32.xlu0 %v653, 12
      %v689 = vpop.permute.xlu0 %688
      %vm702 = vcmask 400512
      %703 = vst.msk [vmem:[%s159 + $0x8] sm:$0xff] %vm702, %v667
      %704 = vst.msk [vmem:[%s159 + $0x50] sm:$0xff] %vm702, %v669
      %vm705 = vcmask 399488
      %706 = vst.msk [vmem:[%s159 + $0x98] sm:$0x7f] %vm705, %v671
      %707 = vst.msk [vmem:[%s159 + $0x128] sm:$0xff] %vm702, %v673
      %708 = vst.msk [vmem:[%s159 + $0x170] sm:$0xff] %vm702, %v675
      %709 = vst.msk [vmem:[%s159 + $0x1b8] sm:$0x7f] %vm705, %v677
      %710 = vst.msk [vmem:[%s159 + $0x248] sm:$0xff] %vm702, %v679
      %711 = vst.msk [vmem:[%s159 + $0x290] sm:$0xff] %vm702, %v681
      %712 = vst.msk [vmem:[%s159 + $0x2d8] sm:$0x7f] %vm705, %v683
      %713 = vst.msk [vmem:[%s159 + $0x368] sm:$0xff] %vm702, %v685
      %714 = vst.msk [vmem:[%s159 + $0x3b0] sm:$0xff] %vm702, %v687
      %715 = vst.msk [vmem:[%s159 + $0x3f8] sm:$0x7f] %vm705, %v689
      %v716 = vld [vmem:[%s148 + $0x8] sm:$0xff]
      %v717 = vld [vmem:[%s148 + $0x48] sm:$0xff]
      %v718 = vld [vmem:[%s148 + $0x88] sm:$0x7f]
      %v719 = vld [vmem:[%s148 + $0xc8] sm:$0xff]
      %v720 = vld [vmem:[%s148 + $0x108] sm:$0xff]
      %v721 = vld [vmem:[%s148 + $0x148] sm:$0x7f]
      %v722 = vld [vmem:[%s148 + $0x188] sm:$0xff]
      %v723 = vld [vmem:[%s148 + $0x1c8] sm:$0xff]
      %v724 = vld [vmem:[%s148 + $0x208] sm:$0x7f]
      %v725 = vld [vmem:[%s148 + $0x248] sm:$0xff]
      %v726 = vld [vmem:[%s148 + $0x288] sm:$0xff]
      %v727 = vld [vmem:[%s148 + $0x2c8] sm:$0x7f]
      %740 = vrot.lane.b32.xlu0 %v716, 15
      %v741 = vpop.permute.xlu0 %740
      %742 = vrot.lane.b32.xlu0 %v717, 15
      %v743 = vpop.permute.xlu0 %742
      %744 = vrot.lane.b32.xlu0 %v718, 15
      %v745 = vpop.permute.xlu0 %744
      %746 = vrot.lane.b32.xlu0 %v719, 15
      %v747 = vpop.permute.xlu0 %746
      %748 = vrot.lane.b32.xlu0 %v720, 15
      %v749 = vpop.permute.xlu0 %748
      %750 = vrot.lane.b32.xlu0 %v721, 15
      %v751 = vpop.permute.xlu0 %750
      %752 = vrot.lane.b32.xlu0 %v722, 15
      %v753 = vpop.permute.xlu0 %752
      %754 = vrot.lane.b32.xlu0 %v723, 15
      %v755 = vpop.permute.xlu0 %754
      %756 = vrot.lane.b32.xlu0 %v724, 15
      %v757 = vpop.permute.xlu0 %756
      %758 = vrot.lane.b32.xlu0 %v725, 15
      %v759 = vpop.permute.xlu0 %758
      %760 = vrot.lane.b32.xlu0 %v726, 15
      %v761 = vpop.permute.xlu0 %760
      %762 = vrot.lane.b32.xlu0 %v727, 15
      %v763 = vpop.permute.xlu0 %762
      %vm776 = vcmask 695712
      %777 = vst.msk [vmem:[%s159 + $0x8] sm:$0xff] %vm776, %v741
      %778 = vst.msk [vmem:[%s159 + $0x50] sm:$0xff] %vm776, %v743
      %vm779 = vcmask 694688
      %780 = vst.msk [vmem:[%s159 + $0x98] sm:$0x7f] %vm779, %v745
      %781 = vst.msk [vmem:[%s159 + $0x128] sm:$0xff] %vm776, %v747
      %782 = vst.msk [vmem:[%s159 + $0x170] sm:$0xff] %vm776, %v749
      %783 = vst.msk [vmem:[%s159 + $0x1b8] sm:$0x7f] %vm779, %v751
      %784 = vst.msk [vmem:[%s159 + $0x248] sm:$0xff] %vm776, %v753
      %785 = vst.msk [vmem:[%s159 + $0x290] sm:$0xff] %vm776, %v755
      %786 = vst.msk [vmem:[%s159 + $0x2d8] sm:$0x7f] %vm779, %v757
      %787 = vst.msk [vmem:[%s159 + $0x368] sm:$0xff] %vm776, %v759
      %788 = vst.msk [vmem:[%s159 + $0x3b0] sm:$0xff] %vm776, %v761
      %789 = vst.msk [vmem:[%s159 + $0x3f8] sm:$0x7f] %vm779, %v763
      %v790 = vld [vmem:[%s148 + $0x8] sm:$0xff]
      %v791 = vld [vmem:[%s148 + $0x48] sm:$0xff]
      %v792 = vld [vmem:[%s148 + $0x88] sm:$0x7f]
      %v793 = vld [vmem:[%s148 + $0xc8] sm:$0xff]
      %v794 = vld [vmem:[%s148 + $0x108] sm:$0xff]
      %v795 = vld [vmem:[%s148 + $0x148] sm:$0x7f]
      %v796 = vld [vmem:[%s148 + $0x188] sm:$0xff]
      %v797 = vld [vmem:[%s148 + $0x1c8] sm:$0xff]
      %v798 = vld [vmem:[%s148 + $0x208] sm:$0x7f]
      %v799 = vld [vmem:[%s148 + $0x248] sm:$0xff]
      %v800 = vld [vmem:[%s148 + $0x288] sm:$0xff]
      %v801 = vld [vmem:[%s148 + $0x2c8] sm:$0x7f]
      %814 = vrot.lane.b32.xlu0 %v790, 18
      %v815 = vpop.permute.xlu0 %814
      %816 = vrot.lane.b32.xlu0 %v791, 18
      %v817 = vpop.permute.xlu0 %816
      %818 = vrot.lane.b32.xlu0 %v792, 18
      %v819 = vpop.permute.xlu0 %818
      %820 = vrot.lane.b32.xlu0 %v793, 18
      %v821 = vpop.permute.xlu0 %820
      %822 = vrot.lane.b32.xlu0 %v794, 18
      %v823 = vpop.permute.xlu0 %822
      %824 = vrot.lane.b32.xlu0 %v795, 18
      %v825 = vpop.permute.xlu0 %824
      %826 = vrot.lane.b32.xlu0 %v796, 18
      %v827 = vpop.permute.xlu0 %826
      %828 = vrot.lane.b32.xlu0 %v797, 18
      %v829 = vpop.permute.xlu0 %828
      %830 = vrot.lane.b32.xlu0 %v798, 18
      %v831 = vpop.permute.xlu0 %830
      %832 = vrot.lane.b32.xlu0 %v799, 18
      %v833 = vpop.permute.xlu0 %832
      %834 = vrot.lane.b32.xlu0 %v800, 18
      %v835 = vpop.permute.xlu0 %834
      %836 = vrot.lane.b32.xlu0 %v801, 18
      %v837 = vpop.permute.xlu0 %836
      %vm850 = vcmask 990912
      %851 = vst.msk [vmem:[%s159 + $0x8] sm:$0xff] %vm850, %v815
      %852 = vst.msk [vmem:[%s159 + $0x50] sm:$0xff] %vm850, %v817
      %vm853 = vcmask 989888
      %854 = vst.msk [vmem:[%s159 + $0x98] sm:$0x7f] %vm853, %v819
      %855 = vst.msk [vmem:[%s159 + $0x128] sm:$0xff] %vm850, %v821
      %856 = vst.msk [vmem:[%s159 + $0x170] sm:$0xff] %vm850, %v823
      %857 = vst.msk [vmem:[%s159 + $0x1b8] sm:$0x7f] %vm853, %v825
      %858 = vst.msk [vmem:[%s159 + $0x248] sm:$0xff] %vm850, %v827
      %859 = vst.msk [vmem:[%s159 + $0x290] sm:$0xff] %vm850, %v829
      %860 = vst.msk [vmem:[%s159 + $0x2d8] sm:$0x7f] %vm853, %v831
      %861 = vst.msk [vmem:[%s159 + $0x368] sm:$0xff] %vm850, %v833
      %862 = vst.msk [vmem:[%s159 + $0x3b0] sm:$0xff] %vm850, %v835
      %863 = vst.msk [vmem:[%s159 + $0x3f8] sm:$0x7f] %vm853, %v837
      %v864 = vld [vmem:[%s148 + $0x8] sm:$0xff]
      %v865 = vld [vmem:[%s148 + $0x10] sm:$0xff]
      %v866 = vld [vmem:[%s148 + $0x48] sm:$0xff]
      %v867 = vld [vmem:[%s148 + $0x50] sm:$0xff]
      %v868 = vld [vmem:[%s148 + $0x88] sm:$0x7f]
      %v869 = vld [vmem:[%s148 + $0x90] sm:$0x7f]
      %v870 = vld [vmem:[%s148 + $0xc8] sm:$0xff]
      %v871 = vld [vmem:[%s148 + $0xd0] sm:$0xff]
      %v872 = vld [vmem:[%s148 + $0x108] sm:$0xff]
      %v873 = vld [vmem:[%s148 + $0x110] sm:$0xff]
      %v874 = vld [vmem:[%s148 + $0x148] sm:$0x7f]
      %v875 = vld [vmem:[%s148 + $0x150] sm:$0x7f]
      %v876 = vld [vmem:[%s148 + $0x188] sm:$0xff]
      %v877 = vld [vmem:[%s148 + $0x190] sm:$0xff]
      %v878 = vld [vmem:[%s148 + $0x1c8] sm:$0xff]
      %v879 = vld [vmem:[%s148 + $0x1d0] sm:$0xff]
      %v880 = vld [vmem:[%s148 + $0x208] sm:$0x7f]
      %v881 = vld [vmem:[%s148 + $0x210] sm:$0x7f]
      %v882 = vld [vmem:[%s148 + $0x248] sm:$0xff]
      %v883 = vld [vmem:[%s148 + $0x250] sm:$0xff]
      %v884 = vld [vmem:[%s148 + $0x288] sm:$0xff]
      %v885 = vld [vmem:[%s148 + $0x290] sm:$0xff]
      %v886 = vld [vmem:[%s148 + $0x2c8] sm:$0x7f]
      %v887 = vld [vmem:[%s148 + $0x2d0] sm:$0x7f]
      %912 = vrot.lane.b32.xlu0 %v864, 21
      %v913 = vpop.permute.xlu0 %912
      %914 = vrot.lane.b32.xlu0 %v865, 21
      %v915 = vpop.permute.xlu0 %914
      %916 = vrot.lane.b32.xlu0 %v866, 21
      %v917 = vpop.permute.xlu0 %916
      %918 = vrot.lane.b32.xlu0 %v867, 21
      %v919 = vpop.permute.xlu0 %918
      %920 = vrot.lane.b32.xlu0 %v868, 21
      %v921 = vpop.permute.xlu0 %920
      %922 = vrot.lane.b32.xlu0 %v869, 21
      %v923 = vpop.permute.xlu0 %922
      %924 = vrot.lane.b32.xlu0 %v870, 21
      %v925 = vpop.permute.xlu0 %924
      %926 = vrot.lane.b32.xlu0 %v871, 21
      %v927 = vpop.permute.xlu0 %926
      %928 = vrot.lane.b32.xlu0 %v872, 21
      %v929 = vpop.permute.xlu0 %928
      %930 = vrot.lane.b32.xlu0 %v873, 21
      %v931 = vpop.permute.xlu0 %930
      %932 = vrot.lane.b32.xlu0 %v874, 21
      %v933 = vpop.permute.xlu0 %932
      %934 = vrot.lane.b32.xlu0 %v875, 21
      %v935 = vpop.permute.xlu0 %934
      %936 = vrot.lane.b32.xlu0 %v876, 21
      %v937 = vpop.permute.xlu0 %936
      %938 = vrot.lane.b32.xlu0 %v877, 21
      %v939 = vpop.permute.xlu0 %938
      %940 = vrot.lane.b32.xlu0 %v878, 21
      %v941 = vpop.permute.xlu0 %940
      %942 = vrot.lane.b32.xlu0 %v879, 21
      %v943 = vpop.permute.xlu0 %942
      %944 = vrot.lane.b32.xlu0 %v880, 21
      %v945 = vpop.permute.xlu0 %944
      %946 = vrot.lane.b32.xlu0 %v881, 21
      %v947 = vpop.permute.xlu0 %946
      %948 = vrot.lane.b32.xlu0 %v882, 21
      %v949 = vpop.permute.xlu0 %948
      %950 = vrot.lane.b32.xlu0 %v883, 21
      %v951 = vpop.permute.xlu0 %950
      %952 = vrot.lane.b32.xlu0 %v884, 21
      %v953 = vpop.permute.xlu0 %952
      %954 = vrot.lane.b32.xlu0 %v885, 21
      %v955 = vpop.permute.xlu0 %954
      %956 = vrot.lane.b32.xlu0 %v886, 21
      %v957 = vpop.permute.xlu0 %956
      %958 = vrot.lane.b32.xlu0 %v887, 21
      %v959 = vpop.permute.xlu0 %958
      %vm960 = vcmask 171008
      %v961 = vsel %vm960, %v913, %v915
      %v962 = vsel %vm960, %v917, %v919
      %v963 = vsel %vm960, %v921, %v923
      %v964 = vsel %vm960, %v925, %v927
      %v965 = vsel %vm960, %v929, %v931
      %v966 = vsel %vm960, %v933, %v935
      %v967 = vsel %vm960, %v937, %v939
      %v968 = vsel %vm960, %v941, %v943
      %v969 = vsel %vm960, %v945, %v947
      %v970 = vsel %vm960, %v949, %v951
      %v971 = vsel %vm960, %v953, %v955
      %v972 = vsel %vm960, %v957, %v959
      %vm997 = vcmask 1048544
      %998 = vst.msk [vmem:[%s159 + $0x8] sm:$0xff] %vm997, %v913
      %vm999 = vcmask 236544
      %1000 = vst.msk [vmem:[%s159 + $0x10] sm:$0xff] %vm999, %v961
      %1001 = vst.msk [vmem:[%s159 + $0x50] sm:$0xff] %vm997, %v917
      %1002 = vst.msk [vmem:[%s159 + $0x58] sm:$0xff] %vm999, %v962
      %vm1003 = vcmask 1047520
      %1004 = vst.msk [vmem:[%s159 + $0x98] sm:$0x7f] %vm1003, %v921
      %vm1005 = vcmask 235520
      %1006 = vst.msk [vmem:[%s159 + $0xa0] sm:$0x7f] %vm1005, %v963
      %1007 = vst.msk [vmem:[%s159 + $0x128] sm:$0xff] %vm997, %v925
      %1008 = vst.msk [vmem:[%s159 + $0x130] sm:$0xff] %vm999, %v964
      %1009 = vst.msk [vmem:[%s159 + $0x170] sm:$0xff] %vm997, %v929
      %1010 = vst.msk [vmem:[%s159 + $0x178] sm:$0xff] %vm999, %v965
      %1011 = vst.msk [vmem:[%s159 + $0x1b8] sm:$0x7f] %vm1003, %v933
      %1012 = vst.msk [vmem:[%s159 + $0x1c0] sm:$0x7f] %vm1005, %v966
      %1013 = vst.msk [vmem:[%s159 + $0x248] sm:$0xff] %vm997, %v937
      %1014 = vst.msk [vmem:[%s159 + $0x250] sm:$0xff] %vm999, %v967
      %1015 = vst.msk [vmem:[%s159 + $0x290] sm:$0xff] %vm997, %v941
      %1016 = vst.msk [vmem:[%s159 + $0x298] sm:$0xff] %vm999, %v968
      %1017 = vst.msk [vmem:[%s159 + $0x2d8] sm:$0x7f] %vm1003, %v945
      %1018 = vst.msk [vmem:[%s159 + $0x2e0] sm:$0x7f] %vm1005, %v969
      %1019 = vst.msk [vmem:[%s159 + $0x368] sm:$0xff] %vm997, %v949
      %1020 = vst.msk [vmem:[%s159 + $0x370] sm:$0xff] %vm999, %v970
      %1021 = vst.msk [vmem:[%s159 + $0x3b0] sm:$0xff] %vm997, %v953
      %1022 = vst.msk [vmem:[%s159 + $0x3b8] sm:$0xff] %vm999, %v971
      %1023 = vst.msk [vmem:[%s159 + $0x3f8] sm:$0x7f] %vm1003, %v957
      %1024 = vst.msk [vmem:[%s159 + $0x400] sm:$0x7f] %vm1005, %v972
      %v1025 = vld [vmem:[%s148 + $0x10] sm:$0xff]
      %v1026 = vld [vmem:[%s148 + $0x50] sm:$0xff]
      %v1027 = vld [vmem:[%s148 + $0x90] sm:$0x7f]
      %v1028 = vld [vmem:[%s148 + $0xd0] sm:$0xff]
      %v1029 = vld [vmem:[%s148 + $0x110] sm:$0xff]
      %v1030 = vld [vmem:[%s148 + $0x150] sm:$0x7f]
      %v1031 = vld [vmem:[%s148 + $0x190] sm:$0xff]
      %v1032 = vld [vmem:[%s148 + $0x1d0] sm:$0xff]
      %v1033 = vld [vmem:[%s148 + $0x210] sm:$0x7f]
      %v1034 = vld [vmem:[%s148 + $0x250] sm:$0xff]
      %v1035 = vld [vmem:[%s148 + $0x290] sm:$0xff]
      %v1036 = vld [vmem:[%s148 + $0x2d0] sm:$0x7f]
      %1049 = vrot.lane.b32.xlu0 %v1025, 24
      %v1050 = vpop.permute.xlu0 %1049
      %1051 = vrot.lane.b32.xlu0 %v1026, 24
      %v1052 = vpop.permute.xlu0 %1051
      %1053 = vrot.lane.b32.xlu0 %v1027, 24
      %v1054 = vpop.permute.xlu0 %1053
      %1055 = vrot.lane.b32.xlu0 %v1028, 24
      %v1056 = vpop.permute.xlu0 %1055
      %1057 = vrot.lane.b32.xlu0 %v1029, 24
      %v1058 = vpop.permute.xlu0 %1057
      %1059 = vrot.lane.b32.xlu0 %v1030, 24
      %v1060 = vpop.permute.xlu0 %1059
      %1061 = vrot.lane.b32.xlu0 %v1031, 24
      %v1062 = vpop.permute.xlu0 %1061
      %1063 = vrot.lane.b32.xlu0 %v1032, 24
      %v1064 = vpop.permute.xlu0 %1063
      %1065 = vrot.lane.b32.xlu0 %v1033, 24
      %v1066 = vpop.permute.xlu0 %1065
      %1067 = vrot.lane.b32.xlu0 %v1034, 24
      %v1068 = vpop.permute.xlu0 %1067
      %1069 = vrot.lane.b32.xlu0 %v1035, 24
      %v1070 = vpop.permute.xlu0 %1069
      %1071 = vrot.lane.b32.xlu0 %v1036, 24
      %v1072 = vpop.permute.xlu0 %1071
      %vm1085 = vcmask 531712
      %1086 = vst.msk [vmem:[%s159 + $0x10] sm:$0xff] %vm1085, %v1050
      %1087 = vst.msk [vmem:[%s159 + $0x58] sm:$0xff] %vm1085, %v1052
      %vm1088 = vcmask 530688
      %1089 = vst.msk [vmem:[%s159 + $0xa0] sm:$0x7f] %vm1088, %v1054
      %1090 = vst.msk [vmem:[%s159 + $0x130] sm:$0xff] %vm1085, %v1056
      %1091 = vst.msk [vmem:[%s159 + $0x178] sm:$0xff] %vm1085, %v1058
      %1092 = vst.msk [vmem:[%s159 + $0x1c0] sm:$0x7f] %vm1088, %v1060
      %1093 = vst.msk [vmem:[%s159 + $0x250] sm:$0xff] %vm1085, %v1062
      %1094 = vst.msk [vmem:[%s159 + $0x298] sm:$0xff] %vm1085, %v1064
      %1095 = vst.msk [vmem:[%s159 + $0x2e0] sm:$0x7f] %vm1088, %v1066
      %1096 = vst.msk [vmem:[%s159 + $0x370] sm:$0xff] %vm1085, %v1068
      %1097 = vst.msk [vmem:[%s159 + $0x3b8] sm:$0xff] %vm1085, %v1070
      %1098 = vst.msk [vmem:[%s159 + $0x400] sm:$0x7f] %vm1088, %v1072
      %v1099 = vld [vmem:[%s148 + $0x10] sm:$0xff]
      %v1100 = vld [vmem:[%s148 + $0x50] sm:$0xff]
      %v1101 = vld [vmem:[%s148 + $0x90] sm:$0x7f]
      %v1102 = vld [vmem:[%s148 + $0xd0] sm:$0xff]
      %v1103 = vld [vmem:[%s148 + $0x110] sm:$0xff]
      %v1104 = vld [vmem:[%s148 + $0x150] sm:$0x7f]
      %v1105 = vld [vmem:[%s148 + $0x190] sm:$0xff]
      %v1106 = vld [vmem:[%s148 + $0x1d0] sm:$0xff]
      %v1107 = vld [vmem:[%s148 + $0x210] sm:$0x7f]
      %v1108 = vld [vmem:[%s148 + $0x250] sm:$0xff]
      %v1109 = vld [vmem:[%s148 + $0x290] sm:$0xff]
      %v1110 = vld [vmem:[%s148 + $0x2d0] sm:$0x7f]
      %1123 = vrot.lane.b32.xlu0 %v1099, 27
      %v1124 = vpop.permute.xlu0 %1123
      %1125 = vrot.lane.b32.xlu0 %v1100, 27
      %v1126 = vpop.permute.xlu0 %1125
      %1127 = vrot.lane.b32.xlu0 %v1101, 27
      %v1128 = vpop.permute.xlu0 %1127
      %1129 = vrot.lane.b32.xlu0 %v1102, 27
      %v1130 = vpop.permute.xlu0 %1129
      %1131 = vrot.lane.b32.xlu0 %v1103, 27
      %v1132 = vpop.permute.xlu0 %1131
      %1133 = vrot.lane.b32.xlu0 %v1104, 27
      %v1134 = vpop.permute.xlu0 %1133
      %1135 = vrot.lane.b32.xlu0 %v1105, 27
      %v1136 = vpop.permute.xlu0 %1135
      %1137 = vrot.lane.b32.xlu0 %v1106, 27
      %v1138 = vpop.permute.xlu0 %1137
      %1139 = vrot.lane.b32.xlu0 %v1107, 27
      %v1140 = vpop.permute.xlu0 %1139
      %1141 = vrot.lane.b32.xlu0 %v1108, 27
      %v1142 = vpop.permute.xlu0 %1141
      %1143 = vrot.lane.b32.xlu0 %v1109, 27
      %v1144 = vpop.permute.xlu0 %1143
      %1145 = vrot.lane.b32.xlu0 %v1110, 27
      %v1146 = vpop.permute.xlu0 %1145
      %vm1159 = vcmask 826912
      %1160 = vst.msk [vmem:[%s159 + $0x10] sm:$0xff] %vm1159, %v1124
      %1161 = vst.msk [vmem:[%s159 + $0x58] sm:$0xff] %vm1159, %v1126
      %vm1162 = vcmask 825888
      %1163 = vst.msk [vmem:[%s159 + $0xa0] sm:$0x7f] %vm1162, %v1128
      %1164 = vst.msk [vmem:[%s159 + $0x130] sm:$0xff] %vm1159, %v1130
      %1165 = vst.msk [vmem:[%s159 + $0x178] sm:$0xff] %vm1159, %v1132
      %1166 = vst.msk [vmem:[%s159 + $0x1c0] sm:$0x7f] %vm1162, %v1134
      %1167 = vst.msk [vmem:[%s159 + $0x250] sm:$0xff] %vm1159, %v1136
      %1168 = vst.msk [vmem:[%s159 + $0x298] sm:$0xff] %vm1159, %v1138
      %1169 = vst.msk [vmem:[%s159 + $0x2e0] sm:$0x7f] %vm1162, %v1140
      %1170 = vst.msk [vmem:[%s159 + $0x370] sm:$0xff] %vm1159, %v1142
      %1171 = vst.msk [vmem:[%s159 + $0x3b8] sm:$0xff] %vm1159, %v1144
      %1172 = vst.msk [vmem:[%s159 + $0x400] sm:$0x7f] %vm1162, %v1146
      %v1173 = vld [vmem:[%s148 + $0x10] sm:$0xff]
      %v1174 = vld [vmem:[%s148 + $0x50] sm:$0xff]
      %v1175 = vld [vmem:[%s148 + $0x90] sm:$0x7f]
      %v1176 = vld [vmem:[%s148 + $0xd0] sm:$0xff]
      %v1177 = vld [vmem:[%s148 + $0x110] sm:$0xff]
      %v1178 = vld [vmem:[%s148 + $0x150] sm:$0x7f]
      %v1179 = vld [vmem:[%s148 + $0x190] sm:$0xff]
      %v1180 = vld [vmem:[%s148 + $0x1d0] sm:$0xff]
      %v1181 = vld [vmem:[%s148 + $0x210] sm:$0x7f]
      %v1182 = vld [vmem:[%s148 + $0x250] sm:$0xff]
      %v1183 = vld [vmem:[%s148 + $0x290] sm:$0xff]
      %v1184 = vld [vmem:[%s148 + $0x2d0] sm:$0x7f]
      %1197 = vrot.lane.b32.xlu0 %v1173, 30
      %v1198 = vpop.permute.xlu0 %1197
      %1199 = vrot.lane.b32.xlu0 %v1174, 30
      %v1200 = vpop.permute.xlu0 %1199
      %1201 = vrot.lane.b32.xlu0 %v1175, 30
      %v1202 = vpop.permute.xlu0 %1201
      %1203 = vrot.lane.b32.xlu0 %v1176, 30
      %v1204 = vpop.permute.xlu0 %1203
      %1205 = vrot.lane.b32.xlu0 %v1177, 30
      %v1206 = vpop.permute.xlu0 %1205
      %1207 = vrot.lane.b32.xlu0 %v1178, 30
      %v1208 = vpop.permute.xlu0 %1207
      %1209 = vrot.lane.b32.xlu0 %v1179, 30
      %v1210 = vpop.permute.xlu0 %1209
      %1211 = vrot.lane.b32.xlu0 %v1180, 30
      %v1212 = vpop.permute.xlu0 %1211
      %1213 = vrot.lane.b32.xlu0 %v1181, 30
      %v1214 = vpop.permute.xlu0 %1213
      %1215 = vrot.lane.b32.xlu0 %v1182, 30
      %v1216 = vpop.permute.xlu0 %1215
      %1217 = vrot.lane.b32.xlu0 %v1183, 30
      %v1218 = vpop.permute.xlu0 %1217
      %1219 = vrot.lane.b32.xlu0 %v1184, 30
      %v1220 = vpop.permute.xlu0 %1219
      %vm1233 = vcmask 1048384
      %1234 = vst.msk [vmem:[%s159 + $0x10] sm:$0xff] %vm1233, %v1198
      %1235 = vst.msk [vmem:[%s159 + $0x18] sm:$0xff] %vm577, %v1198
      %1236 = vst.msk [vmem:[%s159 + $0x58] sm:$0xff] %vm1233, %v1200
      %1237 = vst.msk [vmem:[%s159 + $0x60] sm:$0xff] %vm577, %v1200
      %vm1238 = vcmask 1047360
      %1239 = vst.msk [vmem:[%s159 + $0xa0] sm:$0x7f] %vm1238, %v1202
      %vm1240 = vcmask 71680
      %1241 = vst.msk [vmem:[%s159 + $0xa8] sm:$0x7f] %vm1240, %v1202
      %1242 = vst.msk [vmem:[%s159 + $0x130] sm:$0xff] %vm1233, %v1204
      %1243 = vst.msk [vmem:[%s159 + $0x138] sm:$0xff] %vm577, %v1204
      %1244 = vst.msk [vmem:[%s159 + $0x178] sm:$0xff] %vm1233, %v1206
      %1245 = vst.msk [vmem:[%s159 + $0x180] sm:$0xff] %vm577, %v1206
      %1246 = vst.msk [vmem:[%s159 + $0x1c0] sm:$0x7f] %vm1238, %v1208
      %1247 = vst.msk [vmem:[%s159 + $0x1c8] sm:$0x7f] %vm1240, %v1208
      %1248 = vst.msk [vmem:[%s159 + $0x250] sm:$0xff] %vm1233, %v1210
      %1249 = vst.msk [vmem:[%s159 + $0x258] sm:$0xff] %vm577, %v1210
      %1250 = vst.msk [vmem:[%s159 + $0x298] sm:$0xff] %vm1233, %v1212
      %1251 = vst.msk [vmem:[%s159 + $0x2a0] sm:$0xff] %vm577, %v1212
      %1252 = vst.msk [vmem:[%s159 + $0x2e0] sm:$0x7f] %vm1238, %v1214
      %1253 = vst.msk [vmem:[%s159 + $0x2e8] sm:$0x7f] %vm1240, %v1214
      %1254 = vst.msk [vmem:[%s159 + $0x370] sm:$0xff] %vm1233, %v1216
      %1255 = vst.msk [vmem:[%s159 + $0x378] sm:$0xff] %vm577, %v1216
      %1256 = vst.msk [vmem:[%s159 + $0x3b8] sm:$0xff] %vm1233, %v1218
      %1257 = vst.msk [vmem:[%s159 + $0x3c0] sm:$0xff] %vm577, %v1218
      %1258 = vst.msk [vmem:[%s159 + $0x400] sm:$0x7f] %vm1238, %v1220
      %1259 = vst.msk [vmem:[%s159 + $0x408] sm:$0x7f] %vm1240, %v1220
      %v1260 = vld [vmem:[%s148 + $0x10] sm:$0xff]
      %v1261 = vld [vmem:[%s148 + $0x18] sm:$0xff]
      %v1262 = vld [vmem:[%s148 + $0x50] sm:$0xff]
      %v1263 = vld [vmem:[%s148 + $0x58] sm:$0xff]
      %v1264 = vld [vmem:[%s148 + $0x90] sm:$0x7f]
      %v1265 = vld [vmem:[%s148 + $0x98] sm:$0x7f]
      %v1266 = vld [vmem:[%s148 + $0xd0] sm:$0xff]
      %v1267 = vld [vmem:[%s148 + $0xd8] sm:$0xff]
      %v1268 = vld [vmem:[%s148 + $0x110] sm:$0xff]
      %v1269 = vld [vmem:[%s148 + $0x118] sm:$0xff]
      %v1270 = vld [vmem:[%s148 + $0x150] sm:$0x7f]
      %v1271 = vld [vmem:[%s148 + $0x158] sm:$0x7f]
      %v1272 = vld [vmem:[%s148 + $0x190] sm:$0xff]
      %v1273 = vld [vmem:[%s148 + $0x198] sm:$0xff]
      %v1274 = vld [vmem:[%s148 + $0x1d0] sm:$0xff]
      %v1275 = vld [vmem:[%s148 + $0x1d8] sm:$0xff]
      %v1276 = vld [vmem:[%s148 + $0x210] sm:$0x7f]
      %v1277 = vld [vmem:[%s148 + $0x218] sm:$0x7f]
      %v1278 = vld [vmem:[%s148 + $0x250] sm:$0xff]
      %v1279 = vld [vmem:[%s148 + $0x258] sm:$0xff]
      %v1280 = vld [vmem:[%s148 + $0x290] sm:$0xff]
      %v1281 = vld [vmem:[%s148 + $0x298] sm:$0xff]
      %v1282 = vld [vmem:[%s148 + $0x2d0] sm:$0x7f]
      %v1283 = vld [vmem:[%s148 + $0x2d8] sm:$0x7f]
      %1308 = vrot.lane.b32.xlu0 %v1260, 33
      %v1309 = vpop.permute.xlu0 %1308
      %1310 = vrot.lane.b32.xlu0 %v1261, 33
      %v1311 = vpop.permute.xlu0 %1310
      %1312 = vrot.lane.b32.xlu0 %v1262, 33
      %v1313 = vpop.permute.xlu0 %1312
      %1314 = vrot.lane.b32.xlu0 %v1263, 33
      %v1315 = vpop.permute.xlu0 %1314
      %1316 = vrot.lane.b32.xlu0 %v1264, 33
      %v1317 = vpop.permute.xlu0 %1316
      %1318 = vrot.lane.b32.xlu0 %v1265, 33
      %v1319 = vpop.permute.xlu0 %1318
      %1320 = vrot.lane.b32.xlu0 %v1266, 33
      %v1321 = vpop.permute.xlu0 %1320
      %1322 = vrot.lane.b32.xlu0 %v1267, 33
      %v1323 = vpop.permute.xlu0 %1322
      %1324 = vrot.lane.b32.xlu0 %v1268, 33
      %v1325 = vpop.permute.xlu0 %1324
      %1326 = vrot.lane.b32.xlu0 %v1269, 33
      %v1327 = vpop.permute.xlu0 %1326
      %1328 = vrot.lane.b32.xlu0 %v1270, 33
      %v1329 = vpop.permute.xlu0 %1328
      %1330 = vrot.lane.b32.xlu0 %v1271, 33
      %v1331 = vpop.permute.xlu0 %1330
      %1332 = vrot.lane.b32.xlu0 %v1272, 33
      %v1333 = vpop.permute.xlu0 %1332
      %1334 = vrot.lane.b32.xlu0 %v1273, 33
      %v1335 = vpop.permute.xlu0 %1334
      %1336 = vrot.lane.b32.xlu0 %v1274, 33
      %v1337 = vpop.permute.xlu0 %1336
      %1338 = vrot.lane.b32.xlu0 %v1275, 33
      %v1339 = vpop.permute.xlu0 %1338
      %1340 = vrot.lane.b32.xlu0 %v1276, 33
      %v1341 = vpop.permute.xlu0 %1340
      %1342 = vrot.lane.b32.xlu0 %v1277, 33
      %v1343 = vpop.permute.xlu0 %1342
      %1344 = vrot.lane.b32.xlu0 %v1278, 33
      %v1345 = vpop.permute.xlu0 %1344
      %1346 = vrot.lane.b32.xlu0 %v1279, 33
      %v1347 = vpop.permute.xlu0 %1346
      %1348 = vrot.lane.b32.xlu0 %v1280, 33
      %v1349 = vpop.permute.xlu0 %1348
      %1350 = vrot.lane.b32.xlu0 %v1281, 33
      %v1351 = vpop.permute.xlu0 %1350
      %1352 = vrot.lane.b32.xlu0 %v1282, 33
      %v1353 = vpop.permute.xlu0 %1352
      %1354 = vrot.lane.b32.xlu0 %v1283, 33
      %v1355 = vpop.permute.xlu0 %1354
      %v1356 = vsel %vm319, %v1309, %v1311
      %v1357 = vsel %vm319, %v1313, %v1315
      %v1358 = vsel %vm319, %v1317, %v1319
      %v1359 = vsel %vm319, %v1321, %v1323
      %v1360 = vsel %vm319, %v1325, %v1327
      %v1361 = vsel %vm319, %v1329, %v1331
      %v1362 = vsel %vm319, %v1333, %v1335
      %v1363 = vsel %vm319, %v1337, %v1339
      %v1364 = vsel %vm319, %v1341, %v1343
      %v1365 = vsel %vm319, %v1345, %v1347
      %v1366 = vsel %vm319, %v1349, %v1351
      %v1367 = vsel %vm319, %v1353, %v1355
      %vm1380 = vcmask 367712
      %1381 = vst.msk [vmem:[%s159 + $0x18] sm:$0xff] %vm1380, %v1356
      %1382 = vst.msk [vmem:[%s159 + $0x60] sm:$0xff] %vm1380, %v1357
      %vm1383 = vcmask 366688
      %1384 = vst.msk [vmem:[%s159 + $0xa8] sm:$0x7f] %vm1383, %v1358
      %1385 = vst.msk [vmem:[%s159 + $0x138] sm:$0xff] %vm1380, %v1359
      %1386 = vst.msk [vmem:[%s159 + $0x180] sm:$0xff] %vm1380, %v1360
      %1387 = vst.msk [vmem:[%s159 + $0x1c8] sm:$0x7f] %vm1383, %v1361
      %1388 = vst.msk [vmem:[%s159 + $0x258] sm:$0xff] %vm1380, %v1362
      %1389 = vst.msk [vmem:[%s159 + $0x2a0] sm:$0xff] %vm1380, %v1363
      %1390 = vst.msk [vmem:[%s159 + $0x2e8] sm:$0x7f] %vm1383, %v1364
      %1391 = vst.msk [vmem:[%s159 + $0x378] sm:$0xff] %vm1380, %v1365
      %1392 = vst.msk [vmem:[%s159 + $0x3c0] sm:$0xff] %vm1380, %v1366
      %1393 = vst.msk [vmem:[%s159 + $0x408] sm:$0x7f] %vm1383, %v1367
      %v1394 = vld [vmem:[%s148 + $0x18] sm:$0xff]
      %v1395 = vld [vmem:[%s148 + $0x58] sm:$0xff]
      %v1396 = vld [vmem:[%s148 + $0x98] sm:$0x7f]
      %v1397 = vld [vmem:[%s148 + $0xd8] sm:$0xff]
      %v1398 = vld [vmem:[%s148 + $0x118] sm:$0xff]
      %v1399 = vld [vmem:[%s148 + $0x158] sm:$0x7f]
      %v1400 = vld [vmem:[%s148 + $0x198] sm:$0xff]
      %v1401 = vld [vmem:[%s148 + $0x1d8] sm:$0xff]
      %v1402 = vld [vmem:[%s148 + $0x218] sm:$0x7f]
      %v1403 = vld [vmem:[%s148 + $0x258] sm:$0xff]
      %v1404 = vld [vmem:[%s148 + $0x298] sm:$0xff]
      %v1405 = vld [vmem:[%s148 + $0x2d8] sm:$0x7f]
      %1418 = vrot.lane.b32.xlu0 %v1394, 36
      %v1419 = vpop.permute.xlu0 %1418
      %1420 = vrot.lane.b32.xlu0 %v1395, 36
      %v1421 = vpop.permute.xlu0 %1420
      %1422 = vrot.lane.b32.xlu0 %v1396, 36
      %v1423 = vpop.permute.xlu0 %1422
      %1424 = vrot.lane.b32.xlu0 %v1397, 36
      %v1425 = vpop.permute.xlu0 %1424
      %1426 = vrot.lane.b32.xlu0 %v1398, 36
      %v1427 = vpop.permute.xlu0 %1426
      %1428 = vrot.lane.b32.xlu0 %v1399, 36
      %v1429 = vpop.permute.xlu0 %1428
      %1430 = vrot.lane.b32.xlu0 %v1400, 36
      %v1431 = vpop.permute.xlu0 %1430
      %1432 = vrot.lane.b32.xlu0 %v1401, 36
      %v1433 = vpop.permute.xlu0 %1432
      %1434 = vrot.lane.b32.xlu0 %v1402, 36
      %v1435 = vpop.permute.xlu0 %1434
      %1436 = vrot.lane.b32.xlu0 %v1403, 36
      %v1437 = vpop.permute.xlu0 %1436
      %1438 = vrot.lane.b32.xlu0 %v1404, 36
      %v1439 = vpop.permute.xlu0 %1438
      %1440 = vrot.lane.b32.xlu0 %v1405, 36
      %v1441 = vpop.permute.xlu0 %1440
      %vm1454 = vcmask 662912
      %1455 = vst.msk [vmem:[%s159 + $0x18] sm:$0xff] %vm1454, %v1419
      %1456 = vst.msk [vmem:[%s159 + $0x60] sm:$0xff] %vm1454, %v1421
      %vm1457 = vcmask 661888
      %1458 = vst.msk [vmem:[%s159 + $0xa8] sm:$0x7f] %vm1457, %v1423
      %1459 = vst.msk [vmem:[%s159 + $0x138] sm:$0xff] %vm1454, %v1425
      %1460 = vst.msk [vmem:[%s159 + $0x180] sm:$0xff] %vm1454, %v1427
      %1461 = vst.msk [vmem:[%s159 + $0x1c8] sm:$0x7f] %vm1457, %v1429
      %1462 = vst.msk [vmem:[%s159 + $0x258] sm:$0xff] %vm1454, %v1431
      %1463 = vst.msk [vmem:[%s159 + $0x2a0] sm:$0xff] %vm1454, %v1433
      %1464 = vst.msk [vmem:[%s159 + $0x2e8] sm:$0x7f] %vm1457, %v1435
      %1465 = vst.msk [vmem:[%s159 + $0x378] sm:$0xff] %vm1454, %v1437
      %1466 = vst.msk [vmem:[%s159 + $0x3c0] sm:$0xff] %vm1454, %v1439
      %1467 = vst.msk [vmem:[%s159 + $0x408] sm:$0x7f] %vm1457, %v1441
      %v1468 = vld [vmem:[%s148 + $0x18] sm:$0xff]
      %v1469 = vld [vmem:[%s148 + $0x58] sm:$0xff]
      %v1470 = vld [vmem:[%s148 + $0x98] sm:$0x7f]
      %v1471 = vld [vmem:[%s148 + $0xd8] sm:$0xff]
      %v1472 = vld [vmem:[%s148 + $0x118] sm:$0xff]
      %v1473 = vld [vmem:[%s148 + $0x158] sm:$0x7f]
      %v1474 = vld [vmem:[%s148 + $0x198] sm:$0xff]
      %v1475 = vld [vmem:[%s148 + $0x1d8] sm:$0xff]
      %v1476 = vld [vmem:[%s148 + $0x218] sm:$0x7f]
      %v1477 = vld [vmem:[%s148 + $0x258] sm:$0xff]
      %v1478 = vld [vmem:[%s148 + $0x298] sm:$0xff]
      %v1479 = vld [vmem:[%s148 + $0x2d8] sm:$0x7f]
      %1492 = vrot.lane.b32.xlu0 %v1468, 39
      %v1493 = vpop.permute.xlu0 %1492
      %1494 = vrot.lane.b32.xlu0 %v1469, 39
      %v1495 = vpop.permute.xlu0 %1494
      %1496 = vrot.lane.b32.xlu0 %v1470, 39
      %v1497 = vpop.permute.xlu0 %1496
      %1498 = vrot.lane.b32.xlu0 %v1471, 39
      %v1499 = vpop.permute.xlu0 %1498
      %1500 = vrot.lane.b32.xlu0 %v1472, 39
      %v1501 = vpop.permute.xlu0 %1500
      %1502 = vrot.lane.b32.xlu0 %v1473, 39
      %v1503 = vpop.permute.xlu0 %1502
      %1504 = vrot.lane.b32.xlu0 %v1474, 39
      %v1505 = vpop.permute.xlu0 %1504
      %1506 = vrot.lane.b32.xlu0 %v1475, 39
      %v1507 = vpop.permute.xlu0 %1506
      %1508 = vrot.lane.b32.xlu0 %v1476, 39
      %v1509 = vpop.permute.xlu0 %1508
      %1510 = vrot.lane.b32.xlu0 %v1477, 39
      %v1511 = vpop.permute.xlu0 %1510
      %1512 = vrot.lane.b32.xlu0 %v1478, 39
      %v1513 = vpop.permute.xlu0 %1512
      %1514 = vrot.lane.b32.xlu0 %v1479, 39
      %v1515 = vpop.permute.xlu0 %1514
      %vm1528 = vcmask 958112
      %1529 = vst.msk [vmem:[%s159 + $0x18] sm:$0xff] %vm1528, %v1493
      %1530 = vst.msk [vmem:[%s159 + $0x60] sm:$0xff] %vm1528, %v1495
      %vm1531 = vcmask 957088
      %1532 = vst.msk [vmem:[%s159 + $0xa8] sm:$0x7f] %vm1531, %v1497
      %1533 = vst.msk [vmem:[%s159 + $0x138] sm:$0xff] %vm1528, %v1499
      %1534 = vst.msk [vmem:[%s159 + $0x180] sm:$0xff] %vm1528, %v1501
      %1535 = vst.msk [vmem:[%s159 + $0x1c8] sm:$0x7f] %vm1531, %v1503
      %1536 = vst.msk [vmem:[%s159 + $0x258] sm:$0xff] %vm1528, %v1505
      %1537 = vst.msk [vmem:[%s159 + $0x2a0] sm:$0xff] %vm1528, %v1507
      %1538 = vst.msk [vmem:[%s159 + $0x2e8] sm:$0x7f] %vm1531, %v1509
      %1539 = vst.msk [vmem:[%s159 + $0x378] sm:$0xff] %vm1528, %v1511
      %1540 = vst.msk [vmem:[%s159 + $0x3c0] sm:$0xff] %vm1528, %v1513
      %1541 = vst.msk [vmem:[%s159 + $0x408] sm:$0x7f] %vm1531, %v1515
      %v1542 = vld [vmem:[%s148 + $0x18] sm:$0xff]
      %v1543 = vld [vmem:[%s148 + $0x58] sm:$0xff]
      %v1544 = vld [vmem:[%s148 + $0x98] sm:$0x7f]
      %v1545 = vld [vmem:[%s148 + $0xd8] sm:$0xff]
      %v1546 = vld [vmem:[%s148 + $0x118] sm:$0xff]
      %v1547 = vld [vmem:[%s148 + $0x158] sm:$0x7f]
      %v1548 = vld [vmem:[%s148 + $0x198] sm:$0xff]
      %v1549 = vld [vmem:[%s148 + $0x1d8] sm:$0xff]
      %v1550 = vld [vmem:[%s148 + $0x218] sm:$0x7f]
      %v1551 = vld [vmem:[%s148 + $0x258] sm:$0xff]
      %v1552 = vld [vmem:[%s148 + $0x298] sm:$0xff]
      %v1553 = vld [vmem:[%s148 + $0x2d8] sm:$0x7f]
      %1566 = vrot.lane.b32.xlu0 %v1542, 42
      %v1567 = vpop.permute.xlu0 %1566
      %1568 = vrot.lane.b32.xlu0 %v1543, 42
      %v1569 = vpop.permute.xlu0 %1568
      %1570 = vrot.lane.b32.xlu0 %v1544, 42
      %v1571 = vpop.permute.xlu0 %1570
      %1572 = vrot.lane.b32.xlu0 %v1545, 42
      %v1573 = vpop.permute.xlu0 %1572
      %1574 = vrot.lane.b32.xlu0 %v1546, 42
      %v1575 = vpop.permute.xlu0 %1574
      %1576 = vrot.lane.b32.xlu0 %v1547, 42
      %v1577 = vpop.permute.xlu0 %1576
      %1578 = vrot.lane.b32.xlu0 %v1548, 42
      %v1579 = vpop.permute.xlu0 %1578
      %1580 = vrot.lane.b32.xlu0 %v1549, 42
      %v1581 = vpop.permute.xlu0 %1580
      %1582 = vrot.lane.b32.xlu0 %v1550, 42
      %v1583 = vpop.permute.xlu0 %1582
      %1584 = vrot.lane.b32.xlu0 %v1551, 42
      %v1585 = vpop.permute.xlu0 %1584
      %1586 = vrot.lane.b32.xlu0 %v1552, 42
      %v1587 = vpop.permute.xlu0 %1586
      %1588 = vrot.lane.b32.xlu0 %v1553, 42
      %v1589 = vpop.permute.xlu0 %1588
      %vm1602 = vcmask 1048512
      %1603 = vst.msk [vmem:[%s159 + $0x18] sm:$0xff] %vm1602, %v1567
      %vm1604 = vcmask 203776
      %1605 = vst.msk [vmem:[%s159 + $0x20] sm:$0xff] %vm1604, %v1567
      %1606 = vst.msk [vmem:[%s159 + $0x60] sm:$0xff] %vm1602, %v1569
      %1607 = vst.msk [vmem:[%s159 + $0x68] sm:$0xff] %vm1604, %v1569
      %vm1608 = vcmask 1047488
      %1609 = vst.msk [vmem:[%s159 + $0xa8] sm:$0x7f] %vm1608, %v1571
      %vm1610 = vcmask 202752
      %1611 = vst.msk [vmem:[%s159 + $0xb0] sm:$0x7f] %vm1610, %v1571
      %1612 = vst.msk [vmem:[%s159 + $0x138] sm:$0xff] %vm1602, %v1573
      %1613 = vst.msk [vmem:[%s159 + $0x140] sm:$0xff] %vm1604, %v1573
      %1614 = vst.msk [vmem:[%s159 + $0x180] sm:$0xff] %vm1602, %v1575
      %1615 = vst.msk [vmem:[%s159 + $0x188] sm:$0xff] %vm1604, %v1575
      %1616 = vst.msk [vmem:[%s159 + $0x1c8] sm:$0x7f] %vm1608, %v1577
      %1617 = vst.msk [vmem:[%s159 + $0x1d0] sm:$0x7f] %vm1610, %v1577
      %1618 = vst.msk [vmem:[%s159 + $0x258] sm:$0xff] %vm1602, %v1579
      %1619 = vst.msk [vmem:[%s159 + $0x260] sm:$0xff] %vm1604, %v1579
      %1620 = vst.msk [vmem:[%s159 + $0x2a0] sm:$0xff] %vm1602, %v1581
      %1621 = vst.msk [vmem:[%s159 + $0x2a8] sm:$0xff] %vm1604, %v1581
      %1622 = vst.msk [vmem:[%s159 + $0x2e8] sm:$0x7f] %vm1608, %v1583
      %1623 = vst.msk [vmem:[%s159 + $0x2f0] sm:$0x7f] %vm1610, %v1583
      %1624 = vst.msk [vmem:[%s159 + $0x378] sm:$0xff] %vm1602, %v1585
      %1625 = vst.msk [vmem:[%s159 + $0x380] sm:$0xff] %vm1604, %v1585
      %1626 = vst.msk [vmem:[%s159 + $0x3c0] sm:$0xff] %vm1602, %v1587
      %1627 = vst.msk [vmem:[%s159 + $0x3c8] sm:$0xff] %vm1604, %v1587
      %1628 = vst.msk [vmem:[%s159 + $0x408] sm:$0x7f] %vm1608, %v1589
      %1629 = vst.msk [vmem:[%s159 + $0x410] sm:$0x7f] %vm1610, %v1589
      %v1630 = vld [vmem:[%s148 + $0x18] sm:$0xff]
      %v1631 = vld [vmem:[%s148 + $0x20] sm:$0xff]
      %v1632 = vld [vmem:[%s148 + $0x58] sm:$0xff]
      %v1633 = vld [vmem:[%s148 + $0x60] sm:$0xff]
      %v1634 = vld [vmem:[%s148 + $0x98] sm:$0x7f]
      %v1635 = vld [vmem:[%s148 + $0xa0] sm:$0x7f]
      %v1636 = vld [vmem:[%s148 + $0xd8] sm:$0xff]
      %v1637 = vld [vmem:[%s148 + $0xe0] sm:$0xff]
      %v1638 = vld [vmem:[%s148 + $0x118] sm:$0xff]
      %v1639 = vld [vmem:[%s148 + $0x120] sm:$0xff]
      %v1640 = vld [vmem:[%s148 + $0x158] sm:$0x7f]
      %v1641 = vld [vmem:[%s148 + $0x160] sm:$0x7f]
      %v1642 = vld [vmem:[%s148 + $0x198] sm:$0xff]
      %v1643 = vld [vmem:[%s148 + $0x1a0] sm:$0xff]
      %v1644 = vld [vmem:[%s148 + $0x1d8] sm:$0xff]
      %v1645 = vld [vmem:[%s148 + $0x1e0] sm:$0xff]
      %v1646 = vld [vmem:[%s148 + $0x218] sm:$0x7f]
      %v1647 = vld [vmem:[%s148 + $0x220] sm:$0x7f]
      %v1648 = vld [vmem:[%s148 + $0x258] sm:$0xff]
      %v1649 = vld [vmem:[%s148 + $0x260] sm:$0xff]
      %v1650 = vld [vmem:[%s148 + $0x298] sm:$0xff]
      %v1651 = vld [vmem:[%s148 + $0x2a0] sm:$0xff]
      %v1652 = vld [vmem:[%s148 + $0x2d8] sm:$0x7f]
      %v1653 = vld [vmem:[%s148 + $0x2e0] sm:$0x7f]
      %1678 = vrot.lane.b32.xlu0 %v1630, 45
      %v1679 = vpop.permute.xlu0 %1678
      %1680 = vrot.lane.b32.xlu0 %v1631, 45
      %v1681 = vpop.permute.xlu0 %1680
      %1682 = vrot.lane.b32.xlu0 %v1632, 45
      %v1683 = vpop.permute.xlu0 %1682
      %1684 = vrot.lane.b32.xlu0 %v1633, 45
      %v1685 = vpop.permute.xlu0 %1684
      %1686 = vrot.lane.b32.xlu0 %v1634, 45
      %v1687 = vpop.permute.xlu0 %1686
      %1688 = vrot.lane.b32.xlu0 %v1635, 45
      %v1689 = vpop.permute.xlu0 %1688
      %1690 = vrot.lane.b32.xlu0 %v1636, 45
      %v1691 = vpop.permute.xlu0 %1690
      %1692 = vrot.lane.b32.xlu0 %v1637, 45
      %v1693 = vpop.permute.xlu0 %1692
      %1694 = vrot.lane.b32.xlu0 %v1638, 45
      %v1695 = vpop.permute.xlu0 %1694
      %1696 = vrot.lane.b32.xlu0 %v1639, 45
      %v1697 = vpop.permute.xlu0 %1696
      %1698 = vrot.lane.b32.xlu0 %v1640, 45
      %v1699 = vpop.permute.xlu0 %1698
      %1700 = vrot.lane.b32.xlu0 %v1641, 45
      %v1701 = vpop.permute.xlu0 %1700
      %1702 = vrot.lane.b32.xlu0 %v1642, 45
      %v1703 = vpop.permute.xlu0 %1702
      %1704 = vrot.lane.b32.xlu0 %v1643, 45
      %v1705 = vpop.permute.xlu0 %1704
      %1706 = vrot.lane.b32.xlu0 %v1644, 45
      %v1707 = vpop.permute.xlu0 %1706
      %1708 = vrot.lane.b32.xlu0 %v1645, 45
      %v1709 = vpop.permute.xlu0 %1708
      %1710 = vrot.lane.b32.xlu0 %v1646, 45
      %v1711 = vpop.permute.xlu0 %1710
      %1712 = vrot.lane.b32.xlu0 %v1647, 45
      %v1713 = vpop.permute.xlu0 %1712
      %1714 = vrot.lane.b32.xlu0 %v1648, 45
      %v1715 = vpop.permute.xlu0 %1714
      %1716 = vrot.lane.b32.xlu0 %v1649, 45
      %v1717 = vpop.permute.xlu0 %1716
      %1718 = vrot.lane.b32.xlu0 %v1650, 45
      %v1719 = vpop.permute.xlu0 %1718
      %1720 = vrot.lane.b32.xlu0 %v1651, 45
      %v1721 = vpop.permute.xlu0 %1720
      %1722 = vrot.lane.b32.xlu0 %v1652, 45
      %v1723 = vpop.permute.xlu0 %1722
      %1724 = vrot.lane.b32.xlu0 %v1653, 45
      %v1725 = vpop.permute.xlu0 %1724
      %vm1726 = vcmask 367616
      %v1727 = vsel %vm1726, %v1679, %v1681
      %v1728 = vsel %vm1726, %v1683, %v1685
      %v1729 = vsel %vm1726, %v1687, %v1689
      %v1730 = vsel %vm1726, %v1691, %v1693
      %v1731 = vsel %vm1726, %v1695, %v1697
      %v1732 = vsel %vm1726, %v1699, %v1701
      %v1733 = vsel %vm1726, %v1703, %v1705
      %v1734 = vsel %vm1726, %v1707, %v1709
      %v1735 = vsel %vm1726, %v1711, %v1713
      %v1736 = vsel %vm1726, %v1715, %v1717
      %v1737 = vsel %vm1726, %v1719, %v1721
      %v1738 = vsel %vm1726, %v1723, %v1725
      %vm1751 = vcmask 498912
      %1752 = vst.msk [vmem:[%s159 + $0x20] sm:$0xff] %vm1751, %v1727
      %1753 = vst.msk [vmem:[%s159 + $0x68] sm:$0xff] %vm1751, %v1728
      %vm1754 = vcmask 497888
      %1755 = vst.msk [vmem:[%s159 + $0xb0] sm:$0x7f] %vm1754, %v1729
      %1756 = vst.msk [vmem:[%s159 + $0x140] sm:$0xff] %vm1751, %v1730
      %1757 = vst.msk [vmem:[%s159 + $0x188] sm:$0xff] %vm1751, %v1731
      %1758 = vst.msk [vmem:[%s159 + $0x1d0] sm:$0x7f] %vm1754, %v1732
      %1759 = vst.msk [vmem:[%s159 + $0x260] sm:$0xff] %vm1751, %v1733
      %1760 = vst.msk [vmem:[%s159 + $0x2a8] sm:$0xff] %vm1751, %v1734
      %1761 = vst.msk [vmem:[%s159 + $0x2f0] sm:$0x7f] %vm1754, %v1735
      %1762 = vst.msk [vmem:[%s159 + $0x380] sm:$0xff] %vm1751, %v1736
      %1763 = vst.msk [vmem:[%s159 + $0x3c8] sm:$0xff] %vm1751, %v1737
      %1764 = vst.msk [vmem:[%s159 + $0x410] sm:$0x7f] %vm1754, %v1738
      %v1765 = vld [vmem:[%s148 + $0x20] sm:$0xff]
      %v1766 = vld [vmem:[%s148 + $0x60] sm:$0xff]
      %v1767 = vld [vmem:[%s148 + $0xa0] sm:$0x7f]
      %v1768 = vld [vmem:[%s148 + $0xe0] sm:$0xff]
      %v1769 = vld [vmem:[%s148 + $0x120] sm:$0xff]
      %v1770 = vld [vmem:[%s148 + $0x160] sm:$0x7f]
      %v1771 = vld [vmem:[%s148 + $0x1a0] sm:$0xff]
      %v1772 = vld [vmem:[%s148 + $0x1e0] sm:$0xff]
      %v1773 = vld [vmem:[%s148 + $0x220] sm:$0x7f]
      %v1774 = vld [vmem:[%s148 + $0x260] sm:$0xff]
      %v1775 = vld [vmem:[%s148 + $0x2a0] sm:$0xff]
      %v1776 = vld [vmem:[%s148 + $0x2e0] sm:$0x7f]
      %1789 = vrot.lane.b32.xlu0 %v1765, 48
      %v1790 = vpop.permute.xlu0 %1789
      %1791 = vrot.lane.b32.xlu0 %v1766, 48
      %v1792 = vpop.permute.xlu0 %1791
      %1793 = vrot.lane.b32.xlu0 %v1767, 48
      %v1794 = vpop.permute.xlu0 %1793
      %1795 = vrot.lane.b32.xlu0 %v1768, 48
      %v1796 = vpop.permute.xlu0 %1795
      %1797 = vrot.lane.b32.xlu0 %v1769, 48
      %v1798 = vpop.permute.xlu0 %1797
      %1799 = vrot.lane.b32.xlu0 %v1770, 48
      %v1800 = vpop.permute.xlu0 %1799
      %1801 = vrot.lane.b32.xlu0 %v1771, 48
      %v1802 = vpop.permute.xlu0 %1801
      %1803 = vrot.lane.b32.xlu0 %v1772, 48
      %v1804 = vpop.permute.xlu0 %1803
      %1805 = vrot.lane.b32.xlu0 %v1773, 48
      %v1806 = vpop.permute.xlu0 %1805
      %1807 = vrot.lane.b32.xlu0 %v1774, 48
      %v1808 = vpop.permute.xlu0 %1807
      %1809 = vrot.lane.b32.xlu0 %v1775, 48
      %v1810 = vpop.permute.xlu0 %1809
      %1811 = vrot.lane.b32.xlu0 %v1776, 48
      %v1812 = vpop.permute.xlu0 %1811
      %vm1825 = vcmask 794112
      %1826 = vst.msk [vmem:[%s159 + $0x20] sm:$0xff] %vm1825, %v1790
      %1827 = vst.msk [vmem:[%s159 + $0x68] sm:$0xff] %vm1825, %v1792
      %vm1828 = vcmask 793088
      %1829 = vst.msk [vmem:[%s159 + $0xb0] sm:$0x7f] %vm1828, %v1794
      %1830 = vst.msk [vmem:[%s159 + $0x140] sm:$0xff] %vm1825, %v1796
      %1831 = vst.msk [vmem:[%s159 + $0x188] sm:$0xff] %vm1825, %v1798
      %1832 = vst.msk [vmem:[%s159 + $0x1d0] sm:$0x7f] %vm1828, %v1800
      %1833 = vst.msk [vmem:[%s159 + $0x260] sm:$0xff] %vm1825, %v1802
      %1834 = vst.msk [vmem:[%s159 + $0x2a8] sm:$0xff] %vm1825, %v1804
      %1835 = vst.msk [vmem:[%s159 + $0x2f0] sm:$0x7f] %vm1828, %v1806
      %1836 = vst.msk [vmem:[%s159 + $0x380] sm:$0xff] %vm1825, %v1808
      %1837 = vst.msk [vmem:[%s159 + $0x3c8] sm:$0xff] %vm1825, %v1810
      %1838 = vst.msk [vmem:[%s159 + $0x410] sm:$0x7f] %vm1828, %v1812
      %v1839 = vld [vmem:[%s148 + $0x20] sm:$0xff]
      %v1840 = vld [vmem:[%s148 + $0x60] sm:$0xff]
      %v1841 = vld [vmem:[%s148 + $0xa0] sm:$0x7f]
      %v1842 = vld [vmem:[%s148 + $0xe0] sm:$0xff]
      %v1843 = vld [vmem:[%s148 + $0x120] sm:$0xff]
      %v1844 = vld [vmem:[%s148 + $0x160] sm:$0x7f]
      %v1845 = vld [vmem:[%s148 + $0x1a0] sm:$0xff]
      %v1846 = vld [vmem:[%s148 + $0x1e0] sm:$0xff]
      %v1847 = vld [vmem:[%s148 + $0x220] sm:$0x7f]
      %v1848 = vld [vmem:[%s148 + $0x260] sm:$0xff]
      %v1849 = vld [vmem:[%s148 + $0x2a0] sm:$0xff]
      %v1850 = vld [vmem:[%s148 + $0x2e0] sm:$0x7f]
      %1863 = vrot.lane.b32.xlu0 %v1839, 51
      %v1864 = vpop.permute.xlu0 %1863
      %1865 = vrot.lane.b32.xlu0 %v1840, 51
      %v1866 = vpop.permute.xlu0 %1865
      %1867 = vrot.lane.b32.xlu0 %v1841, 51
      %v1868 = vpop.permute.xlu0 %1867
      %1869 = vrot.lane.b32.xlu0 %v1842, 51
      %v1870 = vpop.permute.xlu0 %1869
      %1871 = vrot.lane.b32.xlu0 %v1843, 51
      %v1872 = vpop.permute.xlu0 %1871
      %1873 = vrot.lane.b32.xlu0 %v1844, 51
      %v1874 = vpop.permute.xlu0 %1873
      %1875 = vrot.lane.b32.xlu0 %v1845, 51
      %v1876 = vpop.permute.xlu0 %1875
      %1877 = vrot.lane.b32.xlu0 %v1846, 51
      %v1878 = vpop.permute.xlu0 %1877
      %1879 = vrot.lane.b32.xlu0 %v1847, 51
      %v1880 = vpop.permute.xlu0 %1879
      %1881 = vrot.lane.b32.xlu0 %v1848, 51
      %v1882 = vpop.permute.xlu0 %1881
      %1883 = vrot.lane.b32.xlu0 %v1849, 51
      %v1884 = vpop.permute.xlu0 %1883
      %1885 = vrot.lane.b32.xlu0 %v1850, 51
      %v1886 = vpop.permute.xlu0 %1885
      %vm1899 = vcmask 1048352
      %1900 = vst.msk [vmem:[%s159 + $0x20] sm:$0xff] %vm1899, %v1864
      %vm1901 = vcmask 39936
      %1902 = vst.msk [vmem:[%s159 + $0x28] sm:$0xff] %vm1901, %v1864
      %1903 = vst.msk [vmem:[%s159 + $0x68] sm:$0xff] %vm1899, %v1866
      %1904 = vst.msk [vmem:[%s159 + $0x70] sm:$0xff] %vm1901, %v1866
      %vm1905 = vcmask 1047328
      %1906 = vst.msk [vmem:[%s159 + $0xb0] sm:$0x7f] %vm1905, %v1868
      %vm1907 = vcmask 38912
      %1908 = vst.msk [vmem:[%s159 + $0xb8] sm:$0x7f] %vm1907, %v1868
      %1909 = vst.msk [vmem:[%s159 + $0x140] sm:$0xff] %vm1899, %v1870
      %1910 = vst.msk [vmem:[%s159 + $0x148] sm:$0xff] %vm1901, %v1870
      %1911 = vst.msk [vmem:[%s159 + $0x188] sm:$0xff] %vm1899, %v1872
      %1912 = vst.msk [vmem:[%s159 + $0x190] sm:$0xff] %vm1901, %v1872
      %1913 = vst.msk [vmem:[%s159 + $0x1d0] sm:$0x7f] %vm1905, %v1874
      %1914 = vst.msk [vmem:[%s159 + $0x1d8] sm:$0x7f] %vm1907, %v1874
      %1915 = vst.msk [vmem:[%s159 + $0x260] sm:$0xff] %vm1899, %v1876
      %1916 = vst.msk [vmem:[%s159 + $0x268] sm:$0xff] %vm1901, %v1876
      %1917 = vst.msk [vmem:[%s159 + $0x2a8] sm:$0xff] %vm1899, %v1878
      %1918 = vst.msk [vmem:[%s159 + $0x2b0] sm:$0xff] %vm1901, %v1878
      %1919 = vst.msk [vmem:[%s159 + $0x2f0] sm:$0x7f] %vm1905, %v1880
      %1920 = vst.msk [vmem:[%s159 + $0x2f8] sm:$0x7f] %vm1907, %v1880
      %1921 = vst.msk [vmem:[%s159 + $0x380] sm:$0xff] %vm1899, %v1882
      %1922 = vst.msk [vmem:[%s159 + $0x388] sm:$0xff] %vm1901, %v1882
      %1923 = vst.msk [vmem:[%s159 + $0x3c8] sm:$0xff] %vm1899, %v1884
      %1924 = vst.msk [vmem:[%s159 + $0x3d0] sm:$0xff] %vm1901, %v1884
      %1925 = vst.msk [vmem:[%s159 + $0x410] sm:$0x7f] %vm1905, %v1886
      %1926 = vst.msk [vmem:[%s159 + $0x418] sm:$0x7f] %vm1907, %v1886
      %v1927 = vld [vmem:[%s148 + $0x20] sm:$0xff]
      %v1928 = vld [vmem:[%s148 + $0x60] sm:$0xff]
      %v1929 = vld [vmem:[%s148 + $0xa0] sm:$0x7f]
      %v1930 = vld [vmem:[%s148 + $0xe0] sm:$0xff]
      %v1931 = vld [vmem:[%s148 + $0x120] sm:$0xff]
      %v1932 = vld [vmem:[%s148 + $0x160] sm:$0x7f]
      %v1933 = vld [vmem:[%s148 + $0x1a0] sm:$0xff]
      %v1934 = vld [vmem:[%s148 + $0x1e0] sm:$0xff]
      %v1935 = vld [vmem:[%s148 + $0x220] sm:$0x7f]
      %v1936 = vld [vmem:[%s148 + $0x260] sm:$0xff]
      %v1937 = vld [vmem:[%s148 + $0x2a0] sm:$0xff]
      %v1938 = vld [vmem:[%s148 + $0x2e0] sm:$0x7f]
      %1951 = vrot.lane.b32.xlu0 %v1927, 54
      %v1952 = vpop.permute.xlu0 %1951
      %1953 = vrot.lane.b32.xlu0 %v1928, 54
      %v1954 = vpop.permute.xlu0 %1953
      %1955 = vrot.lane.b32.xlu0 %v1929, 54
      %v1956 = vpop.permute.xlu0 %1955
      %1957 = vrot.lane.b32.xlu0 %v1930, 54
      %v1958 = vpop.permute.xlu0 %1957
      %1959 = vrot.lane.b32.xlu0 %v1931, 54
      %v1960 = vpop.permute.xlu0 %1959
      %1961 = vrot.lane.b32.xlu0 %v1932, 54
      %v1962 = vpop.permute.xlu0 %1961
      %1963 = vrot.lane.b32.xlu0 %v1933, 54
      %v1964 = vpop.permute.xlu0 %1963
      %1965 = vrot.lane.b32.xlu0 %v1934, 54
      %v1966 = vpop.permute.xlu0 %1965
      %1967 = vrot.lane.b32.xlu0 %v1935, 54
      %v1968 = vpop.permute.xlu0 %1967
      %1969 = vrot.lane.b32.xlu0 %v1936, 54
      %v1970 = vpop.permute.xlu0 %1969
      %1971 = vrot.lane.b32.xlu0 %v1937, 54
      %v1972 = vpop.permute.xlu0 %1971
      %1973 = vrot.lane.b32.xlu0 %v1938, 54
      %v1974 = vpop.permute.xlu0 %1973
      %vm1987 = vcmask 334912
      %1988 = vst.msk [vmem:[%s159 + $0x28] sm:$0xff] %vm1987, %v1952
      %1989 = vst.msk [vmem:[%s159 + $0x70] sm:$0xff] %vm1987, %v1954
      %vm1990 = vcmask 333888
      %1991 = vst.msk [vmem:[%s159 + $0xb8] sm:$0x7f] %vm1990, %v1956
      %1992 = vst.msk [vmem:[%s159 + $0x148] sm:$0xff] %vm1987, %v1958
      %1993 = vst.msk [vmem:[%s159 + $0x190] sm:$0xff] %vm1987, %v1960
      %1994 = vst.msk [vmem:[%s159 + $0x1d8] sm:$0x7f] %vm1990, %v1962
      %1995 = vst.msk [vmem:[%s159 + $0x268] sm:$0xff] %vm1987, %v1964
      %1996 = vst.msk [vmem:[%s159 + $0x2b0] sm:$0xff] %vm1987, %v1966
      %1997 = vst.msk [vmem:[%s159 + $0x2f8] sm:$0x7f] %vm1990, %v1968
      %1998 = vst.msk [vmem:[%s159 + $0x388] sm:$0xff] %vm1987, %v1970
      %1999 = vst.msk [vmem:[%s159 + $0x3d0] sm:$0xff] %vm1987, %v1972
      %2000 = vst.msk [vmem:[%s159 + $0x418] sm:$0x7f] %vm1990, %v1974
      %v2001 = vld [vmem:[%s148 + $0x20] sm:$0xff]
      %v2002 = vld [vmem:[%s148 + $0x28] sm:$0xff]
      %v2003 = vld [vmem:[%s148 + $0x60] sm:$0xff]
      %v2004 = vld [vmem:[%s148 + $0x68] sm:$0xff]
      %v2005 = vld [vmem:[%s148 + $0xa0] sm:$0x7f]
      %v2006 = vld [vmem:[%s148 + $0xa8] sm:$0x7f]
      %v2007 = vld [vmem:[%s148 + $0xe0] sm:$0xff]
      %v2008 = vld [vmem:[%s148 + $0xe8] sm:$0xff]
      %v2009 = vld [vmem:[%s148 + $0x120] sm:$0xff]
      %v2010 = vld [vmem:[%s148 + $0x128] sm:$0xff]
      %v2011 = vld [vmem:[%s148 + $0x160] sm:$0x7f]
      %v2012 = vld [vmem:[%s148 + $0x168] sm:$0x7f]
      %v2013 = vld [vmem:[%s148 + $0x1a0] sm:$0xff]
      %v2014 = vld [vmem:[%s148 + $0x1a8] sm:$0xff]
      %v2015 = vld [vmem:[%s148 + $0x1e0] sm:$0xff]
      %v2016 = vld [vmem:[%s148 + $0x1e8] sm:$0xff]
      %v2017 = vld [vmem:[%s148 + $0x220] sm:$0x7f]
      %v2018 = vld [vmem:[%s148 + $0x228] sm:$0x7f]
      %v2019 = vld [vmem:[%s148 + $0x260] sm:$0xff]
      %v2020 = vld [vmem:[%s148 + $0x268] sm:$0xff]
      %v2021 = vld [vmem:[%s148 + $0x2a0] sm:$0xff]
      %v2022 = vld [vmem:[%s148 + $0x2a8] sm:$0xff]
      %v2023 = vld [vmem:[%s148 + $0x2e0] sm:$0x7f]
      %v2024 = vld [vmem:[%s148 + $0x2e8] sm:$0x7f]
      %2049 = vrot.lane.b32.xlu0 %v2001, 57
      %v2050 = vpop.permute.xlu0 %2049
      %2051 = vrot.lane.b32.xlu0 %v2002, 57
      %v2052 = vpop.permute.xlu0 %2051
      %2053 = vrot.lane.b32.xlu0 %v2003, 57
      %v2054 = vpop.permute.xlu0 %2053
      %2055 = vrot.lane.b32.xlu0 %v2004, 57
      %v2056 = vpop.permute.xlu0 %2055
      %2057 = vrot.lane.b32.xlu0 %v2005, 57
      %v2058 = vpop.permute.xlu0 %2057
      %2059 = vrot.lane.b32.xlu0 %v2006, 57
      %v2060 = vpop.permute.xlu0 %2059
      %2061 = vrot.lane.b32.xlu0 %v2007, 57
      %v2062 = vpop.permute.xlu0 %2061
      %2063 = vrot.lane.b32.xlu0 %v2008, 57
      %v2064 = vpop.permute.xlu0 %2063
      %2065 = vrot.lane.b32.xlu0 %v2009, 57
      %v2066 = vpop.permute.xlu0 %2065
      %2067 = vrot.lane.b32.xlu0 %v2010, 57
      %v2068 = vpop.permute.xlu0 %2067
      %2069 = vrot.lane.b32.xlu0 %v2011, 57
      %v2070 = vpop.permute.xlu0 %2069
      %2071 = vrot.lane.b32.xlu0 %v2012, 57
      %v2072 = vpop.permute.xlu0 %2071
      %2073 = vrot.lane.b32.xlu0 %v2013, 57
      %v2074 = vpop.permute.xlu0 %2073
      %2075 = vrot.lane.b32.xlu0 %v2014, 57
      %v2076 = vpop.permute.xlu0 %2075
      %2077 = vrot.lane.b32.xlu0 %v2015, 57
      %v2078 = vpop.permute.xlu0 %2077
      %2079 = vrot.lane.b32.xlu0 %v2016, 57
      %v2080 = vpop.permute.xlu0 %2079
      %2081 = vrot.lane.b32.xlu0 %v2017, 57
      %v2082 = vpop.permute.xlu0 %2081
      %2083 = vrot.lane.b32.xlu0 %v2018, 57
      %v2084 = vpop.permute.xlu0 %2083
      %2085 = vrot.lane.b32.xlu0 %v2019, 57
      %v2086 = vpop.permute.xlu0 %2085
      %2087 = vrot.lane.b32.xlu0 %v2020, 57
      %v2088 = vpop.permute.xlu0 %2087
      %2089 = vrot.lane.b32.xlu0 %v2021, 57
      %v2090 = vpop.permute.xlu0 %2089
      %2091 = vrot.lane.b32.xlu0 %v2022, 57
      %v2092 = vpop.permute.xlu0 %2091
      %2093 = vrot.lane.b32.xlu0 %v2023, 57
      %v2094 = vpop.permute.xlu0 %2093
      %2095 = vrot.lane.b32.xlu0 %v2024, 57
      %v2096 = vpop.permute.xlu0 %2095
      %vm2097 = vcmask 465920
      %v2098 = vsel %vm2097, %v2050, %v2052
      %v2099 = vsel %vm2097, %v2054, %v2056
      %v2100 = vsel %vm2097, %v2058, %v2060
      %v2101 = vsel %vm2097, %v2062, %v2064
      %v2102 = vsel %vm2097, %v2066, %v2068
      %v2103 = vsel %vm2097, %v2070, %v2072
      %v2104 = vsel %vm2097, %v2074, %v2076
      %v2105 = vsel %vm2097, %v2078, %v2080
      %v2106 = vsel %vm2097, %v2082, %v2084
      %v2107 = vsel %vm2097, %v2086, %v2088
      %v2108 = vsel %vm2097, %v2090, %v2092
      %v2109 = vsel %vm2097, %v2094, %v2096
      %vm2122 = vcmask 630112
      %2123 = vst.msk [vmem:[%s159 + $0x28] sm:$0xff] %vm2122, %v2098
      %2124 = vst.msk [vmem:[%s159 + $0x70] sm:$0xff] %vm2122, %v2099
      %vm2125 = vcmask 629088
      %2126 = vst.msk [vmem:[%s159 + $0xb8] sm:$0x7f] %vm2125, %v2100
      %2127 = vst.msk [vmem:[%s159 + $0x148] sm:$0xff] %vm2122, %v2101
      %2128 = vst.msk [vmem:[%s159 + $0x190] sm:$0xff] %vm2122, %v2102
      %2129 = vst.msk [vmem:[%s159 + $0x1d8] sm:$0x7f] %vm2125, %v2103
      %2130 = vst.msk [vmem:[%s159 + $0x268] sm:$0xff] %vm2122, %v2104
      %2131 = vst.msk [vmem:[%s159 + $0x2b0] sm:$0xff] %vm2122, %v2105
      %2132 = vst.msk [vmem:[%s159 + $0x2f8] sm:$0x7f] %vm2125, %v2106
      %2133 = vst.msk [vmem:[%s159 + $0x388] sm:$0xff] %vm2122, %v2107
      %2134 = vst.msk [vmem:[%s159 + $0x3d0] sm:$0xff] %vm2122, %v2108
      %2135 = vst.msk [vmem:[%s159 + $0x418] sm:$0x7f] %vm2125, %v2109
      %v2136 = vld [vmem:[%s148 + $0x28] sm:$0xff]
      %v2137 = vld [vmem:[%s148 + $0x68] sm:$0xff]
      %v2138 = vld [vmem:[%s148 + $0xa8] sm:$0x7f]
      %v2139 = vld [vmem:[%s148 + $0xe8] sm:$0xff]
      %v2140 = vld [vmem:[%s148 + $0x128] sm:$0xff]
      %v2141 = vld [vmem:[%s148 + $0x168] sm:$0x7f]
      %v2142 = vld [vmem:[%s148 + $0x1a8] sm:$0xff]
      %v2143 = vld [vmem:[%s148 + $0x1e8] sm:$0xff]
      %v2144 = vld [vmem:[%s148 + $0x228] sm:$0x7f]
      %v2145 = vld [vmem:[%s148 + $0x268] sm:$0xff]
      %v2146 = vld [vmem:[%s148 + $0x2a8] sm:$0xff]
      %v2147 = vld [vmem:[%s148 + $0x2e8] sm:$0x7f]
      %2160 = vrot.lane.b32.xlu0 %v2136, 60
      %v2161 = vpop.permute.xlu0 %2160
      %2162 = vrot.lane.b32.xlu0 %v2137, 60
      %v2163 = vpop.permute.xlu0 %2162
      %2164 = vrot.lane.b32.xlu0 %v2138, 60
      %v2165 = vpop.permute.xlu0 %2164
      %2166 = vrot.lane.b32.xlu0 %v2139, 60
      %v2167 = vpop.permute.xlu0 %2166
      %2168 = vrot.lane.b32.xlu0 %v2140, 60
      %v2169 = vpop.permute.xlu0 %2168
      %2170 = vrot.lane.b32.xlu0 %v2141, 60
      %v2171 = vpop.permute.xlu0 %2170
      %2172 = vrot.lane.b32.xlu0 %v2142, 60
      %v2173 = vpop.permute.xlu0 %2172
      %2174 = vrot.lane.b32.xlu0 %v2143, 60
      %v2175 = vpop.permute.xlu0 %2174
      %2176 = vrot.lane.b32.xlu0 %v2144, 60
      %v2177 = vpop.permute.xlu0 %2176
      %2178 = vrot.lane.b32.xlu0 %v2145, 60
      %v2179 = vpop.permute.xlu0 %2178
      %2180 = vrot.lane.b32.xlu0 %v2146, 60
      %v2181 = vpop.permute.xlu0 %2180
      %2182 = vrot.lane.b32.xlu0 %v2147, 60
      %v2183 = vpop.permute.xlu0 %2182
      %vm2196 = vcmask 925312
      %2197 = vst.msk [vmem:[%s159 + $0x28] sm:$0xff] %vm2196, %v2161
      %2198 = vst.msk [vmem:[%s159 + $0x70] sm:$0xff] %vm2196, %v2163
      %vm2199 = vcmask 924288
      %2200 = vst.msk [vmem:[%s159 + $0xb8] sm:$0x7f] %vm2199, %v2165
      %2201 = vst.msk [vmem:[%s159 + $0x148] sm:$0xff] %vm2196, %v2167
      %2202 = vst.msk [vmem:[%s159 + $0x190] sm:$0xff] %vm2196, %v2169
      %2203 = vst.msk [vmem:[%s159 + $0x1d8] sm:$0x7f] %vm2199, %v2171
      %2204 = vst.msk [vmem:[%s159 + $0x268] sm:$0xff] %vm2196, %v2173
      %2205 = vst.msk [vmem:[%s159 + $0x2b0] sm:$0xff] %vm2196, %v2175
      %2206 = vst.msk [vmem:[%s159 + $0x2f8] sm:$0x7f] %vm2199, %v2177
      %2207 = vst.msk [vmem:[%s159 + $0x388] sm:$0xff] %vm2196, %v2179
      %2208 = vst.msk [vmem:[%s159 + $0x3d0] sm:$0xff] %vm2196, %v2181
      %2209 = vst.msk [vmem:[%s159 + $0x418] sm:$0x7f] %vm2199, %v2183
      %v2210 = vld [vmem:[%s148 + $0x28] sm:$0xff]
      %v2211 = vld [vmem:[%s148 + $0x68] sm:$0xff]
      %v2212 = vld [vmem:[%s148 + $0xa8] sm:$0x7f]
      %v2213 = vld [vmem:[%s148 + $0xe8] sm:$0xff]
      %v2214 = vld [vmem:[%s148 + $0x128] sm:$0xff]
      %v2215 = vld [vmem:[%s148 + $0x168] sm:$0x7f]
      %v2216 = vld [vmem:[%s148 + $0x1a8] sm:$0xff]
      %v2217 = vld [vmem:[%s148 + $0x1e8] sm:$0xff]
      %v2218 = vld [vmem:[%s148 + $0x228] sm:$0x7f]
      %v2219 = vld [vmem:[%s148 + $0x268] sm:$0xff]
      %v2220 = vld [vmem:[%s148 + $0x2a8] sm:$0xff]
      %v2221 = vld [vmem:[%s148 + $0x2e8] sm:$0x7f]
      %2234 = vrot.lane.b32.xlu0 %v2210, 63
      %v2235 = vpop.permute.xlu0 %2234
      %2236 = vrot.lane.b32.xlu0 %v2211, 63
      %v2237 = vpop.permute.xlu0 %2236
      %2238 = vrot.lane.b32.xlu0 %v2212, 63
      %v2239 = vpop.permute.xlu0 %2238
      %2240 = vrot.lane.b32.xlu0 %v2213, 63
      %v2241 = vpop.permute.xlu0 %2240
      %2242 = vrot.lane.b32.xlu0 %v2214, 63
      %v2243 = vpop.permute.xlu0 %2242
      %2244 = vrot.lane.b32.xlu0 %v2215, 63
      %v2245 = vpop.permute.xlu0 %2244
      %2246 = vrot.lane.b32.xlu0 %v2216, 63
      %v2247 = vpop.permute.xlu0 %2246
      %2248 = vrot.lane.b32.xlu0 %v2217, 63
      %v2249 = vpop.permute.xlu0 %2248
      %2250 = vrot.lane.b32.xlu0 %v2218, 63
      %v2251 = vpop.permute.xlu0 %2250
      %2252 = vrot.lane.b32.xlu0 %v2219, 63
      %v2253 = vpop.permute.xlu0 %2252
      %2254 = vrot.lane.b32.xlu0 %v2220, 63
      %v2255 = vpop.permute.xlu0 %2254
      %2256 = vrot.lane.b32.xlu0 %v2221, 63
      %v2257 = vpop.permute.xlu0 %2256
      %vm2270 = vcmask 1048480
      %2271 = vst.msk [vmem:[%s159 + $0x28] sm:$0xff] %vm2270, %v2235
      %2272 = vst.msk [vmem:[%s159 + $0x30] sm:$0xff] %vm960, %v2235
      %2273 = vst.msk [vmem:[%s159 + $0x70] sm:$0xff] %vm2270, %v2237
      %2274 = vst.msk [vmem:[%s159 + $0x78] sm:$0xff] %vm960, %v2237
      %vm2275 = vcmask 1047456
      %2276 = vst.msk [vmem:[%s159 + $0xb8] sm:$0x7f] %vm2275, %v2239
      %vm2277 = vcmask 169984
      %2278 = vst.msk [vmem:[%s159 + $0xc0] sm:$0x7f] %vm2277, %v2239
      %2279 = vst.msk [vmem:[%s159 + $0x148] sm:$0xff] %vm2270, %v2241
      %2280 = vst.msk [vmem:[%s159 + $0x150] sm:$0xff] %vm960, %v2241
      %2281 = vst.msk [vmem:[%s159 + $0x190] sm:$0xff] %vm2270, %v2243
      %2282 = vst.msk [vmem:[%s159 + $0x198] sm:$0xff] %vm960, %v2243
      %2283 = vst.msk [vmem:[%s159 + $0x1d8] sm:$0x7f] %vm2275, %v2245
      %2284 = vst.msk [vmem:[%s159 + $0x1e0] sm:$0x7f] %vm2277, %v2245
      %2285 = vst.msk [vmem:[%s159 + $0x268] sm:$0xff] %vm2270, %v2247
      %2286 = vst.msk [vmem:[%s159 + $0x270] sm:$0xff] %vm960, %v2247
      %2287 = vst.msk [vmem:[%s159 + $0x2b0] sm:$0xff] %vm2270, %v2249
      %2288 = vst.msk [vmem:[%s159 + $0x2b8] sm:$0xff] %vm960, %v2249
      %2289 = vst.msk [vmem:[%s159 + $0x2f8] sm:$0x7f] %vm2275, %v2251
      %2290 = vst.msk [vmem:[%s159 + $0x300] sm:$0x7f] %vm2277, %v2251
      %2291 = vst.msk [vmem:[%s159 + $0x388] sm:$0xff] %vm2270, %v2253
      %2292 = vst.msk [vmem:[%s159 + $0x390] sm:$0xff] %vm960, %v2253
      %2293 = vst.msk [vmem:[%s159 + $0x3d0] sm:$0xff] %vm2270, %v2255
      %2294 = vst.msk [vmem:[%s159 + $0x3d8] sm:$0xff] %vm960, %v2255
      %2295 = vst.msk [vmem:[%s159 + $0x418] sm:$0x7f] %vm2275, %v2257
      %2296 = vst.msk [vmem:[%s159 + $0x420] sm:$0x7f] %vm2277, %v2257
      %v2297 = vld [vmem:[%s148 + $0x28] sm:$0xff]
      %v2298 = vld [vmem:[%s148 + $0x68] sm:$0xff]
      %v2299 = vld [vmem:[%s148 + $0xa8] sm:$0x7f]
      %v2300 = vld [vmem:[%s148 + $0xe8] sm:$0xff]
      %v2301 = vld [vmem:[%s148 + $0x128] sm:$0xff]
      %v2302 = vld [vmem:[%s148 + $0x168] sm:$0x7f]
      %v2303 = vld [vmem:[%s148 + $0x1a8] sm:$0xff]
      %v2304 = vld [vmem:[%s148 + $0x1e8] sm:$0xff]
      %v2305 = vld [vmem:[%s148 + $0x228] sm:$0x7f]
      %v2306 = vld [vmem:[%s148 + $0x268] sm:$0xff]
      %v2307 = vld [vmem:[%s148 + $0x2a8] sm:$0xff]
      %v2308 = vld [vmem:[%s148 + $0x2e8] sm:$0x7f]
      %2321 = vrot.lane.b32.xlu0 %v2297, 66
      %v2322 = vpop.permute.xlu0 %2321
      %2323 = vrot.lane.b32.xlu0 %v2298, 66
      %v2324 = vpop.permute.xlu0 %2323
      %2325 = vrot.lane.b32.xlu0 %v2299, 66
      %v2326 = vpop.permute.xlu0 %2325
      %2327 = vrot.lane.b32.xlu0 %v2300, 66
      %v2328 = vpop.permute.xlu0 %2327
      %2329 = vrot.lane.b32.xlu0 %v2301, 66
      %v2330 = vpop.permute.xlu0 %2329
      %2331 = vrot.lane.b32.xlu0 %v2302, 66
      %v2332 = vpop.permute.xlu0 %2331
      %2333 = vrot.lane.b32.xlu0 %v2303, 66
      %v2334 = vpop.permute.xlu0 %2333
      %2335 = vrot.lane.b32.xlu0 %v2304, 66
      %v2336 = vpop.permute.xlu0 %2335
      %2337 = vrot.lane.b32.xlu0 %v2305, 66
      %v2338 = vpop.permute.xlu0 %2337
      %2339 = vrot.lane.b32.xlu0 %v2306, 66
      %v2340 = vpop.permute.xlu0 %2339
      %2341 = vrot.lane.b32.xlu0 %v2307, 66
      %v2342 = vpop.permute.xlu0 %2341
      %2343 = vrot.lane.b32.xlu0 %v2308, 66
      %v2344 = vpop.permute.xlu0 %2343
      %vm2357 = vcmask 466112
      %2358 = vst.msk [vmem:[%s159 + $0x30] sm:$0xff] %vm2357, %v2322
      %2359 = vst.msk [vmem:[%s159 + $0x78] sm:$0xff] %vm2357, %v2324
      %vm2360 = vcmask 465088
      %2361 = vst.msk [vmem:[%s159 + $0xc0] sm:$0x7f] %vm2360, %v2326
      %2362 = vst.msk [vmem:[%s159 + $0x150] sm:$0xff] %vm2357, %v2328
      %2363 = vst.msk [vmem:[%s159 + $0x198] sm:$0xff] %vm2357, %v2330
      %2364 = vst.msk [vmem:[%s159 + $0x1e0] sm:$0x7f] %vm2360, %v2332
      %2365 = vst.msk [vmem:[%s159 + $0x270] sm:$0xff] %vm2357, %v2334
      %2366 = vst.msk [vmem:[%s159 + $0x2b8] sm:$0xff] %vm2357, %v2336
      %2367 = vst.msk [vmem:[%s159 + $0x300] sm:$0x7f] %vm2360, %v2338
      %2368 = vst.msk [vmem:[%s159 + $0x390] sm:$0xff] %vm2357, %v2340
      %2369 = vst.msk [vmem:[%s159 + $0x3d8] sm:$0xff] %vm2357, %v2342
      %2370 = vst.msk [vmem:[%s159 + $0x420] sm:$0x7f] %vm2360, %v2344
      %v2371 = vld [vmem:[%s148 + $0x28] sm:$0xff]
      %v2372 = vld [vmem:[%s148 + $0x30] sm:$0xff]
      %v2373 = vld [vmem:[%s148 + $0x68] sm:$0xff]
      %v2374 = vld [vmem:[%s148 + $0x70] sm:$0xff]
      %v2375 = vld [vmem:[%s148 + $0xa8] sm:$0x7f]
      %v2376 = vld [vmem:[%s148 + $0xb0] sm:$0x7f]
      %v2377 = vld [vmem:[%s148 + $0xe8] sm:$0xff]
      %v2378 = vld [vmem:[%s148 + $0xf0] sm:$0xff]
      %v2379 = vld [vmem:[%s148 + $0x128] sm:$0xff]
      %v2380 = vld [vmem:[%s148 + $0x130] sm:$0xff]
      %v2381 = vld [vmem:[%s148 + $0x168] sm:$0x7f]
      %v2382 = vld [vmem:[%s148 + $0x170] sm:$0x7f]
      %v2383 = vld [vmem:[%s148 + $0x1a8] sm:$0xff]
      %v2384 = vld [vmem:[%s148 + $0x1b0] sm:$0xff]
      %v2385 = vld [vmem:[%s148 + $0x1e8] sm:$0xff]
      %v2386 = vld [vmem:[%s148 + $0x1f0] sm:$0xff]
      %v2387 = vld [vmem:[%s148 + $0x228] sm:$0x7f]
      %v2388 = vld [vmem:[%s148 + $0x230] sm:$0x7f]
      %v2389 = vld [vmem:[%s148 + $0x268] sm:$0xff]
      %v2390 = vld [vmem:[%s148 + $0x270] sm:$0xff]
      %v2391 = vld [vmem:[%s148 + $0x2a8] sm:$0xff]
      %v2392 = vld [vmem:[%s148 + $0x2b0] sm:$0xff]
      %v2393 = vld [vmem:[%s148 + $0x2e8] sm:$0x7f]
      %v2394 = vld [vmem:[%s148 + $0x2f0] sm:$0x7f]
      %2419 = vrot.lane.b32.xlu0 %v2371, 69
      %v2420 = vpop.permute.xlu0 %2419
      %2421 = vrot.lane.b32.xlu0 %v2372, 69
      %v2422 = vpop.permute.xlu0 %2421
      %2423 = vrot.lane.b32.xlu0 %v2373, 69
      %v2424 = vpop.permute.xlu0 %2423
      %2425 = vrot.lane.b32.xlu0 %v2374, 69
      %v2426 = vpop.permute.xlu0 %2425
      %2427 = vrot.lane.b32.xlu0 %v2375, 69
      %v2428 = vpop.permute.xlu0 %2427
      %2429 = vrot.lane.b32.xlu0 %v2376, 69
      %v2430 = vpop.permute.xlu0 %2429
      %2431 = vrot.lane.b32.xlu0 %v2377, 69
      %v2432 = vpop.permute.xlu0 %2431
      %2433 = vrot.lane.b32.xlu0 %v2378, 69
      %v2434 = vpop.permute.xlu0 %2433
      %2435 = vrot.lane.b32.xlu0 %v2379, 69
      %v2436 = vpop.permute.xlu0 %2435
      %2437 = vrot.lane.b32.xlu0 %v2380, 69
      %v2438 = vpop.permute.xlu0 %2437
      %2439 = vrot.lane.b32.xlu0 %v2381, 69
      %v2440 = vpop.permute.xlu0 %2439
      %2441 = vrot.lane.b32.xlu0 %v2382, 69
      %v2442 = vpop.permute.xlu0 %2441
      %2443 = vrot.lane.b32.xlu0 %v2383, 69
      %v2444 = vpop.permute.xlu0 %2443
      %2445 = vrot.lane.b32.xlu0 %v2384, 69
      %v2446 = vpop.permute.xlu0 %2445
      %2447 = vrot.lane.b32.xlu0 %v2385, 69
      %v2448 = vpop.permute.xlu0 %2447
      %2449 = vrot.lane.b32.xlu0 %v2386, 69
      %v2450 = vpop.permute.xlu0 %2449
      %2451 = vrot.lane.b32.xlu0 %v2387, 69
      %v2452 = vpop.permute.xlu0 %2451
      %2453 = vrot.lane.b32.xlu0 %v2388, 69
      %v2454 = vpop.permute.xlu0 %2453
      %2455 = vrot.lane.b32.xlu0 %v2389, 69
      %v2456 = vpop.permute.xlu0 %2455
      %2457 = vrot.lane.b32.xlu0 %v2390, 69
      %v2458 = vpop.permute.xlu0 %2457
      %2459 = vrot.lane.b32.xlu0 %v2391, 69
      %v2460 = vpop.permute.xlu0 %2459
      %2461 = vrot.lane.b32.xlu0 %v2392, 69
      %v2462 = vpop.permute.xlu0 %2461
      %2463 = vrot.lane.b32.xlu0 %v2393, 69
      %v2464 = vpop.permute.xlu0 %2463
      %2465 = vrot.lane.b32.xlu0 %v2394, 69
      %v2466 = vpop.permute.xlu0 %2465
      %vm2467 = vcmask 564224
      %v2468 = vsel %vm2467, %v2420, %v2422
      %v2469 = vsel %vm2467, %v2424, %v2426
      %v2470 = vsel %vm2467, %v2428, %v2430
      %v2471 = vsel %vm2467, %v2432, %v2434
      %v2472 = vsel %vm2467, %v2436, %v2438
      %v2473 = vsel %vm2467, %v2440, %v2442
      %v2474 = vsel %vm2467, %v2444, %v2446
      %v2475 = vsel %vm2467, %v2448, %v2450
      %v2476 = vsel %vm2467, %v2452, %v2454
      %v2477 = vsel %vm2467, %v2456, %v2458
      %v2478 = vsel %vm2467, %v2460, %v2462
      %v2479 = vsel %vm2467, %v2464, %v2466
      %vm2492 = vcmask 761312
      %2493 = vst.msk [vmem:[%s159 + $0x30] sm:$0xff] %vm2492, %v2468
      %2494 = vst.msk [vmem:[%s159 + $0x78] sm:$0xff] %vm2492, %v2469
      %vm2495 = vcmask 760288
      %2496 = vst.msk [vmem:[%s159 + $0xc0] sm:$0x7f] %vm2495, %v2470
      %2497 = vst.msk [vmem:[%s159 + $0x150] sm:$0xff] %vm2492, %v2471
      %2498 = vst.msk [vmem:[%s159 + $0x198] sm:$0xff] %vm2492, %v2472
      %2499 = vst.msk [vmem:[%s159 + $0x1e0] sm:$0x7f] %vm2495, %v2473
      %2500 = vst.msk [vmem:[%s159 + $0x270] sm:$0xff] %vm2492, %v2474
      %2501 = vst.msk [vmem:[%s159 + $0x2b8] sm:$0xff] %vm2492, %v2475
      %2502 = vst.msk [vmem:[%s159 + $0x300] sm:$0x7f] %vm2495, %v2476
      %2503 = vst.msk [vmem:[%s159 + $0x390] sm:$0xff] %vm2492, %v2477
      %2504 = vst.msk [vmem:[%s159 + $0x3d8] sm:$0xff] %vm2492, %v2478
      %2505 = vst.msk [vmem:[%s159 + $0x420] sm:$0x7f] %vm2495, %v2479
      %v2506 = vld [vmem:[%s148 + $0x30] sm:$0xff]
      %v2507 = vld [vmem:[%s148 + $0x70] sm:$0xff]
      %v2508 = vld [vmem:[%s148 + $0xb0] sm:$0x7f]
      %v2509 = vld [vmem:[%s148 + $0xf0] sm:$0xff]
      %v2510 = vld [vmem:[%s148 + $0x130] sm:$0xff]
      %v2511 = vld [vmem:[%s148 + $0x170] sm:$0x7f]
      %v2512 = vld [vmem:[%s148 + $0x1b0] sm:$0xff]
      %v2513 = vld [vmem:[%s148 + $0x1f0] sm:$0xff]
      %v2514 = vld [vmem:[%s148 + $0x230] sm:$0x7f]
      %v2515 = vld [vmem:[%s148 + $0x270] sm:$0xff]
      %v2516 = vld [vmem:[%s148 + $0x2b0] sm:$0xff]
      %v2517 = vld [vmem:[%s148 + $0x2f0] sm:$0x7f]
      %2530 = vrot.lane.b32.xlu0 %v2506, 72
      %v2531 = vpop.permute.xlu0 %2530
      %2532 = vrot.lane.b32.xlu0 %v2507, 72
      %v2533 = vpop.permute.xlu0 %2532
      %2534 = vrot.lane.b32.xlu0 %v2508, 72
      %v2535 = vpop.permute.xlu0 %2534
      %2536 = vrot.lane.b32.xlu0 %v2509, 72
      %v2537 = vpop.permute.xlu0 %2536
      %2538 = vrot.lane.b32.xlu0 %v2510, 72
      %v2539 = vpop.permute.xlu0 %2538
      %2540 = vrot.lane.b32.xlu0 %v2511, 72
      %v2541 = vpop.permute.xlu0 %2540
      %2542 = vrot.lane.b32.xlu0 %v2512, 72
      %v2543 = vpop.permute.xlu0 %2542
      %2544 = vrot.lane.b32.xlu0 %v2513, 72
      %v2545 = vpop.permute.xlu0 %2544
      %2546 = vrot.lane.b32.xlu0 %v2514, 72
      %v2547 = vpop.permute.xlu0 %2546
      %2548 = vrot.lane.b32.xlu0 %v2515, 72
      %v2549 = vpop.permute.xlu0 %2548
      %2550 = vrot.lane.b32.xlu0 %v2516, 72
      %v2551 = vpop.permute.xlu0 %2550
      %2552 = vrot.lane.b32.xlu0 %v2517, 72
      %v2553 = vpop.permute.xlu0 %2552
      %vm2566 = vcmask 1048320
      %2567 = vst.msk [vmem:[%s159 + $0x30] sm:$0xff] %vm2566, %v2531
      %vm2568 = vcmask 7168
      %2569 = vst.msk [vmem:[%s159 + $0x38] sm:$0xff] %vm2568, %v2531
      %2570 = vst.msk [vmem:[%s159 + $0x78] sm:$0xff] %vm2566, %v2533
      %2571 = vst.msk [vmem:[%s159 + $0x80] sm:$0xff] %vm2568, %v2533
      %vm2572 = vcmask 1047296
      %2573 = vst.msk [vmem:[%s159 + $0xc0] sm:$0x7f] %vm2572, %v2535
      %vm2574 = vcmask 6144
      %2575 = vst.msk [vmem:[%s159 + $0xc8] sm:$0x7f] %vm2574, %v2535
      %2576 = vst.msk [vmem:[%s159 + $0x150] sm:$0xff] %vm2566, %v2537
      %2577 = vst.msk [vmem:[%s159 + $0x158] sm:$0xff] %vm2568, %v2537
      %2578 = vst.msk [vmem:[%s159 + $0x198] sm:$0xff] %vm2566, %v2539
      %2579 = vst.msk [vmem:[%s159 + $0x1a0] sm:$0xff] %vm2568, %v2539
      %2580 = vst.msk [vmem:[%s159 + $0x1e0] sm:$0x7f] %vm2572, %v2541
      %2581 = vst.msk [vmem:[%s159 + $0x1e8] sm:$0x7f] %vm2574, %v2541
      %2582 = vst.msk [vmem:[%s159 + $0x270] sm:$0xff] %vm2566, %v2543
      %2583 = vst.msk [vmem:[%s159 + $0x278] sm:$0xff] %vm2568, %v2543
      %2584 = vst.msk [vmem:[%s159 + $0x2b8] sm:$0xff] %vm2566, %v2545
      %2585 = vst.msk [vmem:[%s159 + $0x2c0] sm:$0xff] %vm2568, %v2545
      %2586 = vst.msk [vmem:[%s159 + $0x300] sm:$0x7f] %vm2572, %v2547
      %2587 = vst.msk [vmem:[%s159 + $0x308] sm:$0x7f] %vm2574, %v2547
      %2588 = vst.msk [vmem:[%s159 + $0x390] sm:$0xff] %vm2566, %v2549
      %2589 = vst.msk [vmem:[%s159 + $0x398] sm:$0xff] %vm2568, %v2549
      %2590 = vst.msk [vmem:[%s159 + $0x3d8] sm:$0xff] %vm2566, %v2551
      %2591 = vst.msk [vmem:[%s159 + $0x3e0] sm:$0xff] %vm2568, %v2551
      %2592 = vst.msk [vmem:[%s159 + $0x420] sm:$0x7f] %vm2572, %v2553
      %2593 = vst.msk [vmem:[%s159 + $0x428] sm:$0x7f] %vm2574, %v2553
      %v2594 = vld [vmem:[%s148 + $0x30] sm:$0xff]
      %v2595 = vld [vmem:[%s148 + $0x70] sm:$0xff]
      %v2596 = vld [vmem:[%s148 + $0xb0] sm:$0x7f]
      %v2597 = vld [vmem:[%s148 + $0xf0] sm:$0xff]
      %v2598 = vld [vmem:[%s148 + $0x130] sm:$0xff]
      %v2599 = vld [vmem:[%s148 + $0x170] sm:$0x7f]
      %v2600 = vld [vmem:[%s148 + $0x1b0] sm:$0xff]
      %v2601 = vld [vmem:[%s148 + $0x1f0] sm:$0xff]
      %v2602 = vld [vmem:[%s148 + $0x230] sm:$0x7f]
      %v2603 = vld [vmem:[%s148 + $0x270] sm:$0xff]
      %v2604 = vld [vmem:[%s148 + $0x2b0] sm:$0xff]
      %v2605 = vld [vmem:[%s148 + $0x2f0] sm:$0x7f]
      %2618 = vrot.lane.b32.xlu0 %v2594, 75
      %v2619 = vpop.permute.xlu0 %2618
      %2620 = vrot.lane.b32.xlu0 %v2595, 75
      %v2621 = vpop.permute.xlu0 %2620
      %2622 = vrot.lane.b32.xlu0 %v2596, 75
      %v2623 = vpop.permute.xlu0 %2622
      %2624 = vrot.lane.b32.xlu0 %v2597, 75
      %v2625 = vpop.permute.xlu0 %2624
      %2626 = vrot.lane.b32.xlu0 %v2598, 75
      %v2627 = vpop.permute.xlu0 %2626
      %2628 = vrot.lane.b32.xlu0 %v2599, 75
      %v2629 = vpop.permute.xlu0 %2628
      %2630 = vrot.lane.b32.xlu0 %v2600, 75
      %v2631 = vpop.permute.xlu0 %2630
      %2632 = vrot.lane.b32.xlu0 %v2601, 75
      %v2633 = vpop.permute.xlu0 %2632
      %2634 = vrot.lane.b32.xlu0 %v2602, 75
      %v2635 = vpop.permute.xlu0 %2634
      %2636 = vrot.lane.b32.xlu0 %v2603, 75
      %v2637 = vpop.permute.xlu0 %2636
      %2638 = vrot.lane.b32.xlu0 %v2604, 75
      %v2639 = vpop.permute.xlu0 %2638
      %2640 = vrot.lane.b32.xlu0 %v2605, 75
      %v2641 = vpop.permute.xlu0 %2640
      %vm2654 = vcmask 302112
      %2655 = vst.msk [vmem:[%s159 + $0x38] sm:$0xff] %vm2654, %v2619
      %2656 = vst.msk [vmem:[%s159 + $0x80] sm:$0xff] %vm2654, %v2621
      %vm2657 = vcmask 301088
      %2658 = vst.msk [vmem:[%s159 + $0xc8] sm:$0x7f] %vm2657, %v2623
      %2659 = vst.msk [vmem:[%s159 + $0x158] sm:$0xff] %vm2654, %v2625
      %2660 = vst.msk [vmem:[%s159 + $0x1a0] sm:$0xff] %vm2654, %v2627
      %2661 = vst.msk [vmem:[%s159 + $0x1e8] sm:$0x7f] %vm2657, %v2629
      %2662 = vst.msk [vmem:[%s159 + $0x278] sm:$0xff] %vm2654, %v2631
      %2663 = vst.msk [vmem:[%s159 + $0x2c0] sm:$0xff] %vm2654, %v2633
      %2664 = vst.msk [vmem:[%s159 + $0x308] sm:$0x7f] %vm2657, %v2635
      %2665 = vst.msk [vmem:[%s159 + $0x398] sm:$0xff] %vm2654, %v2637
      %2666 = vst.msk [vmem:[%s159 + $0x3e0] sm:$0xff] %vm2654, %v2639
      %2667 = vst.msk [vmem:[%s159 + $0x428] sm:$0x7f] %vm2657, %v2641
      %v2668 = vld [vmem:[%s148 + $0x30] sm:$0xff]
      %v2669 = vld [vmem:[%s148 + $0x70] sm:$0xff]
      %v2670 = vld [vmem:[%s148 + $0xb0] sm:$0x7f]
      %v2671 = vld [vmem:[%s148 + $0xf0] sm:$0xff]
      %v2672 = vld [vmem:[%s148 + $0x130] sm:$0xff]
      %v2673 = vld [vmem:[%s148 + $0x170] sm:$0x7f]
      %v2674 = vld [vmem:[%s148 + $0x1b0] sm:$0xff]
      %v2675 = vld [vmem:[%s148 + $0x1f0] sm:$0xff]
      %v2676 = vld [vmem:[%s148 + $0x230] sm:$0x7f]
      %v2677 = vld [vmem:[%s148 + $0x270] sm:$0xff]
      %v2678 = vld [vmem:[%s148 + $0x2b0] sm:$0xff]
      %v2679 = vld [vmem:[%s148 + $0x2f0] sm:$0x7f]
      %2692 = vrot.lane.b32.xlu0 %v2668, 78
      %v2693 = vpop.permute.xlu0 %2692
      %2694 = vrot.lane.b32.xlu0 %v2669, 78
      %v2695 = vpop.permute.xlu0 %2694
      %2696 = vrot.lane.b32.xlu0 %v2670, 78
      %v2697 = vpop.permute.xlu0 %2696
      %2698 = vrot.lane.b32.xlu0 %v2671, 78
      %v2699 = vpop.permute.xlu0 %2698
      %2700 = vrot.lane.b32.xlu0 %v2672, 78
      %v2701 = vpop.permute.xlu0 %2700
      %2702 = vrot.lane.b32.xlu0 %v2673, 78
      %v2703 = vpop.permute.xlu0 %2702
      %2704 = vrot.lane.b32.xlu0 %v2674, 78
      %v2705 = vpop.permute.xlu0 %2704
      %2706 = vrot.lane.b32.xlu0 %v2675, 78
      %v2707 = vpop.permute.xlu0 %2706
      %2708 = vrot.lane.b32.xlu0 %v2676, 78
      %v2709 = vpop.permute.xlu0 %2708
      %2710 = vrot.lane.b32.xlu0 %v2677, 78
      %v2711 = vpop.permute.xlu0 %2710
      %2712 = vrot.lane.b32.xlu0 %v2678, 78
      %v2713 = vpop.permute.xlu0 %2712
      %2714 = vrot.lane.b32.xlu0 %v2679, 78
      %v2715 = vpop.permute.xlu0 %2714
      %vm2728 = vcmask 597312
      %2729 = vst.msk [vmem:[%s159 + $0x38] sm:$0xff] %vm2728, %v2693
      %2730 = vst.msk [vmem:[%s159 + $0x80] sm:$0xff] %vm2728, %v2695
      %vm2731 = vcmask 596288
      %2732 = vst.msk [vmem:[%s159 + $0xc8] sm:$0x7f] %vm2731, %v2697
      %2733 = vst.msk [vmem:[%s159 + $0x158] sm:$0xff] %vm2728, %v2699
      %2734 = vst.msk [vmem:[%s159 + $0x1a0] sm:$0xff] %vm2728, %v2701
      %2735 = vst.msk [vmem:[%s159 + $0x1e8] sm:$0x7f] %vm2731, %v2703
      %2736 = vst.msk [vmem:[%s159 + $0x278] sm:$0xff] %vm2728, %v2705
      %2737 = vst.msk [vmem:[%s159 + $0x2c0] sm:$0xff] %vm2728, %v2707
      %2738 = vst.msk [vmem:[%s159 + $0x308] sm:$0x7f] %vm2731, %v2709
      %2739 = vst.msk [vmem:[%s159 + $0x398] sm:$0xff] %vm2728, %v2711
      %2740 = vst.msk [vmem:[%s159 + $0x3e0] sm:$0xff] %vm2728, %v2713
      %2741 = vst.msk [vmem:[%s159 + $0x428] sm:$0x7f] %vm2731, %v2715
      %v2742 = vld [vmem:[%s148 + $0x30] sm:$0xff]
      %v2743 = vld [vmem:[%s148 + $0x38] sm:$0xff]
      %v2744 = vld [vmem:[%s148 + $0x70] sm:$0xff]
      %v2745 = vld [vmem:[%s148 + $0x78] sm:$0xff]
      %v2746 = vld [vmem:[%s148 + $0xb0] sm:$0x7f]
      %v2747 = vld [vmem:[%s148 + $0xb8] sm:$0x7f]
      %v2748 = vld [vmem:[%s148 + $0xf0] sm:$0xff]
      %v2749 = vld [vmem:[%s148 + $0xf8] sm:$0xff]
      %v2750 = vld [vmem:[%s148 + $0x130] sm:$0xff]
      %v2751 = vld [vmem:[%s148 + $0x138] sm:$0xff]
      %v2752 = vld [vmem:[%s148 + $0x170] sm:$0x7f]
      %v2753 = vld [vmem:[%s148 + $0x178] sm:$0x7f]
      %v2754 = vld [vmem:[%s148 + $0x1b0] sm:$0xff]
      %v2755 = vld [vmem:[%s148 + $0x1b8] sm:$0xff]
      %v2756 = vld [vmem:[%s148 + $0x1f0] sm:$0xff]
      %v2757 = vld [vmem:[%s148 + $0x1f8] sm:$0xff]
      %v2758 = vld [vmem:[%s148 + $0x230] sm:$0x7f]
      %v2759 = vld [vmem:[%s148 + $0x238] sm:$0x7f]
      %v2760 = vld [vmem:[%s148 + $0x270] sm:$0xff]
      %v2761 = vld [vmem:[%s148 + $0x278] sm:$0xff]
      %v2762 = vld [vmem:[%s148 + $0x2b0] sm:$0xff]
      %v2763 = vld [vmem:[%s148 + $0x2b8] sm:$0xff]
      %v2764 = vld [vmem:[%s148 + $0x2f0] sm:$0x7f]
      %v2765 = vld [vmem:[%s148 + $0x2f8] sm:$0x7f]
      %2790 = vrot.lane.b32.xlu0 %v2742, 81
      %v2791 = vpop.permute.xlu0 %2790
      %2792 = vrot.lane.b32.xlu0 %v2743, 81
      %v2793 = vpop.permute.xlu0 %2792
      %2794 = vrot.lane.b32.xlu0 %v2744, 81
      %v2795 = vpop.permute.xlu0 %2794
      %2796 = vrot.lane.b32.xlu0 %v2745, 81
      %v2797 = vpop.permute.xlu0 %2796
      %2798 = vrot.lane.b32.xlu0 %v2746, 81
      %v2799 = vpop.permute.xlu0 %2798
      %2800 = vrot.lane.b32.xlu0 %v2747, 81
      %v2801 = vpop.permute.xlu0 %2800
      %2802 = vrot.lane.b32.xlu0 %v2748, 81
      %v2803 = vpop.permute.xlu0 %2802
      %2804 = vrot.lane.b32.xlu0 %v2749, 81
      %v2805 = vpop.permute.xlu0 %2804
      %2806 = vrot.lane.b32.xlu0 %v2750, 81
      %v2807 = vpop.permute.xlu0 %2806
      %2808 = vrot.lane.b32.xlu0 %v2751, 81
      %v2809 = vpop.permute.xlu0 %2808
      %2810 = vrot.lane.b32.xlu0 %v2752, 81
      %v2811 = vpop.permute.xlu0 %2810
      %2812 = vrot.lane.b32.xlu0 %v2753, 81
      %v2813 = vpop.permute.xlu0 %2812
      %2814 = vrot.lane.b32.xlu0 %v2754, 81
      %v2815 = vpop.permute.xlu0 %2814
      %2816 = vrot.lane.b32.xlu0 %v2755, 81
      %v2817 = vpop.permute.xlu0 %2816
      %2818 = vrot.lane.b32.xlu0 %v2756, 81
      %v2819 = vpop.permute.xlu0 %2818
      %2820 = vrot.lane.b32.xlu0 %v2757, 81
      %v2821 = vpop.permute.xlu0 %2820
      %2822 = vrot.lane.b32.xlu0 %v2758, 81
      %v2823 = vpop.permute.xlu0 %2822
      %2824 = vrot.lane.b32.xlu0 %v2759, 81
      %v2825 = vpop.permute.xlu0 %2824
      %2826 = vrot.lane.b32.xlu0 %v2760, 81
      %v2827 = vpop.permute.xlu0 %2826
      %2828 = vrot.lane.b32.xlu0 %v2761, 81
      %v2829 = vpop.permute.xlu0 %2828
      %2830 = vrot.lane.b32.xlu0 %v2762, 81
      %v2831 = vpop.permute.xlu0 %2830
      %2832 = vrot.lane.b32.xlu0 %v2763, 81
      %v2833 = vpop.permute.xlu0 %2832
      %2834 = vrot.lane.b32.xlu0 %v2764, 81
      %v2835 = vpop.permute.xlu0 %2834
      %2836 = vrot.lane.b32.xlu0 %v2765, 81
      %v2837 = vpop.permute.xlu0 %2836
      %vm2838 = vcmask 662528
      %v2839 = vsel %vm2838, %v2791, %v2793
      %v2840 = vsel %vm2838, %v2795, %v2797
      %v2841 = vsel %vm2838, %v2799, %v2801
      %v2842 = vsel %vm2838, %v2803, %v2805
      %v2843 = vsel %vm2838, %v2807, %v2809
      %v2844 = vsel %vm2838, %v2811, %v2813
      %v2845 = vsel %vm2838, %v2815, %v2817
      %v2846 = vsel %vm2838, %v2819, %v2821
      %v2847 = vsel %vm2838, %v2823, %v2825
      %v2848 = vsel %vm2838, %v2827, %v2829
      %v2849 = vsel %vm2838, %v2831, %v2833
      %v2850 = vsel %vm2838, %v2835, %v2837
      %vm2863 = vcmask 892512
      %2864 = vst.msk [vmem:[%s159 + $0x38] sm:$0xff] %vm2863, %v2839
      %2865 = vst.msk [vmem:[%s159 + $0x80] sm:$0xff] %vm2863, %v2840
      %vm2866 = vcmask 891488
      %2867 = vst.msk [vmem:[%s159 + $0xc8] sm:$0x7f] %vm2866, %v2841
      %2868 = vst.msk [vmem:[%s159 + $0x158] sm:$0xff] %vm2863, %v2842
      %2869 = vst.msk [vmem:[%s159 + $0x1a0] sm:$0xff] %vm2863, %v2843
      %2870 = vst.msk [vmem:[%s159 + $0x1e8] sm:$0x7f] %vm2866, %v2844
      %2871 = vst.msk [vmem:[%s159 + $0x278] sm:$0xff] %vm2863, %v2845
      %2872 = vst.msk [vmem:[%s159 + $0x2c0] sm:$0xff] %vm2863, %v2846
      %2873 = vst.msk [vmem:[%s159 + $0x308] sm:$0x7f] %vm2866, %v2847
      %2874 = vst.msk [vmem:[%s159 + $0x398] sm:$0xff] %vm2863, %v2848
      %2875 = vst.msk [vmem:[%s159 + $0x3e0] sm:$0xff] %vm2863, %v2849
      %2876 = vst.msk [vmem:[%s159 + $0x428] sm:$0x7f] %vm2866, %v2850
      %v2877 = vld [vmem:[%s148 + $0x38] sm:$0xff]
      %v2878 = vld [vmem:[%s148 + $0x78] sm:$0xff]
      %v2879 = vld [vmem:[%s148 + $0xb8] sm:$0x7f]
      %v2880 = vld [vmem:[%s148 + $0xf8] sm:$0xff]
      %v2881 = vld [vmem:[%s148 + $0x138] sm:$0xff]
      %v2882 = vld [vmem:[%s148 + $0x178] sm:$0x7f]
      %v2883 = vld [vmem:[%s148 + $0x1b8] sm:$0xff]
      %v2884 = vld [vmem:[%s148 + $0x1f8] sm:$0xff]
      %v2885 = vld [vmem:[%s148 + $0x238] sm:$0x7f]
      %v2886 = vld [vmem:[%s148 + $0x278] sm:$0xff]
      %v2887 = vld [vmem:[%s148 + $0x2b8] sm:$0xff]
      %v2888 = vld [vmem:[%s148 + $0x2f8] sm:$0x7f]
      %2901 = vrot.lane.b32.xlu0 %v2877, 84
      %v2902 = vpop.permute.xlu0 %2901
      %2903 = vrot.lane.b32.xlu0 %v2878, 84
      %v2904 = vpop.permute.xlu0 %2903
      %2905 = vrot.lane.b32.xlu0 %v2879, 84
      %v2906 = vpop.permute.xlu0 %2905
      %2907 = vrot.lane.b32.xlu0 %v2880, 84
      %v2908 = vpop.permute.xlu0 %2907
      %2909 = vrot.lane.b32.xlu0 %v2881, 84
      %v2910 = vpop.permute.xlu0 %2909
      %2911 = vrot.lane.b32.xlu0 %v2882, 84
      %v2912 = vpop.permute.xlu0 %2911
      %2913 = vrot.lane.b32.xlu0 %v2883, 84
      %v2914 = vpop.permute.xlu0 %2913
      %2915 = vrot.lane.b32.xlu0 %v2884, 84
      %v2916 = vpop.permute.xlu0 %2915
      %2917 = vrot.lane.b32.xlu0 %v2885, 84
      %v2918 = vpop.permute.xlu0 %2917
      %2919 = vrot.lane.b32.xlu0 %v2886, 84
      %v2920 = vpop.permute.xlu0 %2919
      %2921 = vrot.lane.b32.xlu0 %v2887, 84
      %v2922 = vpop.permute.xlu0 %2921
      %2923 = vrot.lane.b32.xlu0 %v2888, 84
      %v2924 = vpop.permute.xlu0 %2923
      %vm2937 = vcmask 1048448
      %2938 = vst.msk [vmem:[%s159 + $0x38] sm:$0xff] %vm2937, %v2902
      %vm2939 = vcmask 138240
      %2940 = vst.msk [vmem:[%s159 + $0x40] sm:$0xff] %vm2939, %v2902
      %2941 = vst.msk [vmem:[%s159 + $0x80] sm:$0xff] %vm2937, %v2904
      %2942 = vst.msk [vmem:[%s159 + $0x88] sm:$0xff] %vm2939, %v2904
      %vm2943 = vcmask 1047424
      %2944 = vst.msk [vmem:[%s159 + $0xc8] sm:$0x7f] %vm2943, %v2906
      %vm2945 = vcmask 137216
      %2946 = vst.msk [vmem:[%s159 + $0xd0] sm:$0x7f] %vm2945, %v2906
      %2947 = vst.msk [vmem:[%s159 + $0x158] sm:$0xff] %vm2937, %v2908
      %2948 = vst.msk [vmem:[%s159 + $0x160] sm:$0xff] %vm2939, %v2908
      %2949 = vst.msk [vmem:[%s159 + $0x1a0] sm:$0xff] %vm2937, %v2910
      %2950 = vst.msk [vmem:[%s159 + $0x1a8] sm:$0xff] %vm2939, %v2910
      %2951 = vst.msk [vmem:[%s159 + $0x1e8] sm:$0x7f] %vm2943, %v2912
      %2952 = vst.msk [vmem:[%s159 + $0x1f0] sm:$0x7f] %vm2945, %v2912
      %2953 = vst.msk [vmem:[%s159 + $0x278] sm:$0xff] %vm2937, %v2914
      %2954 = vst.msk [vmem:[%s159 + $0x280] sm:$0xff] %vm2939, %v2914
      %2955 = vst.msk [vmem:[%s159 + $0x2c0] sm:$0xff] %vm2937, %v2916
      %2956 = vst.msk [vmem:[%s159 + $0x2c8] sm:$0xff] %vm2939, %v2916
      %2957 = vst.msk [vmem:[%s159 + $0x308] sm:$0x7f] %vm2943, %v2918
      %2958 = vst.msk [vmem:[%s159 + $0x310] sm:$0x7f] %vm2945, %v2918
      %2959 = vst.msk [vmem:[%s159 + $0x398] sm:$0xff] %vm2937, %v2920
      %2960 = vst.msk [vmem:[%s159 + $0x3a0] sm:$0xff] %vm2939, %v2920
      %2961 = vst.msk [vmem:[%s159 + $0x3e0] sm:$0xff] %vm2937, %v2922
      %2962 = vst.msk [vmem:[%s159 + $0x3e8] sm:$0xff] %vm2939, %v2922
      %2963 = vst.msk [vmem:[%s159 + $0x428] sm:$0x7f] %vm2943, %v2924
      %2964 = vst.msk [vmem:[%s159 + $0x430] sm:$0x7f] %vm2945, %v2924
      %s2965 = smul.u32 4, %s17
      %p2966 = scmp.lt.s32.totalorder %s16, 1
      %s2967 = scalar_select %p2966, %s16, 1
      %p2968 = scmp.lt.s32.totalorder %s2965, 3
      %s2969 = scalar_select %p2968, %s2965, 3
      %s2970 = smul.addr %s2969, 36
      %s2971 = smul.addr %s2967, 144
      %s2972 = sadd.s32 %s2970, %s2971
      %s2973 = smul.addr %s2972, 8
      %s2974 = scalar_lea.vmem %s1, %s2973
      // Predicated region
      $region25: #{tpu_custom_call.1} parent=23 // pred_check
        %p2975 = pneg %p72
      $region26: #{tpu_custom_call.1} parent=23 // pred_check_branch
        %2977 = sbr.rel (%p2975) target = $region28
      $region27: #{tpu_custom_call.1} parent=23 // pred_region
        %s2978 = smul.u32 4, %s17
      $region28: #{tpu_custom_call.1} parent=23 // pred_fallthru
        _
    $region24: #{tpu_custom_call.1} parent=5 // pred_fallthru
      _
    %p2979 = scmp.le.s32.totalorder 2, %s7
    // Predicated region
    $region29: #{tpu_custom_call.1} parent=5 // pred_check
      %p2980 = pneg %p2979
    $region30: #{tpu_custom_call.1} parent=5 // pred_check_branch
      %2982 = sbr.rel (%p2980) target = $region32
    $region31: #{tpu_custom_call.1} parent=5 // pred_region
      %s2983 = ssub.s32 %s7, 2
      // Predicated region
      $region33: #{tpu_custom_call.1} parent=31 // pred_check
        %p2984 = pneg %p78
      $region34: #{tpu_custom_call.1} parent=31 // pred_check_branch
        %2986 = sbr.rel (%p2984) target = $region36
      $region35: #{tpu_custom_call.1} parent=31 // pred_region
        %s2987 = smul.u32 4, %s19
        %p2988 = scmp.lt.s32.totalorder %s18, 1
        %s2989 = scalar_select %p2988, %s18, 1
        %p2990 = scmp.lt.s32.totalorder %s2987, 3
        %s2991 = scalar_select %p2990, %s2987, 3
        %s2992 = smul.addr %s2991, 36
        %s2993 = smul.addr %s2989, 144
        %s2994 = sadd.s32 %s2992, %s2993
        %s2995 = smul.addr %s2994, 8
        %s2996 = scalar_lea.vmem %s1, %s2995
      $region36: #{tpu_custom_call.1} parent=31 // pred_fallthru
        _
    $region32: #{tpu_custom_call.1} parent=5 // pred_fallthru
      _
  $region6: #{tpu_custom_call.1} parent=0 // loop_footer
    %s11 = sadd.s32 1, %s7
  $region7: #{tpu_custom_call.1} parent=0 // loop_footer_branch
    %6 = sbr.rel target = $region3
  $region8: #{tpu_custom_call.1} parent=0 // loop_exit
    _

</llo_original>
